<compile_context>
chip_gen: v6e
topology: v6e:2x2x1
jax: 0.10.0
libtpu: 0.0.40
codegen_flags: <defaults>
</compile_context>

<pallas_src>
import functools
import math

import jax
import jax.numpy as jnp
from jax.experimental import pallas as pl
from jax.experimental.pallas import tpu as pltpu


def _round_up(x, m):
    return ((x + m - 1) // m) * m


# ----------------------------------------------------------------------------
# Fused Pallas kernel: whole SIREN MLP on one (features, tile_n) column tile.
# refs = (x_ref, w0, b0, w1, b1, ..., o_ref)
#   x_ref: (in_f, tile_n)   w_l: (out_f_l, in_f_l)   b_l: (out_f_l, 1)
#   o_ref: (out_f_last, tile_n)
# omega is already folded into w_l / b_l for sine layers.
# ----------------------------------------------------------------------------
def _siren_fused_kernel(*refs, num_layers, sine_flags):
    x_ref, o_ref = refs[0], refs[-1]
    param_refs = refs[1:-1]

    x = x_ref[...]  # (in_f, tile_n) f32, lane-dense
    for l in range(num_layers):  # static unroll over layers
        w = param_refs[2 * l][...]        # (out_f, in_f)
        b = param_refs[2 * l + 1][...]    # (out_f, 1)
        out_f, in_f = w.shape
        if in_f <= 4:
            # Tiny contracting dim (first layer, in_f=2): rank-1 accumulation on
            # the VPU avoids pushing a 98%-zero-padded matmul through the MXU.
            z = jnp.broadcast_to(b, (out_f, x.shape[1]))
            for k in range(in_f):
                z = z + w[:, k : k + 1] * x[k : k + 1, :]
        else:
            z = jnp.dot(w, x, preferred_element_type=jnp.float32) + b
        x = jnp.sin(z) if sine_flags[l] else z

    o_ref[...] = x.astype(o_ref.dtype)


# ----------------------------------------------------------------------------
# Parameter initialization (matches SIREN init scheme; torch (out_f, in_f) layout)
# ----------------------------------------------------------------------------
def init_siren_params(
    key,
    in_features,
    hidden_features,
    hidden_layers,
    out_features,
    outermost_linear=False,
    first_omega_0=30.0,
    hidden_omega_0=30.0,
):
    """Returns a list of layer dicts: {'w': (out,in), 'b': (out,), 'omega', 'sine'}."""
    params = []
    dims = (
        [(in_features, hidden_features)]
        + [(hidden_features, hidden_features)] * hidden_layers
        + [(hidden_features, out_features)]
    )
    n_layers = len(dims)
    for li, (fin, fout) in enumerate(dims):
        key, kw, kb = jax.random.split(key, 3)
        is_first = li == 0
        is_last = li == n_layers - 1
        if is_first:
            w_bound = 1.0 / fin
        else:
            w_bound = math.sqrt(6.0 / fin) / hidden_omega_0
        omega = first_omega_0 if is_first else hidden_omega_0
        # torch nn.Linear weight layout: (out_features, in_features)
        w = jax.random.uniform(
            kw, (fout, fin), jnp.float32, minval=-w_bound, maxval=w_bound
        )
        # nn.Linear default bias init: U(-1/sqrt(fan_in), 1/sqrt(fan_in))
        b_bound = 1.0 / math.sqrt(fin)
        b = jax.random.uniform(
            kb, (fout,), jnp.float32, minval=-b_bound, maxval=b_bound
        )
        apply_sine = not (is_last and outermost_linear)
        params.append({"w": w, "b": b, "omega": omega, "sine": apply_sine})
    return params


# ----------------------------------------------------------------------------
# Siren forward: output, coords = siren(coords)
# ----------------------------------------------------------------------------
def siren_forward(params, coords, *, tile_n=512):
    # matches torch: coords = coords.clone().detach().requires_grad_(True)
    # (autograd bookkeeping has no inference-time effect; coords is passed through)
    n, in_f = coords.shape
    out_f = params[-1]["w"].shape[0]
    num_layers = len(params)

    # Fold omega into weights/biases (exact identity), reshape bias for
    # lane-aligned (out_f, 1) broadcast.  One-time trace-time constants.
    flat_params = []
    sine_flags = []
    for layer in params:
        scale = layer["omega"] if layer["sine"] else 1.0
        flat_params.append((layer["w"] * scale).astype(jnp.float32))
        flat_params.append((layer["b"] * scale).reshape(-1, 1).astype(jnp.float32))
        sine_flags.append(bool(layer["sine"]))
    sine_flags = tuple(sine_flags)

    # Large lane tiles amortize per-grid-step overhead; clamp for small N.
    tile_n = max(128, min(int(tile_n), _round_up(n, 128)))
    n_pad = _round_up(n, tile_n)

    # Lane-dense layout: features on sublanes, points on lanes.
    x_t = coords.T.astype(jnp.float32)  # (in_f, n)
    if n_pad != n:
        x_t = jnp.pad(x_t, ((0, 0), (0, n_pad - n)))

    grid = (n_pad // tile_n,)
    in_specs = [pl.BlockSpec((in_f, tile_n), lambda i: (0, i))]
    for arr in flat_params:
        # Constant index_map -> stays resident in VMEM across all grid steps.
        in_specs.append(pl.BlockSpec(arr.shape, lambda i: (0, 0)))
    out_specs = pl.BlockSpec((out_f, tile_n), lambda i: (0, i))

    # Advisory cost estimate for XLA scheduling around this tiny kernel.
    flops = int(2 * n_pad * sum(p["w"].shape[0] * p["w"].shape[1] for p in params))
    transcendentals = int(n_pad * sum(p["w"].shape[0] for p in params if p["sine"]))
    bytes_accessed = int(
        4 * (n_pad * (in_f + out_f) + sum(a.size for a in flat_params))
    )

    kernel = functools.partial(
        _siren_fused_kernel, num_layers=num_layers, sine_flags=sine_flags
    )

    out_t = pl.pallas_call(
        kernel,
        out_shape=jax.ShapeDtypeStruct((out_f, n_pad), jnp.float32),
        grid_spec=pltpu.PrefetchScalarGridSpec(
            num_scalar_prefetch=0,
            grid=grid,
            in_specs=in_specs,
            out_specs=out_specs,
        ),
        compiler_params=pltpu.CompilerParams(
            dimension_semantics=("parallel",)  # shards across v7x's 2 TensorCores
        ),
        cost_estimate=pl.CostEstimate(
            flops=flops,
            transcendentals=transcendentals,
            bytes_accessed=bytes_accessed,
        ),
    )(x_t, *flat_params)

    output = out_t[:, :n].T  # back to (n, out_f), drop padding
    return output, coords


# ----------------------------------------------------------------------------
if __name__ == "__main__":
    key = jax.random.PRNGKey(0)

    # Small Siren: in=2 (2-D coords), hidden=32, 2 hidden layers, out=1,
    # outermost_linear=True (common SIREN config).
    in_features = 2
    hidden_features = 32
    hidden_layers = 2
    out_features = 1
    outermost_linear = True

    k_params, k_coords = jax.random.split(key)
    params = init_siren_params(
        k_params,
        in_features,
        hidden_features,
        hidden_layers,
        out_features,
        outermost_linear=outermost_linear,
        first_omega_0=30.0,
        hidden_omega_0=30.0,
    )

    # N deliberately NOT a multiple of 128/512 to exercise the pad path.
    N = 1000
    coords = jax.random.uniform(
        k_coords, (N, in_features), jnp.float32, minval=-1.0, maxval=1.0
    )

    output, coords_out = siren_forward(params, coords, tile_n=512)
    jax.block_until_ready((output, coords_out))

    # Pure-JAX reference, faithful to the PyTorch forward (omega *inside* sin,
    # un-folded; f32-precise matmuls).
    x_ref = coords
    for layer in params:
        z = (
            jnp.dot(x_ref, layer["w"].T, precision=jax.lax.Precision.HIGHEST)
            + layer["b"]
        )
        x_ref = jnp.sin(layer["omega"] * z) if layer["sine"] else z

    assert output.shape == (N, out_features)
    assert coords_out.shape == (N, in_features)
    max_err = float(jnp.max(jnp.abs(output - x_ref)))
    assert bool(jnp.allclose(output, x_ref, atol=1e-3, rtol=1e-3)), max_err

    print("KERNEL_OK")
</pallas_src>

<mosaic_0001>
module attributes {stable_mosaic.version = 11 : i64} {
  func.func @_siren_fused_kernel(%arg0: i32, %arg1: memref<2x512xf32, #tpu.memory_space<vmem>>, %arg2: memref<32x2xf32, #tpu.memory_space<vmem>>, %arg3: memref<32x1xf32, #tpu.memory_space<vmem>>, %arg4: memref<32x32xf32, #tpu.memory_space<vmem>>, %arg5: memref<32x1xf32, #tpu.memory_space<vmem>>, %arg6: memref<32x32xf32, #tpu.memory_space<vmem>>, %arg7: memref<32x1xf32, #tpu.memory_space<vmem>>, %arg8: memref<1x32xf32, #tpu.memory_space<vmem>>, %arg9: memref<1x1xf32, #tpu.memory_space<vmem>>, %arg10: memref<1x512xf32, #tpu.memory_space<vmem>>) attributes {dimension_semantics = [#tpu.dimension_semantics<parallel>], iteration_bounds = array<i64: 2>, scalar_prefetch = 0 : i64, scratch_operands = 0 : i64, tpu.core_type = #tpu.core_type<tc>, window_params = [{transform_indices = @transform_0, window_bounds = array<i64: 2, 512>}, {pipeline_mode = #tpu.pipeline_mode<synchronous>, transform_indices = @transform_1, window_bounds = array<i64: 32, 2>}, {pipeline_mode = #tpu.pipeline_mode<synchronous>, transform_indices = @transform_2, window_bounds = array<i64: 32, 1>}, {pipeline_mode = #tpu.pipeline_mode<synchronous>, transform_indices = @transform_3, window_bounds = array<i64: 32, 32>}, {pipeline_mode = #tpu.pipeline_mode<synchronous>, transform_indices = @transform_4, window_bounds = array<i64: 32, 1>}, {pipeline_mode = #tpu.pipeline_mode<synchronous>, transform_indices = @transform_5, window_bounds = array<i64: 32, 32>}, {pipeline_mode = #tpu.pipeline_mode<synchronous>, transform_indices = @transform_6, window_bounds = array<i64: 32, 1>}, {pipeline_mode = #tpu.pipeline_mode<synchronous>, transform_indices = @transform_7, window_bounds = array<i64: 1, 32>}, {pipeline_mode = #tpu.pipeline_mode<synchronous>, transform_indices = @transform_8, window_bounds = array<i64: 1, 1>}, {transform_indices = @transform_9, window_bounds = array<i64: 1, 512>}]} {
    %c0 = arith.constant 0 : index
    %c0_0 = arith.constant 0 : index
    %0 = vector.load %arg1[%c0, %c0_0] : memref<2x512xf32, #tpu.memory_space<vmem>>, vector<2x512xf32>
    %c0_1 = arith.constant 0 : index
    %c0_2 = arith.constant 0 : index
    %1 = vector.load %arg2[%c0_1, %c0_2] : memref<32x2xf32, #tpu.memory_space<vmem>>, vector<32x2xf32>
    %c0_3 = arith.constant 0 : index
    %c0_4 = arith.constant 0 : index
    %2 = vector.load %arg3[%c0_3, %c0_4] : memref<32x1xf32, #tpu.memory_space<vmem>>, vector<32x1xf32>
    %3 = vector.shape_cast %2 : vector<32x1xf32> to vector<32x1xf32>
    %4 = vector.broadcast %3 : vector<32x1xf32> to vector<32x512xf32>
    %5 = vector.extract_strided_slice %1 {offsets = [0, 0], sizes = [32, 1], strides = [1, 1]} : vector<32x2xf32> to vector<32x1xf32>
    %6 = vector.extract_strided_slice %0 {offsets = [0, 0], sizes = [1, 512], strides = [1, 1]} : vector<2x512xf32> to vector<1x512xf32>
    %7 = vector.broadcast %5 : vector<32x1xf32> to vector<32x512xf32>
    %8 = vector.broadcast %6 : vector<1x512xf32> to vector<32x512xf32>
    %9 = arith.mulf %7, %8 : vector<32x512xf32>
    %10 = arith.addf %4, %9 : vector<32x512xf32>
    %11 = vector.extract_strided_slice %1 {offsets = [0, 1], sizes = [32, 1], strides = [1, 1]} : vector<32x2xf32> to vector<32x1xf32>
    %12 = vector.extract_strided_slice %0 {offsets = [1, 0], sizes = [1, 512], strides = [1, 1]} : vector<2x512xf32> to vector<1x512xf32>
    %13 = vector.broadcast %11 : vector<32x1xf32> to vector<32x512xf32>
    %14 = vector.broadcast %12 : vector<1x512xf32> to vector<32x512xf32>
    %15 = arith.mulf %13, %14 : vector<32x512xf32>
    %16 = arith.addf %10, %15 : vector<32x512xf32>
    %17 = math.sin %16 : vector<32x512xf32>
    %c0_5 = arith.constant 0 : index
    %c0_6 = arith.constant 0 : index
    %18 = vector.load %arg4[%c0_5, %c0_6] : memref<32x32xf32, #tpu.memory_space<vmem>>, vector<32x32xf32>
    %c0_7 = arith.constant 0 : index
    %c0_8 = arith.constant 0 : index
    %19 = vector.load %arg5[%c0_7, %c0_8] : memref<32x1xf32, #tpu.memory_space<vmem>>, vector<32x1xf32>
    %cst = arith.constant dense<0.000000e+00> : vector<32x512xf32>
    %20 = tpu.matmul %18, %17, %cst {dimension_numbers = #tpu.dot_dimension_numbers<[1], [0], [0], [1], [0, 0, 1, 1], [], []>} : vector<32x32xf32>, vector<32x512xf32>, vector<32x512xf32> -> vector<32x512xf32>
    %21 = vector.broadcast %19 : vector<32x1xf32> to vector<32x512xf32>
    %22 = arith.addf %20, %21 : vector<32x512xf32>
    %23 = math.sin %22 : vector<32x512xf32>
    %c0_9 = arith.constant 0 : index
    %c0_10 = arith.constant 0 : index
    %24 = vector.load %arg6[%c0_9, %c0_10] : memref<32x32xf32, #tpu.memory_space<vmem>>, vector<32x32xf32>
    %c0_11 = arith.constant 0 : index
    %c0_12 = arith.constant 0 : index
    %25 = vector.load %arg7[%c0_11, %c0_12] : memref<32x1xf32, #tpu.memory_space<vmem>>, vector<32x1xf32>
    %cst_13 = arith.constant dense<0.000000e+00> : vector<32x512xf32>
    %26 = tpu.matmul %24, %23, %cst_13 {dimension_numbers = #tpu.dot_dimension_numbers<[1], [0], [0], [1], [0, 0, 1, 1], [], []>} : vector<32x32xf32>, vector<32x512xf32>, vector<32x512xf32> -> vector<32x512xf32>
    %27 = vector.broadcast %25 : vector<32x1xf32> to vector<32x512xf32>
    %28 = arith.addf %26, %27 : vector<32x512xf32>
    %29 = math.sin %28 : vector<32x512xf32>
    %c0_14 = arith.constant 0 : index
    %c0_15 = arith.constant 0 : index
    %30 = vector.load %arg8[%c0_14, %c0_15] : memref<1x32xf32, #tpu.memory_space<vmem>>, vector<1x32xf32>
    %c0_16 = arith.constant 0 : index
    %c0_17 = arith.constant 0 : index
    %31 = vector.load %arg9[%c0_16, %c0_17] : memref<1x1xf32, #tpu.memory_space<vmem>>, vector<1x1xf32>
    %cst_18 = arith.constant dense<0.000000e+00> : vector<1x512xf32>
    %32 = tpu.matmul %30, %29, %cst_18 {dimension_numbers = #tpu.dot_dimension_numbers<[1], [0], [0], [1], [0, 0, 1, 1], [], []>} : vector<1x32xf32>, vector<32x512xf32>, vector<1x512xf32> -> vector<1x512xf32>
    %33 = vector.broadcast %31 : vector<1x1xf32> to vector<1x512xf32>
    %34 = arith.addf %32, %33 : vector<1x512xf32>
    %c0_19 = arith.constant 0 : index
    %c0_20 = arith.constant 0 : index
    %35 = vector.load %arg10[%c0_19, %c0_20] : memref<1x512xf32, #tpu.memory_space<vmem>>, vector<1x512xf32>
    tpu.vector_store %arg10[%c0_19, %c0_20], %34 {strides = array<i32>} : memref<1x512xf32, #tpu.memory_space<vmem>>, vector<1x512xf32>,
    return
  }
  func.func @transform_0(%arg0: i32) -> (i32, i32) {
    %c0_i32 = arith.constant 0 : i32
    %c0_i32_0 = arith.constant 0 : i32
    return %c0_i32, %arg0 : i32, i32
  }
  func.func @transform_1(%arg0: i32) -> (i32, i32) {
    %c0_i32 = arith.constant 0 : i32
    %c0_i32_0 = arith.constant 0 : i32
    %c0_i32_1 = arith.constant 0 : i32
    return %c0_i32, %c0_i32_0 : i32, i32
  }
  func.func @transform_2(%arg0: i32) -> (i32, i32) {
    %c0_i32 = arith.constant 0 : i32
    %c0_i32_0 = arith.constant 0 : i32
    %c0_i32_1 = arith.constant 0 : i32
    return %c0_i32, %c0_i32_0 : i32, i32
  }
  func.func @transform_3(%arg0: i32) -> (i32, i32) {
    %c0_i32 = arith.constant 0 : i32
    %c0_i32_0 = arith.constant 0 : i32
    %c0_i32_1 = arith.constant 0 : i32
    return %c0_i32, %c0_i32_0 : i32, i32
  }
  func.func @transform_4(%arg0: i32) -> (i32, i32) {
    %c0_i32 = arith.constant 0 : i32
    %c0_i32_0 = arith.constant 0 : i32
    %c0_i32_1 = arith.constant 0 : i32
    return %c0_i32, %c0_i32_0 : i32, i32
  }
  func.func @transform_5(%arg0: i32) -> (i32, i32) {
    %c0_i32 = arith.constant 0 : i32
    %c0_i32_0 = arith.constant 0 : i32
    %c0_i32_1 = arith.constant 0 : i32
    return %c0_i32, %c0_i32_0 : i32, i32
  }
  func.func @transform_6(%arg0: i32) -> (i32, i32) {
    %c0_i32 = arith.constant 0 : i32
    %c0_i32_0 = arith.constant 0 : i32
    %c0_i32_1 = arith.constant 0 : i32
    return %c0_i32, %c0_i32_0 : i32, i32
  }
  func.func @transform_7(%arg0: i32) -> (i32, i32) {
    %c0_i32 = arith.constant 0 : i32
    %c0_i32_0 = arith.constant 0 : i32
    %c0_i32_1 = arith.constant 0 : i32
    return %c0_i32, %c0_i32_0 : i32, i32
  }
  func.func @transform_8(%arg0: i32) -> (i32, i32) {
    %c0_i32 = arith.constant 0 : i32
    %c0_i32_0 = arith.constant 0 : i32
    %c0_i32_1 = arith.constant 0 : i32
    return %c0_i32, %c0_i32_0 : i32, i32
  }
  func.func @transform_9(%arg0: i32) -> (i32, i32) {
    %c0_i32 = arith.constant 0 : i32
    %c0_i32_0 = arith.constant 0 : i32
    return %c0_i32, %arg0 : i32, i32
  }
}

</mosaic_0001>

<llo_original>
// kernel: tpu_custom_call.1
$region0: #{tpu_custom_call.1}
  #allocation0 [shape = 'u32[]', space=smem, size = 0x4, offset = 0x4, fixed_abs, tag = 'smem constant byte address 0x4 - core index']
  #allocation1 [shape = 'u32[144,128]{1,0:T(1,128)}', space=vmem, size = 0x12000, scoped, tag = 'internal scratch']
  #allocation2 [shape = 'f32[1,1]{1,0:T(1,128)S(1)}', space=vmem, size = 0x200, scoped, tag = 'scoped memory for tpu_custom_call.1']
  %s0 = inlined_call_operand.vmem [shape: f32[2,1024], index: 0, kind: input, shape index: {}]
  %s1 = inlined_call_operand.vmem [shape: f32[32,2], index: 1, kind: input, shape index: {}]
  %s2 = inlined_call_operand.vmem [shape: f32[32,1], index: 2, kind: input, shape index: {}]
  %s3 = inlined_call_operand.vmem [shape: f32[32,32], index: 3, kind: input, shape index: {}]
  %s4 = inlined_call_operand.vmem [shape: f32[32,1], index: 4, kind: input, shape index: {}]
  %s5 = inlined_call_operand.vmem [shape: f32[32,32], index: 5, kind: input, shape index: {}]
  %s6 = inlined_call_operand.vmem [shape: f32[32,1], index: 6, kind: input, shape index: {}]
  %s7 = inlined_call_operand.vmem [shape: f32[1,32], index: 7, kind: input, shape index: {}]
  %s8 = inlined_call_operand.<no memory space> [shape: f32[1,1], index: 8, kind: input, shape index: {}]
  %s9 = inlined_call_operand.hbm [shape: f32[1,1024], index: 9, kind: output, shape index: {}]
  %s10 = sld [smem:[#allocation0]]
  $region69: #{tpu_custom_call.1} parent=0
    _
  %s12 = ssub.s32 1, %s10
  %s13 = scalar_select 0, %s12, %s10
  %v14 = vstv %s8
  %15 = vst [vmem:[#allocation2] sm:$0x1] %v14
  $region1: #{tpu_custom_call.1} parent=0
    #allocation3 [shape = 'u8[4096]{0}', space=vmem, size = 0x1000, scoped, tag = 'output window, operand 0']
    #allocation4 [shape = 's32[2]{0}', space=sflag, size = 0x8, scoped, tag = 'scoped memory for tpu_custom_call.1']
    %16 = vsyncpa [#allocation4], 0
    %s17 = scalar_lea.sflag [#allocation4], 1
    %18 = vsyncpa %s17, 0
    loop: start=0, step=1, limit=4
    $region2: #{tpu_custom_call.1} parent=1 // loop_pre_header
      _
    $region3: #{tpu_custom_call.1} parent=1 // loop_header
      %s20 = sphi 0, %s24
      %p21 = scmp.ge.s32.totalorder %s20, 4
      %s30 = sphi 0, %s32
      %s33 = sphi 0, %s30
      %s34 = sphi 0, %s33
      %s50 = sphi 0, %s34
      %s54 = sphi 0, %s54
      %s56 = sphi 0, %s54
      %s57 = sphi 0, %s56
      %s71 = sphi 0, %s57
      %s75 = sphi 0, %s75
      %s77 = sphi 0, %s75
      %s78 = sphi 0, %s77
      %s92 = sphi 0, %s78
      %s96 = sphi 0, %s96
      %s98 = sphi 0, %s96
      %s99 = sphi 0, %s98
      %s113 = sphi 0, %s99
      %s117 = sphi 0, %s117
      %s119 = sphi 0, %s117
      %s120 = sphi 0, %s119
      %s134 = sphi 0, %s120
      %s138 = sphi 0, %s138
      %s140 = sphi 0, %s138
      %s141 = sphi 0, %s140
      %s155 = sphi 0, %s141
      %s159 = sphi 0, %s159
      %s161 = sphi 0, %s159
      %s162 = sphi 0, %s161
      %s176 = sphi 0, %s162
      %s180 = sphi 0, %s180
      %s182 = sphi 0, %s180
      %s183 = sphi 0, %s182
      %s197 = sphi 0, %s183
      %s201 = sphi 0, %s201
      %s203 = sphi 0, %s201
      %s204 = sphi 0, %s203
      %s218 = sphi 0, %s204
      %s224 = sphi 0, %s226
      %s227 = sphi 0, %s224
      %s228 = sphi 0, %s227
      %s244 = sphi 0, %s228
    $region4: #{tpu_custom_call.1} parent=1 // loop_header_branch
      %23 = sbr.rel (%p21) target = $region8
    $region5: #{tpu_custom_call.1} parent=1 // loop_body
      %s25 = ssub.s32 %s20, 1
      %s26 = ssub.s32 %s20, 2
      %s27 = sadd.s32 %s20, 1
      %s28 = ssub.s32 %s20, %s27
      %p29 = scmp.eq.s32.totalorder %s28, 0
      %s31 = sadd.s32 %s30, 1
      %s32 = scalar_select %p29, %s30, %s31
      %p35 = pneg %p29
      %p36 = scmp.eq.s32.totalorder %s20, 1
      %p37 = por %p35, %p36
      %p38 = scmp.ne.s32.totalorder %s30, %s33
      %p39 = scmp.eq.s32.totalorder %s20, 0
      %p40 = por %p38, %p39
      %p41 = scmp.ne.s32.totalorder %s30, %s33
      %p42 = scmp.eq.s32.totalorder %s25, 1
      %p43 = por %p41, %p42
      %p44 = scmp.ne.s32.totalorder %s33, %s34
      %p45 = scmp.eq.s32.totalorder %s25, 0
      %p46 = por %p44, %p45
      %p47 = scmp.ne.s32.totalorder %s33, %s34
      %p48 = scmp.eq.s32.totalorder %s26, 1
      %p49 = por %p47, %p48
      %p51 = scmp.ne.s32.totalorder %s34, %s50
      %p52 = scmp.eq.s32.totalorder %s26, 0
      %p53 = por %p51, %p52
      %s55 = sadd.s32 %s54, 1
      %p58 = scmp.eq.s32.totalorder %s20, 1
      %p59 = scmp.ne.s32.totalorder %s54, %s56
      %p60 = scmp.eq.s32.totalorder %s20, 0
      %p61 = por %p59, %p60
      %p62 = scmp.ne.s32.totalorder %s54, %s56
      %p63 = scmp.eq.s32.totalorder %s25, 1
      %p64 = por %p62, %p63
      %p65 = scmp.ne.s32.totalorder %s56, %s57
      %p66 = scmp.eq.s32.totalorder %s25, 0
      %p67 = por %p65, %p66
      %p68 = scmp.ne.s32.totalorder %s56, %s57
      %p69 = scmp.eq.s32.totalorder %s26, 1
      %p70 = por %p68, %p69
      %p72 = scmp.ne.s32.totalorder %s57, %s71
      %p73 = scmp.eq.s32.totalorder %s26, 0
      %p74 = por %p72, %p73
      %s76 = sadd.s32 %s75, 1
      %p79 = scmp.eq.s32.totalorder %s20, 1
      %p80 = scmp.ne.s32.totalorder %s75, %s77
      %p81 = scmp.eq.s32.totalorder %s20, 0
      %p82 = por %p80, %p81
      %p83 = scmp.ne.s32.totalorder %s75, %s77
      %p84 = scmp.eq.s32.totalorder %s25, 1
      %p85 = por %p83, %p84
      %p86 = scmp.ne.s32.totalorder %s77, %s78
      %p87 = scmp.eq.s32.totalorder %s25, 0
      %p88 = por %p86, %p87
      %p89 = scmp.ne.s32.totalorder %s77, %s78
      %p90 = scmp.eq.s32.totalorder %s26, 1
      %p91 = por %p89, %p90
      %p93 = scmp.ne.s32.totalorder %s78, %s92
      %p94 = scmp.eq.s32.totalorder %s26, 0
      %p95 = por %p93, %p94
      %s97 = sadd.s32 %s96, 1
      %p100 = scmp.eq.s32.totalorder %s20, 1
      %p101 = scmp.ne.s32.totalorder %s96, %s98
      %p102 = scmp.eq.s32.totalorder %s20, 0
      %p103 = por %p101, %p102
      %p104 = scmp.ne.s32.totalorder %s96, %s98
      %p105 = scmp.eq.s32.totalorder %s25, 1
      %p106 = por %p104, %p105
      %p107 = scmp.ne.s32.totalorder %s98, %s99
      %p108 = scmp.eq.s32.totalorder %s25, 0
      %p109 = por %p107, %p108
      %p110 = scmp.ne.s32.totalorder %s98, %s99
      %p111 = scmp.eq.s32.totalorder %s26, 1
      %p112 = por %p110, %p111
      %p114 = scmp.ne.s32.totalorder %s99, %s113
      %p115 = scmp.eq.s32.totalorder %s26, 0
      %p116 = por %p114, %p115
      %s118 = sadd.s32 %s117, 1
      %p121 = scmp.eq.s32.totalorder %s20, 1
      %p122 = scmp.ne.s32.totalorder %s117, %s119
      %p123 = scmp.eq.s32.totalorder %s20, 0
      %p124 = por %p122, %p123
      %p125 = scmp.ne.s32.totalorder %s117, %s119
      %p126 = scmp.eq.s32.totalorder %s25, 1
      %p127 = por %p125, %p126
      %p128 = scmp.ne.s32.totalorder %s119, %s120
      %p129 = scmp.eq.s32.totalorder %s25, 0
      %p130 = por %p128, %p129
      %p131 = scmp.ne.s32.totalorder %s119, %s120
      %p132 = scmp.eq.s32.totalorder %s26, 1
      %p133 = por %p131, %p132
      %p135 = scmp.ne.s32.totalorder %s120, %s134
      %p136 = scmp.eq.s32.totalorder %s26, 0
      %p137 = por %p135, %p136
      %s139 = sadd.s32 %s138, 1
      %p142 = scmp.eq.s32.totalorder %s20, 1
      %p143 = scmp.ne.s32.totalorder %s138, %s140
      %p144 = scmp.eq.s32.totalorder %s20, 0
      %p145 = por %p143, %p144
      %p146 = scmp.ne.s32.totalorder %s138, %s140
      %p147 = scmp.eq.s32.totalorder %s25, 1
      %p148 = por %p146, %p147
      %p149 = scmp.ne.s32.totalorder %s140, %s141
      %p150 = scmp.eq.s32.totalorder %s25, 0
      %p151 = por %p149, %p150
      %p152 = scmp.ne.s32.totalorder %s140, %s141
      %p153 = scmp.eq.s32.totalorder %s26, 1
      %p154 = por %p152, %p153
      %p156 = scmp.ne.s32.totalorder %s141, %s155
      %p157 = scmp.eq.s32.totalorder %s26, 0
      %p158 = por %p156, %p157
      %s160 = sadd.s32 %s159, 1
      %p163 = scmp.eq.s32.totalorder %s20, 1
      %p164 = scmp.ne.s32.totalorder %s159, %s161
      %p165 = scmp.eq.s32.totalorder %s20, 0
      %p166 = por %p164, %p165
      %p167 = scmp.ne.s32.totalorder %s159, %s161
      %p168 = scmp.eq.s32.totalorder %s25, 1
      %p169 = por %p167, %p168
      %p170 = scmp.ne.s32.totalorder %s161, %s162
      %p171 = scmp.eq.s32.totalorder %s25, 0
      %p172 = por %p170, %p171
      %p173 = scmp.ne.s32.totalorder %s161, %s162
      %p174 = scmp.eq.s32.totalorder %s26, 1
      %p175 = por %p173, %p174
      %p177 = scmp.ne.s32.totalorder %s162, %s176
      %p178 = scmp.eq.s32.totalorder %s26, 0
      %p179 = por %p177, %p178
      %s181 = sadd.s32 %s180, 1
      %p184 = scmp.eq.s32.totalorder %s20, 1
      %p185 = scmp.ne.s32.totalorder %s180, %s182
      %p186 = scmp.eq.s32.totalorder %s20, 0
      %p187 = por %p185, %p186
      %p188 = scmp.ne.s32.totalorder %s180, %s182
      %p189 = scmp.eq.s32.totalorder %s25, 1
      %p190 = por %p188, %p189
      %p191 = scmp.ne.s32.totalorder %s182, %s183
      %p192 = scmp.eq.s32.totalorder %s25, 0
      %p193 = por %p191, %p192
      %p194 = scmp.ne.s32.totalorder %s182, %s183
      %p195 = scmp.eq.s32.totalorder %s26, 1
      %p196 = por %p194, %p195
      %p198 = scmp.ne.s32.totalorder %s183, %s197
      %p199 = scmp.eq.s32.totalorder %s26, 0
      %p200 = por %p198, %p199
      %s202 = sadd.s32 %s201, 1
      %p205 = scmp.eq.s32.totalorder %s20, 1
      %p206 = scmp.ne.s32.totalorder %s201, %s203
      %p207 = scmp.eq.s32.totalorder %s20, 0
      %p208 = por %p206, %p207
      %p209 = scmp.ne.s32.totalorder %s201, %s203
      %p210 = scmp.eq.s32.totalorder %s25, 1
      %p211 = por %p209, %p210
      %p212 = scmp.ne.s32.totalorder %s203, %s204
      %p213 = scmp.eq.s32.totalorder %s25, 0
      %p214 = por %p212, %p213
      %p215 = scmp.ne.s32.totalorder %s203, %s204
      %p216 = scmp.eq.s32.totalorder %s26, 1
      %p217 = por %p215, %p216
      %p219 = scmp.ne.s32.totalorder %s204, %s218
      %p220 = scmp.eq.s32.totalorder %s26, 0
      %p221 = por %p219, %p220
      %s222 = ssub.s32 %s20, %s27
      %p223 = scmp.eq.s32.totalorder %s222, 0
      %s225 = sadd.s32 %s224, 1
      %s226 = scalar_select %p223, %s224, %s225
      %p229 = pneg %p223
      %p230 = scmp.eq.s32.totalorder %s20, 1
      %p231 = por %p229, %p230
      %p232 = scmp.ne.s32.totalorder %s224, %s227
      %p233 = scmp.eq.s32.totalorder %s20, 0
      %p234 = por %p232, %p233
      %p235 = scmp.ne.s32.totalorder %s224, %s227
      %p236 = scmp.eq.s32.totalorder %s25, 1
      %p237 = por %p235, %p236
      %p238 = scmp.ne.s32.totalorder %s227, %s228
      %p239 = scmp.eq.s32.totalorder %s25, 0
      %p240 = por %p238, %p239
      %p241 = scmp.ne.s32.totalorder %s227, %s228
      %p242 = scmp.eq.s32.totalorder %s26, 1
      %p243 = por %p241, %p242
      %p245 = scmp.ne.s32.totalorder %s228, %s244
      %p246 = scmp.eq.s32.totalorder %s26, 0
      %p247 = por %p245, %p246
      %p248 = scmp.le.s32.totalorder 1, %s20
      %p249 = scmp.lt.s32.totalorder %s20, 3
      %p250 = pnand %p248, %p249
      %p251 = pneg %p250
      // Predicated region
      $region9: #{tpu_custom_call.1} parent=5 // pred_check
        _
      $region10: #{tpu_custom_call.1} parent=5 // pred_check_branch
        %253 = sbr.rel (%p250) target = $region12
      $region11: #{tpu_custom_call.1} parent=5 // pred_region
        %s254 = ssub.s32 %s20, 1
        // Predicated region
        $region13: #{tpu_custom_call.1} parent=11 // pred_check
          %p255 = pneg %p67
        $region14: #{tpu_custom_call.1} parent=11 // pred_check_branch
          %257 = sbr.rel (%p255) target = $region16
        $region15: #{tpu_custom_call.1} parent=11 // pred_region
          _
        $region16: #{tpu_custom_call.1} parent=11 // pred_fallthru
          _
        // Predicated region
        $region17: #{tpu_custom_call.1} parent=11 // pred_check
          %p258 = pneg %p88
        $region18: #{tpu_custom_call.1} parent=11 // pred_check_branch
          %260 = sbr.rel (%p258) target = $region20
        $region19: #{tpu_custom_call.1} parent=11 // pred_region
          _
        $region20: #{tpu_custom_call.1} parent=11 // pred_fallthru
          _
        // Predicated region
        $region21: #{tpu_custom_call.1} parent=11 // pred_check
          %p261 = pneg %p109
        $region22: #{tpu_custom_call.1} parent=11 // pred_check_branch
          %263 = sbr.rel (%p261) target = $region24
        $region23: #{tpu_custom_call.1} parent=11 // pred_region
          _
        $region24: #{tpu_custom_call.1} parent=11 // pred_fallthru
          _
        // Predicated region
        $region25: #{tpu_custom_call.1} parent=11 // pred_check
          %p264 = pneg %p130
        $region26: #{tpu_custom_call.1} parent=11 // pred_check_branch
          %266 = sbr.rel (%p264) target = $region28
        $region27: #{tpu_custom_call.1} parent=11 // pred_region
          _
        $region28: #{tpu_custom_call.1} parent=11 // pred_fallthru
          _
        // Predicated region
        $region29: #{tpu_custom_call.1} parent=11 // pred_check
          %p267 = pneg %p151
        $region30: #{tpu_custom_call.1} parent=11 // pred_check_branch
          %269 = sbr.rel (%p267) target = $region32
        $region31: #{tpu_custom_call.1} parent=11 // pred_region
          _
        $region32: #{tpu_custom_call.1} parent=11 // pred_fallthru
          _
        // Predicated region
        $region33: #{tpu_custom_call.1} parent=11 // pred_check
          %p270 = pneg %p172
        $region34: #{tpu_custom_call.1} parent=11 // pred_check_branch
          %272 = sbr.rel (%p270) target = $region36
        $region35: #{tpu_custom_call.1} parent=11 // pred_region
          _
        $region36: #{tpu_custom_call.1} parent=11 // pred_fallthru
          _
        // Predicated region
        $region37: #{tpu_custom_call.1} parent=11 // pred_check
          %p273 = pneg %p193
        $region38: #{tpu_custom_call.1} parent=11 // pred_check_branch
          %275 = sbr.rel (%p273) target = $region40
        $region39: #{tpu_custom_call.1} parent=11 // pred_region
          _
        $region40: #{tpu_custom_call.1} parent=11 // pred_fallthru
          _
        // Predicated region
        $region41: #{tpu_custom_call.1} parent=11 // pred_check
          %p276 = pneg %p214
        $region42: #{tpu_custom_call.1} parent=11 // pred_check_branch
          %278 = sbr.rel (%p276) target = $region44
        $region43: #{tpu_custom_call.1} parent=11 // pred_region
          _
        $region44: #{tpu_custom_call.1} parent=11 // pred_fallthru
          _
      $region12: #{tpu_custom_call.1} parent=5 // pred_fallthru
        _
      %p279 = scmp.lt.s32.totalorder %s20, 2
      // Predicated region
      $region45: #{tpu_custom_call.1} parent=5 // pred_check
        %p280 = pneg %p279
      $region46: #{tpu_custom_call.1} parent=5 // pred_check_branch
        %282 = sbr.rel (%p280) target = $region48
      $region47: #{tpu_custom_call.1} parent=5 // pred_region
        // Predicated region
        $region49: #{tpu_custom_call.1} parent=47 // pred_check
          %p283 = pneg %p40
        $region50: #{tpu_custom_call.1} parent=47 // pred_check_branch
          %285 = sbr.rel (%p283) target = $region52
        $region51: #{tpu_custom_call.1} parent=47 // pred_region
          %s286 = smul.u32 4, %s20
          %p287 = scmp.lt.s32.totalorder %s286, 7
          %s288 = scalar_select %p287, %s286, 7
          %s289 = smul.addr %s288, 2
          %s290 = scalar_lea.vmem %s0, %s289
          %s291 = smul.u32 4, %s20
        $region52: #{tpu_custom_call.1} parent=47 // pred_fallthru
          _
      $region48: #{tpu_custom_call.1} parent=5 // pred_fallthru
        _
      %p292 = scmp.le.s32.totalorder 1, %s20
      %p293 = scmp.lt.s32.totalorder %s20, 3
      %p294 = pnand %p292, %p293
      %p295 = pneg %p294
      // Predicated region
      $region53: #{tpu_custom_call.1} parent=5 // pred_check
        _
      $region54: #{tpu_custom_call.1} parent=5 // pred_check_branch
        %297 = sbr.rel (%p294) target = $region56
      $region55: #{tpu_custom_call.1} parent=5 // pred_region
        %s298 = ssub.s32 %s20, 1
        %s299 = smul.u32 4, %s25
        %p300 = scmp.lt.s32.totalorder %s299, 7
        %s301 = scalar_select %p300, %s299, 7
        %s302 = smul.addr %s301, 2
        %s303 = scalar_lea.vmem %s0, %s302
        %p304 = pneg %p46
        %p305 = pneg %p43
        %p306 = pneg %p67
        %p307 = pneg %p64
        %p308 = pneg %p88
        %p309 = pneg %p85
        %p310 = pneg %p109
        %p311 = pneg %p106
        %p312 = pneg %p130
        %p313 = pneg %p127
        %p314 = pneg %p151
        %p315 = pneg %p148
        %p316 = pneg %p172
        %p317 = pneg %p169
        %p318 = pneg %p193
        %p319 = pneg %p190
        %p320 = pneg %p214
        %p321 = pneg %p211
        %p322 = pneg %p240
        %p323 = pneg %p237
        %s324 = sand.u32 %s227, 1
        %s325 = scalar_lea.sflag [#allocation4], %s324
        %s326 = sand.u32 %s227, 1
        %s327 = smul.addr %s326, 4
        %s328 = scalar_lea.vmem [#allocation3], %s327
        %s329 = smul.u32 4, %s25
        %p330 = scmp.lt.s32.totalorder %s329, 7
        %s331 = scalar_select %p330, %s329, 7
        %s332 = smul.addr %s331, 2
        %s333 = scalar_lea.vmem %s0, %s332
        %s334 = smul.u32 4, %s25
        %s335 = smul.u32 4, %s25
        %v336 = vld [vmem:[%s333] sm:$0xff]
        %v337 = vld [vmem:[%s1] sm:$0xff]
        %v338 = vld [vmem:[%s1 + $0x8] sm:$0xff]
        %v339 = vld [vmem:[%s1 + $0x10] sm:$0xff]
        %v340 = vld [vmem:[%s1 + $0x18] sm:$0xff]
        %v341 = vld [vmem:[%s2] sm:$0xff]
        %v342 = vld [vmem:[%s2 + $0x8] sm:$0xff]
        %v343 = vld [vmem:[%s2 + $0x10] sm:$0xff]
        %v344 = vld [vmem:[%s2 + $0x18] sm:$0xff]
        %346 = vset.pattern.permute.xlu0 0
        %347 = vperm.xlu0 %346, %v341
        %v348 = vpop.permute.xlu0 %347
        %351 = vset.pattern.permute.xlu0 0
        %352 = vperm.xlu0 %351, %v342
        %v353 = vpop.permute.xlu0 %352
        %356 = vset.pattern.permute.xlu0 0
        %357 = vperm.xlu0 %356, %v343
        %v358 = vpop.permute.xlu0 %357
        %361 = vset.pattern.permute.xlu0 0
        %362 = vperm.xlu0 %361, %v344
        %v363 = vpop.permute.xlu0 %362
        %366 = vset.pattern.permute.xlu0 0
        %367 = vperm.xlu0 %366, %v337
        %v368 = vpop.permute.xlu0 %367
        %371 = vset.pattern.permute.xlu0 0
        %372 = vperm.xlu0 %371, %v338
        %v373 = vpop.permute.xlu0 %372
        %376 = vset.pattern.permute.xlu0 0
        %377 = vperm.xlu0 %376, %v339
        %v378 = vpop.permute.xlu0 %377
        %381 = vset.pattern.permute.xlu0 0
        %382 = vperm.xlu0 %381, %v340
        %v383 = vpop.permute.xlu0 %382
        %v386 = vlaneseq
        %v387 = vshrl.u32 %v386, 7
        %v388 = vsub.s32 0, %v387
        %v389 = vrot.slane %v336, %v388
        %v390 = vlaneseq
        %v391 = vshrl.u32 %v390, 7
        %v392 = vsub.s32 2, %v391
        %v393 = vrot.slane %v336, %v392
        %v394 = vlaneseq
        %v395 = vshrl.u32 %v394, 7
        %v396 = vsub.s32 4, %v395
        %v397 = vrot.slane %v336, %v396
        %v398 = vlaneseq
        %v399 = vshrl.u32 %v398, 7
        %v400 = vsub.s32 6, %v399
        %v401 = vrot.slane %v336, %v400
        %v406 = vlaneseq
        %v407 = vshrl.u32 %v406, 7
        %v408 = vsub.s32 0, %v407
        %v409 = vrot.slane %v389, %v408
        %v410 = vlaneseq
        %v411 = vshrl.u32 %v410, 7
        %v412 = vsub.s32 0, %v411
        %v413 = vrot.slane %v393, %v412
        %v414 = vlaneseq
        %v415 = vshrl.u32 %v414, 7
        %v416 = vsub.s32 0, %v415
        %v417 = vrot.slane %v397, %v416
        %v418 = vlaneseq
        %v419 = vshrl.u32 %v418, 7
        %v420 = vsub.s32 0, %v419
        %v421 = vrot.slane %v401, %v420
        %v422 = vmul.f32 %v368, %v409
        %v423 = vmul.f32 %v368, %v413
        %v424 = vmul.f32 %v368, %v417
        %v425 = vmul.f32 %v368, %v421
        %v426 = vmul.f32 %v373, %v409
        %v427 = vmul.f32 %v373, %v413
        %v428 = vmul.f32 %v373, %v417
        %v429 = vmul.f32 %v373, %v421
        %v430 = vmul.f32 %v378, %v409
        %v431 = vmul.f32 %v378, %v413
        %v432 = vmul.f32 %v378, %v417
        %v433 = vmul.f32 %v378, %v421
        %v434 = vmul.f32 %v383, %v409
        %v435 = vmul.f32 %v383, %v413
        %v436 = vmul.f32 %v383, %v417
        %v437 = vmul.f32 %v383, %v421
        %v438 = vadd.f32 %v348, %v422
        %v439 = vadd.f32 %v348, %v423
        %v440 = vadd.f32 %v348, %v424
        %v441 = vadd.f32 %v348, %v425
        %v442 = vadd.f32 %v353, %v426
        %v443 = vadd.f32 %v353, %v427
        %v444 = vadd.f32 %v353, %v428
        %v445 = vadd.f32 %v353, %v429
        %v446 = vadd.f32 %v358, %v430
        %v447 = vadd.f32 %v358, %v431
        %v448 = vadd.f32 %v358, %v432
        %v449 = vadd.f32 %v358, %v433
        %v450 = vadd.f32 %v363, %v434
        %v451 = vadd.f32 %v363, %v435
        %v452 = vadd.f32 %v363, %v436
        %v453 = vadd.f32 %v363, %v437
        %454 = vset.pattern.permute.xlu0 1
        %455 = vperm.xlu0 %454, %v337
        %v456 = vpop.permute.xlu0 %455
        %458 = vset.pattern.permute.xlu0 1
        %459 = vperm.xlu0 %458, %v338
        %v460 = vpop.permute.xlu0 %459
        %462 = vset.pattern.permute.xlu0 1
        %463 = vperm.xlu0 %462, %v339
        %v464 = vpop.permute.xlu0 %463
        %466 = vset.pattern.permute.xlu0 1
        %467 = vperm.xlu0 %466, %v340
        %v468 = vpop.permute.xlu0 %467
        %v470 = vlaneseq
        %v471 = vshrl.u32 %v470, 7
        %v472 = vsub.s32 1, %v471
        %v473 = vrot.slane %v336, %v472
        %v474 = vlaneseq
        %v475 = vshrl.u32 %v474, 7
        %v476 = vsub.s32 3, %v475
        %v477 = vrot.slane %v336, %v476
        %v478 = vlaneseq
        %v479 = vshrl.u32 %v478, 7
        %v480 = vsub.s32 5, %v479
        %v481 = vrot.slane %v336, %v480
        %v482 = vlaneseq
        %v483 = vshrl.u32 %v482, 7
        %v484 = vsub.s32 7, %v483
        %v485 = vrot.slane %v336, %v484
        %v490 = vlaneseq
        %v491 = vshrl.u32 %v490, 7
        %v492 = vsub.s32 1, %v491
        %v493 = vrot.slane %v473, %v492
        %v494 = vlaneseq
        %v495 = vshrl.u32 %v494, 7
        %v496 = vsub.s32 1, %v495
        %v497 = vrot.slane %v477, %v496
        %v498 = vlaneseq
        %v499 = vshrl.u32 %v498, 7
        %v500 = vsub.s32 1, %v499
        %v501 = vrot.slane %v481, %v500
        %v502 = vlaneseq
        %v503 = vshrl.u32 %v502, 7
        %v504 = vsub.s32 1, %v503
        %v505 = vrot.slane %v485, %v504
        %v506 = vmul.f32 %v456, %v493
        %v507 = vmul.f32 %v456, %v497
        %v508 = vmul.f32 %v456, %v501
        %v509 = vmul.f32 %v456, %v505
        %v510 = vmul.f32 %v460, %v493
        %v511 = vmul.f32 %v460, %v497
        %v512 = vmul.f32 %v460, %v501
        %v513 = vmul.f32 %v460, %v505
        %v514 = vmul.f32 %v464, %v493
        %v515 = vmul.f32 %v464, %v497
        %v516 = vmul.f32 %v464, %v501
        %v517 = vmul.f32 %v464, %v505
        %v518 = vmul.f32 %v468, %v493
        %v519 = vmul.f32 %v468, %v497
        %v520 = vmul.f32 %v468, %v501
        %v521 = vmul.f32 %v468, %v505
        %v522 = vadd.f32 %v438, %v506
        %v523 = vadd.f32 %v439, %v507
        %v524 = vadd.f32 %v440, %v508
        %v525 = vadd.f32 %v441, %v509
        %v526 = vadd.f32 %v442, %v510
        %v527 = vadd.f32 %v443, %v511
        %v528 = vadd.f32 %v444, %v512
        %v529 = vadd.f32 %v445, %v513
        %v530 = vadd.f32 %v446, %v514
        %v531 = vadd.f32 %v447, %v515
        %v532 = vadd.f32 %v448, %v516
        %v533 = vadd.f32 %v449, %v517
        %v534 = vadd.f32 %v450, %v518
        %v535 = vadd.f32 %v451, %v519
        %v536 = vadd.f32 %v452, %v520
        %v537 = vadd.f32 %v453, %v521
        %v538 = vand.u32 2147483647, %v522
        %vm539 = vcmp.le.f32.partialorder %v538, 0.7853982
        %vm540 = vcmp.lt.s32.totalorder %v522, 0
        %v541 = vand.u32 %v522, 2139095040
        %v542 = vshrl.u32 %v541, 23
        %v543 = vsub.s32 %v542, 127
        %v544 = vand.u32 2147483647, %v522
        %v545 = vand.u32 %v544, 8388607
        %v546 = vor.u32 %v545, 8388608
        %v547 = vsub.s32 0, %v546
        %v548 = vadd.s32 %v543, 1
        %vm549 = vcmp.gt.s32.totalorder %v548, 0
        %v550 = vsel %vm549, %v548, 0
        %v551 = vshrl.u32 %v550, 5
        %v552 = vand.u32 %v550, 31
        %v553 = vsub.s32 32, %v552
        %v554 = vshrl.u32 683565275, %v553
        %v555 = vshll.u32 683565275, %v552
        %v556 = vshrl.u32 2475754826, %v553
        %v557 = vor.u32 %v555, %v556
        %v558 = vshll.u32 2475754826, %v552
        %v559 = vshrl.u32 2131351028, %v553
        %v560 = vor.u32 %v558, %v559
        %v561 = vshll.u32 2131351028, %v552
        %v562 = vshrl.u32 2102212464, %v553
        %v563 = vor.u32 %v561, %v562
        %v564 = vshll.u32 2102212464, %v552
        %v565 = vshrl.u32 920167782, %v553
        %v566 = vor.u32 %v564, %v565
        %v567 = vshll.u32 920167782, %v552
        %v568 = vshrl.u32 1326507024, %v553
        %v569 = vor.u32 %v567, %v568
        %vm570 = vcmp.lt.s32.totalorder %v551, 1
        %vm571 = vcmp.lt.s32.totalorder %v551, 2
        %vm572 = vcmp.lt.s32.totalorder %v551, 3
        %vm573 = vcmp.lt.s32.totalorder %v551, 4
        %v574 = vsel %vm570, %v554, %v557
        %v575 = vsel %vm573, %v563, 2102212464
        %v576 = vsel %vm572, %v560, %v575
        %v577 = vsel %vm571, %v574, %v576
        %v578 = vsel %vm570, %v557, %v560
        %v579 = vsel %vm573, %v566, 920167782
        %v580 = vsel %vm572, %v563, %v579
        %v581 = vsel %vm571, %v578, %v580
        %v582 = vsel %vm570, %v560, %v563
        %v583 = vsel %vm573, %v569, 1326507024
        %v584 = vsel %vm572, %v566, %v583
        %v585 = vsel %vm571, %v582, %v584
        %v586 = vshll.u32 %v546, 8
        %v587 = vmul.u32.u64.compose %v586, %v585
        %v588 = vextract.low.u32 %v587
        %v589 = vextract.high.u32 %v587
        %v590 = vmul.u32.u64.compose %v586, %v581
        %v591 = vextract.low.u32 %v590
        %v592 = vextract.high.u32 %v590
        %v593 = vmul.u32 %v586, %v577
        %v594 = vadd.s32 %v589, %v591
        %vm595 = vc.u32 %v589, %v591
        %v596 = vadd.s32 %v592, 1
        %v597 = vsel %vm595, %v596, %v592
        %v598 = vadd.s32 %v593, %v597
        %v599 = vadd.s32 %v598, 536870912
        %v600 = vshrl.u32 %v599, 30
        %v601 = vshll.u32 %v600, 30
        %v602 = vsub.s32 %v598, %v601
        %vm603 = vcmp.lt.s32.totalorder %v602, 0
        %v604 = vsub.s32 0, %v602
        %v605 = vsel %vm603, %v604, %v602
        %v606 = vclz %v605
        %v607 = vsub.s32 %v606, 2
        %vm608 = vcmp.gt.s32.totalorder 0, %v607
        %v609 = vsel %vm608, 0, %v607
        %v610 = vsub.s32 32, %v609
        %v611 = vshll.u32 %v602, %v609
        %v612 = vshrl.u32 %v594, %v610
        %v613 = vor.u32 %v611, %v612
        %v614 = vsub.s32 4294967266, %v609
        %v615 = vadd.s32 %v614, 127
        %v616 = vshll.u32 %v615, 23
        %v617 = vor.u32 4788187, %v616
        %v618 = vand.u32 2147483647, %v617
        %v620 = vcvt.s32.f32 %v613
        %v621 = vmul.f32 %v620, %v618
        %v622 = vxor.u32 %v621, 2147483648
        %v623 = vsel %vm540, %v622, %v621
        %v624 = vsub.s32 4, %v600
        %v625 = vsel %vm540, %v624, %v600
        %v626 = vsel %vm539, %v522, %v623
        %v627 = vsel %vm539, 0, %v625
        %v628 = vcosq.f32.pop %v626
        %v629 = vsinq.f32.pop %v626
        %vm630 = vweird.f32 %v522
        %v631 = vadd.s32 %v627, 3
        %v632 = vand.u32 %v631, 3
        %vm633 = vcmp.lt.s32.totalorder %v632, 2
        %vm634 = vcmp.eq.s32.totalorder %v632, 0
        %v635 = vxor.u32 %v629, 2147483648
        %v636 = vsel %vm634, %v628, %v635
        %vm637 = vcmp.eq.s32.totalorder %v632, 2
        %v638 = vxor.u32 %v628, 2147483648
        %v639 = vsel %vm637, %v638, %v629
        %v640 = vsel %vm633, %v636, %v639
        %v641 = vsel %vm630, nan, %v640
        %v642 = vand.u32 2147483647, %v523
        %vm643 = vcmp.le.f32.partialorder %v642, 0.7853982
        %vm644 = vcmp.lt.s32.totalorder %v523, 0
        %v645 = vand.u32 %v523, 2139095040
        %v646 = vshrl.u32 %v645, 23
        %v647 = vsub.s32 %v646, 127
        %v648 = vand.u32 2147483647, %v523
        %v649 = vand.u32 %v648, 8388607
        %v650 = vor.u32 %v649, 8388608
        %v651 = vsub.s32 0, %v650
        %v652 = vadd.s32 %v647, 1
        %vm653 = vcmp.gt.s32.totalorder %v652, 0
        %v654 = vsel %vm653, %v652, 0
        %v655 = vshrl.u32 %v654, 5
        %v656 = vand.u32 %v654, 31
        %v657 = vsub.s32 32, %v656
        %v658 = vshrl.u32 683565275, %v657
        %v659 = vshll.u32 683565275, %v656
        %v660 = vshrl.u32 2475754826, %v657
        %v661 = vor.u32 %v659, %v660
        %v662 = vshll.u32 2475754826, %v656
        %v663 = vshrl.u32 2131351028, %v657
        %v664 = vor.u32 %v662, %v663
        %v665 = vshll.u32 2131351028, %v656
        %v666 = vshrl.u32 2102212464, %v657
        %v667 = vor.u32 %v665, %v666
        %v668 = vshll.u32 2102212464, %v656
        %v669 = vshrl.u32 920167782, %v657
        %v670 = vor.u32 %v668, %v669
        %v671 = vshll.u32 920167782, %v656
        %v672 = vshrl.u32 1326507024, %v657
        %v673 = vor.u32 %v671, %v672
        %vm674 = vcmp.lt.s32.totalorder %v655, 1
        %vm675 = vcmp.lt.s32.totalorder %v655, 2
        %vm676 = vcmp.lt.s32.totalorder %v655, 3
        %vm677 = vcmp.lt.s32.totalorder %v655, 4
        %v678 = vsel %vm674, %v658, %v661
        %v679 = vsel %vm677, %v667, 2102212464
        %v680 = vsel %vm676, %v664, %v679
        %v681 = vsel %vm675, %v678, %v680
        %v682 = vsel %vm674, %v661, %v664
        %v683 = vsel %vm677, %v670, 920167782
        %v684 = vsel %vm676, %v667, %v683
        %v685 = vsel %vm675, %v682, %v684
        %v686 = vsel %vm674, %v664, %v667
        %v687 = vsel %vm677, %v673, 1326507024
        %v688 = vsel %vm676, %v670, %v687
        %v689 = vsel %vm675, %v686, %v688
        %v690 = vshll.u32 %v650, 8
        %v691 = vmul.u32.u64.compose %v690, %v689
        %v692 = vextract.low.u32 %v691
        %v693 = vextract.high.u32 %v691
        %v694 = vmul.u32.u64.compose %v690, %v685
        %v695 = vextract.low.u32 %v694
        %v696 = vextract.high.u32 %v694
        %v697 = vmul.u32 %v690, %v681
        %v698 = vadd.s32 %v693, %v695
        %vm699 = vc.u32 %v693, %v695
        %v700 = vadd.s32 %v696, 1
        %v701 = vsel %vm699, %v700, %v696
        %v702 = vadd.s32 %v697, %v701
        %v703 = vadd.s32 %v702, 536870912
        %v704 = vshrl.u32 %v703, 30
        %v705 = vshll.u32 %v704, 30
        %v706 = vsub.s32 %v702, %v705
        %vm707 = vcmp.lt.s32.totalorder %v706, 0
        %v708 = vsub.s32 0, %v706
        %v709 = vsel %vm707, %v708, %v706
        %v710 = vclz %v709
        %v711 = vsub.s32 %v710, 2
        %vm712 = vcmp.gt.s32.totalorder 0, %v711
        %v713 = vsel %vm712, 0, %v711
        %v714 = vsub.s32 32, %v713
        %v715 = vshll.u32 %v706, %v713
        %v716 = vshrl.u32 %v698, %v714
        %v717 = vor.u32 %v715, %v716
        %v718 = vsub.s32 4294967266, %v713
        %v719 = vadd.s32 %v718, 127
        %v720 = vshll.u32 %v719, 23
        %v721 = vor.u32 4788187, %v720
        %v722 = vand.u32 2147483647, %v721
        %v724 = vcvt.s32.f32 %v717
        %v725 = vmul.f32 %v724, %v722
        %v726 = vxor.u32 %v725, 2147483648
        %v727 = vsel %vm644, %v726, %v725
        %v728 = vsub.s32 4, %v704
        %v729 = vsel %vm644, %v728, %v704
        %v730 = vsel %vm643, %v523, %v727
        %v731 = vsel %vm643, 0, %v729
        %v732 = vcosq.f32.pop %v730
        %v733 = vsinq.f32.pop %v730
        %vm734 = vweird.f32 %v523
        %v735 = vadd.s32 %v731, 3
        %v736 = vand.u32 %v735, 3
        %vm737 = vcmp.lt.s32.totalorder %v736, 2
        %vm738 = vcmp.eq.s32.totalorder %v736, 0
        %v739 = vxor.u32 %v733, 2147483648
        %v740 = vsel %vm738, %v732, %v739
        %vm741 = vcmp.eq.s32.totalorder %v736, 2
        %v742 = vxor.u32 %v732, 2147483648
        %v743 = vsel %vm741, %v742, %v733
        %v744 = vsel %vm737, %v740, %v743
        %v745 = vsel %vm734, nan, %v744
        %v746 = vand.u32 2147483647, %v524
        %vm747 = vcmp.le.f32.partialorder %v746, 0.7853982
        %vm748 = vcmp.lt.s32.totalorder %v524, 0
        %v749 = vand.u32 %v524, 2139095040
        %v750 = vshrl.u32 %v749, 23
        %v751 = vsub.s32 %v750, 127
        %v752 = vand.u32 2147483647, %v524
        %v753 = vand.u32 %v752, 8388607
        %v754 = vor.u32 %v753, 8388608
        %v755 = vsub.s32 0, %v754
        %v756 = vadd.s32 %v751, 1
        %vm757 = vcmp.gt.s32.totalorder %v756, 0
        %v758 = vsel %vm757, %v756, 0
        %v759 = vshrl.u32 %v758, 5
        %v760 = vand.u32 %v758, 31
        %v761 = vsub.s32 32, %v760
        %v762 = vshrl.u32 683565275, %v761
        %v763 = vshll.u32 683565275, %v760
        %v764 = vshrl.u32 2475754826, %v761
        %v765 = vor.u32 %v763, %v764
        %v766 = vshll.u32 2475754826, %v760
        %v767 = vshrl.u32 2131351028, %v761
        %v768 = vor.u32 %v766, %v767
        %v769 = vshll.u32 2131351028, %v760
        %v770 = vshrl.u32 2102212464, %v761
        %v771 = vor.u32 %v769, %v770
        %v772 = vshll.u32 2102212464, %v760
        %v773 = vshrl.u32 920167782, %v761
        %v774 = vor.u32 %v772, %v773
        %v775 = vshll.u32 920167782, %v760
        %v776 = vshrl.u32 1326507024, %v761
        %v777 = vor.u32 %v775, %v776
        %vm778 = vcmp.lt.s32.totalorder %v759, 1
        %vm779 = vcmp.lt.s32.totalorder %v759, 2
        %vm780 = vcmp.lt.s32.totalorder %v759, 3
        %vm781 = vcmp.lt.s32.totalorder %v759, 4
        %v782 = vsel %vm778, %v762, %v765
        %v783 = vsel %vm781, %v771, 2102212464
        %v784 = vsel %vm780, %v768, %v783
        %v785 = vsel %vm779, %v782, %v784
        %v786 = vsel %vm778, %v765, %v768
        %v787 = vsel %vm781, %v774, 920167782
        %v788 = vsel %vm780, %v771, %v787
        %v789 = vsel %vm779, %v786, %v788
        %v790 = vsel %vm778, %v768, %v771
        %v791 = vsel %vm781, %v777, 1326507024
        %v792 = vsel %vm780, %v774, %v791
        %v793 = vsel %vm779, %v790, %v792
        %v794 = vshll.u32 %v754, 8
        %v795 = vmul.u32.u64.compose %v794, %v793
        %v796 = vextract.low.u32 %v795
        %v797 = vextract.high.u32 %v795
        %v798 = vmul.u32.u64.compose %v794, %v789
        %v799 = vextract.low.u32 %v798
        %v800 = vextract.high.u32 %v798
        %v801 = vmul.u32 %v794, %v785
        %v802 = vadd.s32 %v797, %v799
        %vm803 = vc.u32 %v797, %v799
        %v804 = vadd.s32 %v800, 1
        %v805 = vsel %vm803, %v804, %v800
        %v806 = vadd.s32 %v801, %v805
        %v807 = vadd.s32 %v806, 536870912
        %v808 = vshrl.u32 %v807, 30
        %v809 = vshll.u32 %v808, 30
        %v810 = vsub.s32 %v806, %v809
        %vm811 = vcmp.lt.s32.totalorder %v810, 0
        %v812 = vsub.s32 0, %v810
        %v813 = vsel %vm811, %v812, %v810
        %v814 = vclz %v813
        %v815 = vsub.s32 %v814, 2
        %vm816 = vcmp.gt.s32.totalorder 0, %v815
        %v817 = vsel %vm816, 0, %v815
        %v818 = vsub.s32 32, %v817
        %v819 = vshll.u32 %v810, %v817
        %v820 = vshrl.u32 %v802, %v818
        %v821 = vor.u32 %v819, %v820
        %v822 = vsub.s32 4294967266, %v817
        %v823 = vadd.s32 %v822, 127
        %v824 = vshll.u32 %v823, 23
        %v825 = vor.u32 4788187, %v824
        %v826 = vand.u32 2147483647, %v825
        %v828 = vcvt.s32.f32 %v821
        %v829 = vmul.f32 %v828, %v826
        %v830 = vxor.u32 %v829, 2147483648
        %v831 = vsel %vm748, %v830, %v829
        %v832 = vsub.s32 4, %v808
        %v833 = vsel %vm748, %v832, %v808
        %v834 = vsel %vm747, %v524, %v831
        %v835 = vsel %vm747, 0, %v833
        %v836 = vcosq.f32.pop %v834
        %v837 = vsinq.f32.pop %v834
        %vm838 = vweird.f32 %v524
        %v839 = vadd.s32 %v835, 3
        %v840 = vand.u32 %v839, 3
        %vm841 = vcmp.lt.s32.totalorder %v840, 2
        %vm842 = vcmp.eq.s32.totalorder %v840, 0
        %v843 = vxor.u32 %v837, 2147483648
        %v844 = vsel %vm842, %v836, %v843
        %vm845 = vcmp.eq.s32.totalorder %v840, 2
        %v846 = vxor.u32 %v836, 2147483648
        %v847 = vsel %vm845, %v846, %v837
        %v848 = vsel %vm841, %v844, %v847
        %v849 = vsel %vm838, nan, %v848
        %v850 = vand.u32 2147483647, %v525
        %vm851 = vcmp.le.f32.partialorder %v850, 0.7853982
        %vm852 = vcmp.lt.s32.totalorder %v525, 0
        %v853 = vand.u32 %v525, 2139095040
        %v854 = vshrl.u32 %v853, 23
        %v855 = vsub.s32 %v854, 127
        %v856 = vand.u32 2147483647, %v525
        %v857 = vand.u32 %v856, 8388607
        %v858 = vor.u32 %v857, 8388608
        %v859 = vsub.s32 0, %v858
        %v860 = vadd.s32 %v855, 1
        %vm861 = vcmp.gt.s32.totalorder %v860, 0
        %v862 = vsel %vm861, %v860, 0
        %v863 = vshrl.u32 %v862, 5
        %v864 = vand.u32 %v862, 31
        %v865 = vsub.s32 32, %v864
        %v866 = vshrl.u32 683565275, %v865
        %v867 = vshll.u32 683565275, %v864
        %v868 = vshrl.u32 2475754826, %v865
        %v869 = vor.u32 %v867, %v868
        %v870 = vshll.u32 2475754826, %v864
        %v871 = vshrl.u32 2131351028, %v865
        %v872 = vor.u32 %v870, %v871
        %v873 = vshll.u32 2131351028, %v864
        %v874 = vshrl.u32 2102212464, %v865
        %v875 = vor.u32 %v873, %v874
        %v876 = vshll.u32 2102212464, %v864
        %v877 = vshrl.u32 920167782, %v865
        %v878 = vor.u32 %v876, %v877
        %v879 = vshll.u32 920167782, %v864
        %v880 = vshrl.u32 1326507024, %v865
        %v881 = vor.u32 %v879, %v880
        %vm882 = vcmp.lt.s32.totalorder %v863, 1
        %vm883 = vcmp.lt.s32.totalorder %v863, 2
        %vm884 = vcmp.lt.s32.totalorder %v863, 3
        %vm885 = vcmp.lt.s32.totalorder %v863, 4
        %v886 = vsel %vm882, %v866, %v869
        %v887 = vsel %vm885, %v875, 2102212464
        %v888 = vsel %vm884, %v872, %v887
        %v889 = vsel %vm883, %v886, %v888
        %v890 = vsel %vm882, %v869, %v872
        %v891 = vsel %vm885, %v878, 920167782
        %v892 = vsel %vm884, %v875, %v891
        %v893 = vsel %vm883, %v890, %v892
        %v894 = vsel %vm882, %v872, %v875
        %v895 = vsel %vm885, %v881, 1326507024
        %v896 = vsel %vm884, %v878, %v895
        %v897 = vsel %vm883, %v894, %v896
        %v898 = vshll.u32 %v858, 8
        %v899 = vmul.u32.u64.compose %v898, %v897
        %v900 = vextract.low.u32 %v899
        %v901 = vextract.high.u32 %v899
        %v902 = vmul.u32.u64.compose %v898, %v893
        %v903 = vextract.low.u32 %v902
        %v904 = vextract.high.u32 %v902
        %v905 = vmul.u32 %v898, %v889
        %v906 = vadd.s32 %v901, %v903
        %vm907 = vc.u32 %v901, %v903
        %v908 = vadd.s32 %v904, 1
        %v909 = vsel %vm907, %v908, %v904
        %v910 = vadd.s32 %v905, %v909
        %v911 = vadd.s32 %v910, 536870912
        %v912 = vshrl.u32 %v911, 30
        %v913 = vshll.u32 %v912, 30
        %v914 = vsub.s32 %v910, %v913
        %vm915 = vcmp.lt.s32.totalorder %v914, 0
        %v916 = vsub.s32 0, %v914
        %v917 = vsel %vm915, %v916, %v914
        %v918 = vclz %v917
        %v919 = vsub.s32 %v918, 2
        %vm920 = vcmp.gt.s32.totalorder 0, %v919
        %v921 = vsel %vm920, 0, %v919
        %v922 = vsub.s32 32, %v921
        %v923 = vshll.u32 %v914, %v921
        %v924 = vshrl.u32 %v906, %v922
        %v925 = vor.u32 %v923, %v924
        %v926 = vsub.s32 4294967266, %v921
        %v927 = vadd.s32 %v926, 127
        %v928 = vshll.u32 %v927, 23
        %v929 = vor.u32 4788187, %v928
        %v930 = vand.u32 2147483647, %v929
        %v932 = vcvt.s32.f32 %v925
        %v933 = vmul.f32 %v932, %v930
        %v934 = vxor.u32 %v933, 2147483648
        %v935 = vsel %vm852, %v934, %v933
        %v936 = vsub.s32 4, %v912
        %v937 = vsel %vm852, %v936, %v912
        %v938 = vsel %vm851, %v525, %v935
        %v939 = vsel %vm851, 0, %v937
        %v940 = vcosq.f32.pop %v938
        %v941 = vsinq.f32.pop %v938
        %vm942 = vweird.f32 %v525
        %v943 = vadd.s32 %v939, 3
        %v944 = vand.u32 %v943, 3
        %vm945 = vcmp.lt.s32.totalorder %v944, 2
        %vm946 = vcmp.eq.s32.totalorder %v944, 0
        %v947 = vxor.u32 %v941, 2147483648
        %v948 = vsel %vm946, %v940, %v947
        %vm949 = vcmp.eq.s32.totalorder %v944, 2
        %v950 = vxor.u32 %v940, 2147483648
        %v951 = vsel %vm949, %v950, %v941
        %v952 = vsel %vm945, %v948, %v951
        %v953 = vsel %vm942, nan, %v952
        %v954 = vand.u32 2147483647, %v526
        %vm955 = vcmp.le.f32.partialorder %v954, 0.7853982
        %vm956 = vcmp.lt.s32.totalorder %v526, 0
        %v957 = vand.u32 %v526, 2139095040
        %v958 = vshrl.u32 %v957, 23
        %v959 = vsub.s32 %v958, 127
        %v960 = vand.u32 2147483647, %v526
        %v961 = vand.u32 %v960, 8388607
        %v962 = vor.u32 %v961, 8388608
        %v963 = vsub.s32 0, %v962
        %v964 = vadd.s32 %v959, 1
        %vm965 = vcmp.gt.s32.totalorder %v964, 0
        %v966 = vsel %vm965, %v964, 0
        %v967 = vshrl.u32 %v966, 5
        %v968 = vand.u32 %v966, 31
        %v969 = vsub.s32 32, %v968
        %v970 = vshrl.u32 683565275, %v969
        %v971 = vshll.u32 683565275, %v968
        %v972 = vshrl.u32 2475754826, %v969
        %v973 = vor.u32 %v971, %v972
        %v974 = vshll.u32 2475754826, %v968
        %v975 = vshrl.u32 2131351028, %v969
        %v976 = vor.u32 %v974, %v975
        %v977 = vshll.u32 2131351028, %v968
        %v978 = vshrl.u32 2102212464, %v969
        %v979 = vor.u32 %v977, %v978
        %v980 = vshll.u32 2102212464, %v968
        %v981 = vshrl.u32 920167782, %v969
        %v982 = vor.u32 %v980, %v981
        %v983 = vshll.u32 920167782, %v968
        %v984 = vshrl.u32 1326507024, %v969
        %v985 = vor.u32 %v983, %v984
        %vm986 = vcmp.lt.s32.totalorder %v967, 1
        %vm987 = vcmp.lt.s32.totalorder %v967, 2
        %vm988 = vcmp.lt.s32.totalorder %v967, 3
        %vm989 = vcmp.lt.s32.totalorder %v967, 4
        %v990 = vsel %vm986, %v970, %v973
        %v991 = vsel %vm989, %v979, 2102212464
        %v992 = vsel %vm988, %v976, %v991
        %v993 = vsel %vm987, %v990, %v992
        %v994 = vsel %vm986, %v973, %v976
        %v995 = vsel %vm989, %v982, 920167782
        %v996 = vsel %vm988, %v979, %v995
        %v997 = vsel %vm987, %v994, %v996
        %v998 = vsel %vm986, %v976, %v979
        %v999 = vsel %vm989, %v985, 1326507024
        %v1000 = vsel %vm988, %v982, %v999
        %v1001 = vsel %vm987, %v998, %v1000
        %v1002 = vshll.u32 %v962, 8
        %v1003 = vmul.u32.u64.compose %v1002, %v1001
        %v1004 = vextract.low.u32 %v1003
        %v1005 = vextract.high.u32 %v1003
        %v1006 = vmul.u32.u64.compose %v1002, %v997
        %v1007 = vextract.low.u32 %v1006
        %v1008 = vextract.high.u32 %v1006
        %v1009 = vmul.u32 %v1002, %v993
        %v1010 = vadd.s32 %v1005, %v1007
        %vm1011 = vc.u32 %v1005, %v1007
        %v1012 = vadd.s32 %v1008, 1
        %v1013 = vsel %vm1011, %v1012, %v1008
        %v1014 = vadd.s32 %v1009, %v1013
        %v1015 = vadd.s32 %v1014, 536870912
        %v1016 = vshrl.u32 %v1015, 30
        %v1017 = vshll.u32 %v1016, 30
        %v1018 = vsub.s32 %v1014, %v1017
        %vm1019 = vcmp.lt.s32.totalorder %v1018, 0
        %v1020 = vsub.s32 0, %v1018
        %v1021 = vsel %vm1019, %v1020, %v1018
        %v1022 = vclz %v1021
        %v1023 = vsub.s32 %v1022, 2
        %vm1024 = vcmp.gt.s32.totalorder 0, %v1023
        %v1025 = vsel %vm1024, 0, %v1023
        %v1026 = vsub.s32 32, %v1025
        %v1027 = vshll.u32 %v1018, %v1025
        %v1028 = vshrl.u32 %v1010, %v1026
        %v1029 = vor.u32 %v1027, %v1028
        %v1030 = vsub.s32 4294967266, %v1025
        %v1031 = vadd.s32 %v1030, 127
        %v1032 = vshll.u32 %v1031, 23
        %v1033 = vor.u32 4788187, %v1032
        %v1034 = vand.u32 2147483647, %v1033
        %v1036 = vcvt.s32.f32 %v1029
        %v1037 = vmul.f32 %v1036, %v1034
        %v1038 = vxor.u32 %v1037, 2147483648
        %v1039 = vsel %vm956, %v1038, %v1037
        %v1040 = vsub.s32 4, %v1016
        %v1041 = vsel %vm956, %v1040, %v1016
        %v1042 = vsel %vm955, %v526, %v1039
        %v1043 = vsel %vm955, 0, %v1041
        %v1044 = vcosq.f32.pop %v1042
        %v1045 = vsinq.f32.pop %v1042
        %vm1046 = vweird.f32 %v526
        %v1047 = vadd.s32 %v1043, 3
        %v1048 = vand.u32 %v1047, 3
        %vm1049 = vcmp.lt.s32.totalorder %v1048, 2
        %vm1050 = vcmp.eq.s32.totalorder %v1048, 0
        %v1051 = vxor.u32 %v1045, 2147483648
        %v1052 = vsel %vm1050, %v1044, %v1051
        %vm1053 = vcmp.eq.s32.totalorder %v1048, 2
        %v1054 = vxor.u32 %v1044, 2147483648
        %v1055 = vsel %vm1053, %v1054, %v1045
        %v1056 = vsel %vm1049, %v1052, %v1055
        %v1057 = vsel %vm1046, nan, %v1056
        %v1058 = vand.u32 2147483647, %v527
        %vm1059 = vcmp.le.f32.partialorder %v1058, 0.7853982
        %vm1060 = vcmp.lt.s32.totalorder %v527, 0
        %v1061 = vand.u32 %v527, 2139095040
        %v1062 = vshrl.u32 %v1061, 23
        %v1063 = vsub.s32 %v1062, 127
        %v1064 = vand.u32 2147483647, %v527
        %v1065 = vand.u32 %v1064, 8388607
        %v1066 = vor.u32 %v1065, 8388608
        %v1067 = vsub.s32 0, %v1066
        %v1068 = vadd.s32 %v1063, 1
        %vm1069 = vcmp.gt.s32.totalorder %v1068, 0
        %v1070 = vsel %vm1069, %v1068, 0
        %v1071 = vshrl.u32 %v1070, 5
        %v1072 = vand.u32 %v1070, 31
        %v1073 = vsub.s32 32, %v1072
        %v1074 = vshrl.u32 683565275, %v1073
        %v1075 = vshll.u32 683565275, %v1072
        %v1076 = vshrl.u32 2475754826, %v1073
        %v1077 = vor.u32 %v1075, %v1076
        %v1078 = vshll.u32 2475754826, %v1072
        %v1079 = vshrl.u32 2131351028, %v1073
        %v1080 = vor.u32 %v1078, %v1079
        %v1081 = vshll.u32 2131351028, %v1072
        %v1082 = vshrl.u32 2102212464, %v1073
        %v1083 = vor.u32 %v1081, %v1082
        %v1084 = vshll.u32 2102212464, %v1072
        %v1085 = vshrl.u32 920167782, %v1073
        %v1086 = vor.u32 %v1084, %v1085
        %v1087 = vshll.u32 920167782, %v1072
        %v1088 = vshrl.u32 1326507024, %v1073
        %v1089 = vor.u32 %v1087, %v1088
        %vm1090 = vcmp.lt.s32.totalorder %v1071, 1
        %vm1091 = vcmp.lt.s32.totalorder %v1071, 2
        %vm1092 = vcmp.lt.s32.totalorder %v1071, 3
        %vm1093 = vcmp.lt.s32.totalorder %v1071, 4
        %v1094 = vsel %vm1090, %v1074, %v1077
        %v1095 = vsel %vm1093, %v1083, 2102212464
        %v1096 = vsel %vm1092, %v1080, %v1095
        %v1097 = vsel %vm1091, %v1094, %v1096
        %v1098 = vsel %vm1090, %v1077, %v1080
        %v1099 = vsel %vm1093, %v1086, 920167782
        %v1100 = vsel %vm1092, %v1083, %v1099
        %v1101 = vsel %vm1091, %v1098, %v1100
        %v1102 = vsel %vm1090, %v1080, %v1083
        %v1103 = vsel %vm1093, %v1089, 1326507024
        %v1104 = vsel %vm1092, %v1086, %v1103
        %v1105 = vsel %vm1091, %v1102, %v1104
        %v1106 = vshll.u32 %v1066, 8
        %v1107 = vmul.u32.u64.compose %v1106, %v1105
        %v1108 = vextract.low.u32 %v1107
        %v1109 = vextract.high.u32 %v1107
        %v1110 = vmul.u32.u64.compose %v1106, %v1101
        %v1111 = vextract.low.u32 %v1110
        %v1112 = vextract.high.u32 %v1110
        %v1113 = vmul.u32 %v1106, %v1097
        %v1114 = vadd.s32 %v1109, %v1111
        %vm1115 = vc.u32 %v1109, %v1111
        %v1116 = vadd.s32 %v1112, 1
        %v1117 = vsel %vm1115, %v1116, %v1112
        %v1118 = vadd.s32 %v1113, %v1117
        %v1119 = vadd.s32 %v1118, 536870912
        %v1120 = vshrl.u32 %v1119, 30
        %v1121 = vshll.u32 %v1120, 30
        %v1122 = vsub.s32 %v1118, %v1121
        %vm1123 = vcmp.lt.s32.totalorder %v1122, 0
        %v1124 = vsub.s32 0, %v1122
        %v1125 = vsel %vm1123, %v1124, %v1122
        %v1126 = vclz %v1125
        %v1127 = vsub.s32 %v1126, 2
        %vm1128 = vcmp.gt.s32.totalorder 0, %v1127
        %v1129 = vsel %vm1128, 0, %v1127
        %v1130 = vsub.s32 32, %v1129
        %v1131 = vshll.u32 %v1122, %v1129
        %v1132 = vshrl.u32 %v1114, %v1130
        %v1133 = vor.u32 %v1131, %v1132
        %v1134 = vsub.s32 4294967266, %v1129
        %v1135 = vadd.s32 %v1134, 127
        %v1136 = vshll.u32 %v1135, 23
        %v1137 = vor.u32 4788187, %v1136
        %v1138 = vand.u32 2147483647, %v1137
        %v1140 = vcvt.s32.f32 %v1133
        %v1141 = vmul.f32 %v1140, %v1138
        %v1142 = vxor.u32 %v1141, 2147483648
        %v1143 = vsel %vm1060, %v1142, %v1141
        %v1144 = vsub.s32 4, %v1120
        %v1145 = vsel %vm1060, %v1144, %v1120
        %v1146 = vsel %vm1059, %v527, %v1143
        %v1147 = vsel %vm1059, 0, %v1145
        %v1148 = vcosq.f32.pop %v1146
        %v1149 = vsinq.f32.pop %v1146
        %vm1150 = vweird.f32 %v527
        %v1151 = vadd.s32 %v1147, 3
        %v1152 = vand.u32 %v1151, 3
        %vm1153 = vcmp.lt.s32.totalorder %v1152, 2
        %vm1154 = vcmp.eq.s32.totalorder %v1152, 0
        %v1155 = vxor.u32 %v1149, 2147483648
        %v1156 = vsel %vm1154, %v1148, %v1155
        %vm1157 = vcmp.eq.s32.totalorder %v1152, 2
        %v1158 = vxor.u32 %v1148, 2147483648
        %v1159 = vsel %vm1157, %v1158, %v1149
        %v1160 = vsel %vm1153, %v1156, %v1159
        %v1161 = vsel %vm1150, nan, %v1160
        %v1162 = vand.u32 2147483647, %v528
        %vm1163 = vcmp.le.f32.partialorder %v1162, 0.7853982
        %vm1164 = vcmp.lt.s32.totalorder %v528, 0
        %v1165 = vand.u32 %v528, 2139095040
        %v1166 = vshrl.u32 %v1165, 23
        %v1167 = vsub.s32 %v1166, 127
        %v1168 = vand.u32 2147483647, %v528
        %v1169 = vand.u32 %v1168, 8388607
        %v1170 = vor.u32 %v1169, 8388608
        %v1171 = vsub.s32 0, %v1170
        %v1172 = vadd.s32 %v1167, 1
        %vm1173 = vcmp.gt.s32.totalorder %v1172, 0
        %v1174 = vsel %vm1173, %v1172, 0
        %v1175 = vshrl.u32 %v1174, 5
        %v1176 = vand.u32 %v1174, 31
        %v1177 = vsub.s32 32, %v1176
        %v1178 = vshrl.u32 683565275, %v1177
        %v1179 = vshll.u32 683565275, %v1176
        %v1180 = vshrl.u32 2475754826, %v1177
        %v1181 = vor.u32 %v1179, %v1180
        %v1182 = vshll.u32 2475754826, %v1176
        %v1183 = vshrl.u32 2131351028, %v1177
        %v1184 = vor.u32 %v1182, %v1183
        %v1185 = vshll.u32 2131351028, %v1176
        %v1186 = vshrl.u32 2102212464, %v1177
        %v1187 = vor.u32 %v1185, %v1186
        %v1188 = vshll.u32 2102212464, %v1176
        %v1189 = vshrl.u32 920167782, %v1177
        %v1190 = vor.u32 %v1188, %v1189
        %v1191 = vshll.u32 920167782, %v1176
        %v1192 = vshrl.u32 1326507024, %v1177
        %v1193 = vor.u32 %v1191, %v1192
        %vm1194 = vcmp.lt.s32.totalorder %v1175, 1
        %vm1195 = vcmp.lt.s32.totalorder %v1175, 2
        %vm1196 = vcmp.lt.s32.totalorder %v1175, 3
        %vm1197 = vcmp.lt.s32.totalorder %v1175, 4
        %v1198 = vsel %vm1194, %v1178, %v1181
        %v1199 = vsel %vm1197, %v1187, 2102212464
        %v1200 = vsel %vm1196, %v1184, %v1199
        %v1201 = vsel %vm1195, %v1198, %v1200
        %v1202 = vsel %vm1194, %v1181, %v1184
        %v1203 = vsel %vm1197, %v1190, 920167782
        %v1204 = vsel %vm1196, %v1187, %v1203
        %v1205 = vsel %vm1195, %v1202, %v1204
        %v1206 = vsel %vm1194, %v1184, %v1187
        %v1207 = vsel %vm1197, %v1193, 1326507024
        %v1208 = vsel %vm1196, %v1190, %v1207
        %v1209 = vsel %vm1195, %v1206, %v1208
        %v1210 = vshll.u32 %v1170, 8
        %v1211 = vmul.u32.u64.compose %v1210, %v1209
        %v1212 = vextract.low.u32 %v1211
        %v1213 = vextract.high.u32 %v1211
        %v1214 = vmul.u32.u64.compose %v1210, %v1205
        %v1215 = vextract.low.u32 %v1214
        %v1216 = vextract.high.u32 %v1214
        %v1217 = vmul.u32 %v1210, %v1201
        %v1218 = vadd.s32 %v1213, %v1215
        %vm1219 = vc.u32 %v1213, %v1215
        %v1220 = vadd.s32 %v1216, 1
        %v1221 = vsel %vm1219, %v1220, %v1216
        %v1222 = vadd.s32 %v1217, %v1221
        %v1223 = vadd.s32 %v1222, 536870912
        %v1224 = vshrl.u32 %v1223, 30
        %v1225 = vshll.u32 %v1224, 30
        %v1226 = vsub.s32 %v1222, %v1225
        %vm1227 = vcmp.lt.s32.totalorder %v1226, 0
        %v1228 = vsub.s32 0, %v1226
        %v1229 = vsel %vm1227, %v1228, %v1226
        %v1230 = vclz %v1229
        %v1231 = vsub.s32 %v1230, 2
        %vm1232 = vcmp.gt.s32.totalorder 0, %v1231
        %v1233 = vsel %vm1232, 0, %v1231
        %v1234 = vsub.s32 32, %v1233
        %v1235 = vshll.u32 %v1226, %v1233
        %v1236 = vshrl.u32 %v1218, %v1234
        %v1237 = vor.u32 %v1235, %v1236
        %v1238 = vsub.s32 4294967266, %v1233
        %v1239 = vadd.s32 %v1238, 127
        %v1240 = vshll.u32 %v1239, 23
        %v1241 = vor.u32 4788187, %v1240
        %v1242 = vand.u32 2147483647, %v1241
        %v1244 = vcvt.s32.f32 %v1237
        %v1245 = vmul.f32 %v1244, %v1242
        %v1246 = vxor.u32 %v1245, 2147483648
        %v1247 = vsel %vm1164, %v1246, %v1245
        %v1248 = vsub.s32 4, %v1224
        %v1249 = vsel %vm1164, %v1248, %v1224
        %v1250 = vsel %vm1163, %v528, %v1247
        %v1251 = vsel %vm1163, 0, %v1249
        %v1252 = vcosq.f32.pop %v1250
        %v1253 = vsinq.f32.pop %v1250
        %vm1254 = vweird.f32 %v528
        %v1255 = vadd.s32 %v1251, 3
        %v1256 = vand.u32 %v1255, 3
        %vm1257 = vcmp.lt.s32.totalorder %v1256, 2
        %vm1258 = vcmp.eq.s32.totalorder %v1256, 0
        %v1259 = vxor.u32 %v1253, 2147483648
        %v1260 = vsel %vm1258, %v1252, %v1259
        %vm1261 = vcmp.eq.s32.totalorder %v1256, 2
        %v1262 = vxor.u32 %v1252, 2147483648
        %v1263 = vsel %vm1261, %v1262, %v1253
        %v1264 = vsel %vm1257, %v1260, %v1263
        %v1265 = vsel %vm1254, nan, %v1264
        %v1266 = vand.u32 2147483647, %v529
        %vm1267 = vcmp.le.f32.partialorder %v1266, 0.7853982
        %vm1268 = vcmp.lt.s32.totalorder %v529, 0
        %v1269 = vand.u32 %v529, 2139095040
        %v1270 = vshrl.u32 %v1269, 23
        %v1271 = vsub.s32 %v1270, 127
        %v1272 = vand.u32 2147483647, %v529
        %v1273 = vand.u32 %v1272, 8388607
        %v1274 = vor.u32 %v1273, 8388608
        %v1275 = vsub.s32 0, %v1274
        %v1276 = vadd.s32 %v1271, 1
        %vm1277 = vcmp.gt.s32.totalorder %v1276, 0
        %v1278 = vsel %vm1277, %v1276, 0
        %v1279 = vshrl.u32 %v1278, 5
        %v1280 = vand.u32 %v1278, 31
        %v1281 = vsub.s32 32, %v1280
        %v1282 = vshrl.u32 683565275, %v1281
        %v1283 = vshll.u32 683565275, %v1280
        %v1284 = vshrl.u32 2475754826, %v1281
        %v1285 = vor.u32 %v1283, %v1284
        %v1286 = vshll.u32 2475754826, %v1280
        %v1287 = vshrl.u32 2131351028, %v1281
        %v1288 = vor.u32 %v1286, %v1287
        %v1289 = vshll.u32 2131351028, %v1280
        %v1290 = vshrl.u32 2102212464, %v1281
        %v1291 = vor.u32 %v1289, %v1290
        %v1292 = vshll.u32 2102212464, %v1280
        %v1293 = vshrl.u32 920167782, %v1281
        %v1294 = vor.u32 %v1292, %v1293
        %v1295 = vshll.u32 920167782, %v1280
        %v1296 = vshrl.u32 1326507024, %v1281
        %v1297 = vor.u32 %v1295, %v1296
        %vm1298 = vcmp.lt.s32.totalorder %v1279, 1
        %vm1299 = vcmp.lt.s32.totalorder %v1279, 2
        %vm1300 = vcmp.lt.s32.totalorder %v1279, 3
        %vm1301 = vcmp.lt.s32.totalorder %v1279, 4
        %v1302 = vsel %vm1298, %v1282, %v1285
        %v1303 = vsel %vm1301, %v1291, 2102212464
        %v1304 = vsel %vm1300, %v1288, %v1303
        %v1305 = vsel %vm1299, %v1302, %v1304
        %v1306 = vsel %vm1298, %v1285, %v1288
        %v1307 = vsel %vm1301, %v1294, 920167782
        %v1308 = vsel %vm1300, %v1291, %v1307
        %v1309 = vsel %vm1299, %v1306, %v1308
        %v1310 = vsel %vm1298, %v1288, %v1291
        %v1311 = vsel %vm1301, %v1297, 1326507024
        %v1312 = vsel %vm1300, %v1294, %v1311
        %v1313 = vsel %vm1299, %v1310, %v1312
        %v1314 = vshll.u32 %v1274, 8
        %v1315 = vmul.u32.u64.compose %v1314, %v1313
        %v1316 = vextract.low.u32 %v1315
        %v1317 = vextract.high.u32 %v1315
        %v1318 = vmul.u32.u64.compose %v1314, %v1309
        %v1319 = vextract.low.u32 %v1318
        %v1320 = vextract.high.u32 %v1318
        %v1321 = vmul.u32 %v1314, %v1305
        %v1322 = vadd.s32 %v1317, %v1319
        %vm1323 = vc.u32 %v1317, %v1319
        %v1324 = vadd.s32 %v1320, 1
        %v1325 = vsel %vm1323, %v1324, %v1320
        %v1326 = vadd.s32 %v1321, %v1325
        %v1327 = vadd.s32 %v1326, 536870912
        %v1328 = vshrl.u32 %v1327, 30
        %v1329 = vshll.u32 %v1328, 30
        %v1330 = vsub.s32 %v1326, %v1329
        %vm1331 = vcmp.lt.s32.totalorder %v1330, 0
        %v1332 = vsub.s32 0, %v1330
        %v1333 = vsel %vm1331, %v1332, %v1330
        %v1334 = vclz %v1333
        %v1335 = vsub.s32 %v1334, 2
        %vm1336 = vcmp.gt.s32.totalorder 0, %v1335
        %v1337 = vsel %vm1336, 0, %v1335
        %v1338 = vsub.s32 32, %v1337
        %v1339 = vshll.u32 %v1330, %v1337
        %v1340 = vshrl.u32 %v1322, %v1338
        %v1341 = vor.u32 %v1339, %v1340
        %v1342 = vsub.s32 4294967266, %v1337
        %v1343 = vadd.s32 %v1342, 127
        %v1344 = vshll.u32 %v1343, 23
        %v1345 = vor.u32 4788187, %v1344
        %v1346 = vand.u32 2147483647, %v1345
        %v1348 = vcvt.s32.f32 %v1341
        %v1349 = vmul.f32 %v1348, %v1346
        %v1350 = vxor.u32 %v1349, 2147483648
        %v1351 = vsel %vm1268, %v1350, %v1349
        %v1352 = vsub.s32 4, %v1328
        %v1353 = vsel %vm1268, %v1352, %v1328
        %v1354 = vsel %vm1267, %v529, %v1351
        %v1355 = vsel %vm1267, 0, %v1353
        %v1356 = vcosq.f32.pop %v1354
        %v1357 = vsinq.f32.pop %v1354
        %vm1358 = vweird.f32 %v529
        %v1359 = vadd.s32 %v1355, 3
        %v1360 = vand.u32 %v1359, 3
        %vm1361 = vcmp.lt.s32.totalorder %v1360, 2
        %vm1362 = vcmp.eq.s32.totalorder %v1360, 0
        %v1363 = vxor.u32 %v1357, 2147483648
        %v1364 = vsel %vm1362, %v1356, %v1363
        %vm1365 = vcmp.eq.s32.totalorder %v1360, 2
        %v1366 = vxor.u32 %v1356, 2147483648
        %v1367 = vsel %vm1365, %v1366, %v1357
        %v1368 = vsel %vm1361, %v1364, %v1367
        %v1369 = vsel %vm1358, nan, %v1368
        %v1370 = vand.u32 2147483647, %v530
        %vm1371 = vcmp.le.f32.partialorder %v1370, 0.7853982
        %vm1372 = vcmp.lt.s32.totalorder %v530, 0
        %v1373 = vand.u32 %v530, 2139095040
        %v1374 = vshrl.u32 %v1373, 23
        %v1375 = vsub.s32 %v1374, 127
        %v1376 = vand.u32 2147483647, %v530
        %v1377 = vand.u32 %v1376, 8388607
        %v1378 = vor.u32 %v1377, 8388608
        %v1379 = vsub.s32 0, %v1378
        %v1380 = vadd.s32 %v1375, 1
        %vm1381 = vcmp.gt.s32.totalorder %v1380, 0
        %v1382 = vsel %vm1381, %v1380, 0
        %v1383 = vshrl.u32 %v1382, 5
        %v1384 = vand.u32 %v1382, 31
        %v1385 = vsub.s32 32, %v1384
        %v1386 = vshrl.u32 683565275, %v1385
        %v1387 = vshll.u32 683565275, %v1384
        %v1388 = vshrl.u32 2475754826, %v1385
        %v1389 = vor.u32 %v1387, %v1388
        %v1390 = vshll.u32 2475754826, %v1384
        %v1391 = vshrl.u32 2131351028, %v1385
        %v1392 = vor.u32 %v1390, %v1391
        %v1393 = vshll.u32 2131351028, %v1384
        %v1394 = vshrl.u32 2102212464, %v1385
        %v1395 = vor.u32 %v1393, %v1394
        %v1396 = vshll.u32 2102212464, %v1384
        %v1397 = vshrl.u32 920167782, %v1385
        %v1398 = vor.u32 %v1396, %v1397
        %v1399 = vshll.u32 920167782, %v1384
        %v1400 = vshrl.u32 1326507024, %v1385
        %v1401 = vor.u32 %v1399, %v1400
        %vm1402 = vcmp.lt.s32.totalorder %v1383, 1
        %vm1403 = vcmp.lt.s32.totalorder %v1383, 2
        %vm1404 = vcmp.lt.s32.totalorder %v1383, 3
        %vm1405 = vcmp.lt.s32.totalorder %v1383, 4
        %v1406 = vsel %vm1402, %v1386, %v1389
        %v1407 = vsel %vm1405, %v1395, 2102212464
        %v1408 = vsel %vm1404, %v1392, %v1407
        %v1409 = vsel %vm1403, %v1406, %v1408
        %v1410 = vsel %vm1402, %v1389, %v1392
        %v1411 = vsel %vm1405, %v1398, 920167782
        %v1412 = vsel %vm1404, %v1395, %v1411
        %v1413 = vsel %vm1403, %v1410, %v1412
        %v1414 = vsel %vm1402, %v1392, %v1395
        %v1415 = vsel %vm1405, %v1401, 1326507024
        %v1416 = vsel %vm1404, %v1398, %v1415
        %v1417 = vsel %vm1403, %v1414, %v1416
        %v1418 = vshll.u32 %v1378, 8
        %v1419 = vmul.u32.u64.compose %v1418, %v1417
        %v1420 = vextract.low.u32 %v1419
        %v1421 = vextract.high.u32 %v1419
        %v1422 = vmul.u32.u64.compose %v1418, %v1413
        %v1423 = vextract.low.u32 %v1422
        %v1424 = vextract.high.u32 %v1422
        %v1425 = vmul.u32 %v1418, %v1409
        %v1426 = vadd.s32 %v1421, %v1423
        %vm1427 = vc.u32 %v1421, %v1423
        %v1428 = vadd.s32 %v1424, 1
        %v1429 = vsel %vm1427, %v1428, %v1424
        %v1430 = vadd.s32 %v1425, %v1429
        %v1431 = vadd.s32 %v1430, 536870912
        %v1432 = vshrl.u32 %v1431, 30
        %v1433 = vshll.u32 %v1432, 30
        %v1434 = vsub.s32 %v1430, %v1433
        %vm1435 = vcmp.lt.s32.totalorder %v1434, 0
        %v1436 = vsub.s32 0, %v1434
        %v1437 = vsel %vm1435, %v1436, %v1434
        %v1438 = vclz %v1437
        %v1439 = vsub.s32 %v1438, 2
        %vm1440 = vcmp.gt.s32.totalorder 0, %v1439
        %v1441 = vsel %vm1440, 0, %v1439
        %v1442 = vsub.s32 32, %v1441
        %v1443 = vshll.u32 %v1434, %v1441
        %v1444 = vshrl.u32 %v1426, %v1442
        %v1445 = vor.u32 %v1443, %v1444
        %v1446 = vsub.s32 4294967266, %v1441
        %v1447 = vadd.s32 %v1446, 127
        %v1448 = vshll.u32 %v1447, 23
        %v1449 = vor.u32 4788187, %v1448
        %v1450 = vand.u32 2147483647, %v1449
        %v1452 = vcvt.s32.f32 %v1445
        %v1453 = vmul.f32 %v1452, %v1450
        %v1454 = vxor.u32 %v1453, 2147483648
        %v1455 = vsel %vm1372, %v1454, %v1453
        %v1456 = vsub.s32 4, %v1432
        %v1457 = vsel %vm1372, %v1456, %v1432
        %v1458 = vsel %vm1371, %v530, %v1455
        %v1459 = vsel %vm1371, 0, %v1457
        %v1460 = vcosq.f32.pop %v1458
        %v1461 = vsinq.f32.pop %v1458
        %vm1462 = vweird.f32 %v530
        %v1463 = vadd.s32 %v1459, 3
        %v1464 = vand.u32 %v1463, 3
        %vm1465 = vcmp.lt.s32.totalorder %v1464, 2
        %vm1466 = vcmp.eq.s32.totalorder %v1464, 0
        %v1467 = vxor.u32 %v1461, 2147483648
        %v1468 = vsel %vm1466, %v1460, %v1467
        %vm1469 = vcmp.eq.s32.totalorder %v1464, 2
        %v1470 = vxor.u32 %v1460, 2147483648
        %v1471 = vsel %vm1469, %v1470, %v1461
        %v1472 = vsel %vm1465, %v1468, %v1471
        %v1473 = vsel %vm1462, nan, %v1472
        %v1474 = vand.u32 2147483647, %v531
        %vm1475 = vcmp.le.f32.partialorder %v1474, 0.7853982
        %vm1476 = vcmp.lt.s32.totalorder %v531, 0
        %v1477 = vand.u32 %v531, 2139095040
        %v1478 = vshrl.u32 %v1477, 23
        %v1479 = vsub.s32 %v1478, 127
        %v1480 = vand.u32 2147483647, %v531
        %v1481 = vand.u32 %v1480, 8388607
        %v1482 = vor.u32 %v1481, 8388608
        %v1483 = vsub.s32 0, %v1482
        %v1484 = vadd.s32 %v1479, 1
        %vm1485 = vcmp.gt.s32.totalorder %v1484, 0
        %v1486 = vsel %vm1485, %v1484, 0
        %v1487 = vshrl.u32 %v1486, 5
        %v1488 = vand.u32 %v1486, 31
        %v1489 = vsub.s32 32, %v1488
        %v1490 = vshrl.u32 683565275, %v1489
        %v1491 = vshll.u32 683565275, %v1488
        %v1492 = vshrl.u32 2475754826, %v1489
        %v1493 = vor.u32 %v1491, %v1492
        %v1494 = vshll.u32 2475754826, %v1488
        %v1495 = vshrl.u32 2131351028, %v1489
        %v1496 = vor.u32 %v1494, %v1495
        %v1497 = vshll.u32 2131351028, %v1488
        %v1498 = vshrl.u32 2102212464, %v1489
        %v1499 = vor.u32 %v1497, %v1498
        %v1500 = vshll.u32 2102212464, %v1488
        %v1501 = vshrl.u32 920167782, %v1489
        %v1502 = vor.u32 %v1500, %v1501
        %v1503 = vshll.u32 920167782, %v1488
        %v1504 = vshrl.u32 1326507024, %v1489
        %v1505 = vor.u32 %v1503, %v1504
        %vm1506 = vcmp.lt.s32.totalorder %v1487, 1
        %vm1507 = vcmp.lt.s32.totalorder %v1487, 2
        %vm1508 = vcmp.lt.s32.totalorder %v1487, 3
        %vm1509 = vcmp.lt.s32.totalorder %v1487, 4
        %v1510 = vsel %vm1506, %v1490, %v1493
        %v1511 = vsel %vm1509, %v1499, 2102212464
        %v1512 = vsel %vm1508, %v1496, %v1511
        %v1513 = vsel %vm1507, %v1510, %v1512
        %v1514 = vsel %vm1506, %v1493, %v1496
        %v1515 = vsel %vm1509, %v1502, 920167782
        %v1516 = vsel %vm1508, %v1499, %v1515
        %v1517 = vsel %vm1507, %v1514, %v1516
        %v1518 = vsel %vm1506, %v1496, %v1499
        %v1519 = vsel %vm1509, %v1505, 1326507024
        %v1520 = vsel %vm1508, %v1502, %v1519
        %v1521 = vsel %vm1507, %v1518, %v1520
        %v1522 = vshll.u32 %v1482, 8
        %v1523 = vmul.u32.u64.compose %v1522, %v1521
        %v1524 = vextract.low.u32 %v1523
        %v1525 = vextract.high.u32 %v1523
        %v1526 = vmul.u32.u64.compose %v1522, %v1517
        %v1527 = vextract.low.u32 %v1526
        %v1528 = vextract.high.u32 %v1526
        %v1529 = vmul.u32 %v1522, %v1513
        %v1530 = vadd.s32 %v1525, %v1527
        %vm1531 = vc.u32 %v1525, %v1527
        %v1532 = vadd.s32 %v1528, 1
        %v1533 = vsel %vm1531, %v1532, %v1528
        %v1534 = vadd.s32 %v1529, %v1533
        %v1535 = vadd.s32 %v1534, 536870912
        %v1536 = vshrl.u32 %v1535, 30
        %v1537 = vshll.u32 %v1536, 30
        %v1538 = vsub.s32 %v1534, %v1537
        %vm1539 = vcmp.lt.s32.totalorder %v1538, 0
        %v1540 = vsub.s32 0, %v1538
        %v1541 = vsel %vm1539, %v1540, %v1538
        %v1542 = vclz %v1541
        %v1543 = vsub.s32 %v1542, 2
        %vm1544 = vcmp.gt.s32.totalorder 0, %v1543
        %v1545 = vsel %vm1544, 0, %v1543
        %v1546 = vsub.s32 32, %v1545
        %v1547 = vshll.u32 %v1538, %v1545
        %v1548 = vshrl.u32 %v1530, %v1546
        %v1549 = vor.u32 %v1547, %v1548
        %v1550 = vsub.s32 4294967266, %v1545
        %v1551 = vadd.s32 %v1550, 127
        %v1552 = vshll.u32 %v1551, 23
        %v1553 = vor.u32 4788187, %v1552
        %v1554 = vand.u32 2147483647, %v1553
        %v1556 = vcvt.s32.f32 %v1549
        %v1557 = vmul.f32 %v1556, %v1554
        %v1558 = vxor.u32 %v1557, 2147483648
        %v1559 = vsel %vm1476, %v1558, %v1557
        %v1560 = vsub.s32 4, %v1536
        %v1561 = vsel %vm1476, %v1560, %v1536
        %v1562 = vsel %vm1475, %v531, %v1559
        %v1563 = vsel %vm1475, 0, %v1561
        %v1564 = vcosq.f32.pop %v1562
        %v1565 = vsinq.f32.pop %v1562
        %vm1566 = vweird.f32 %v531
        %v1567 = vadd.s32 %v1563, 3
        %v1568 = vand.u32 %v1567, 3
        %vm1569 = vcmp.lt.s32.totalorder %v1568, 2
        %vm1570 = vcmp.eq.s32.totalorder %v1568, 0
        %v1571 = vxor.u32 %v1565, 2147483648
        %v1572 = vsel %vm1570, %v1564, %v1571
        %vm1573 = vcmp.eq.s32.totalorder %v1568, 2
        %v1574 = vxor.u32 %v1564, 2147483648
        %v1575 = vsel %vm1573, %v1574, %v1565
        %v1576 = vsel %vm1569, %v1572, %v1575
        %v1577 = vsel %vm1566, nan, %v1576
        %v1578 = vand.u32 2147483647, %v532
        %vm1579 = vcmp.le.f32.partialorder %v1578, 0.7853982
        %vm1580 = vcmp.lt.s32.totalorder %v532, 0
        %v1581 = vand.u32 %v532, 2139095040
        %v1582 = vshrl.u32 %v1581, 23
        %v1583 = vsub.s32 %v1582, 127
        %v1584 = vand.u32 2147483647, %v532
        %v1585 = vand.u32 %v1584, 8388607
        %v1586 = vor.u32 %v1585, 8388608
        %v1587 = vsub.s32 0, %v1586
        %v1588 = vadd.s32 %v1583, 1
        %vm1589 = vcmp.gt.s32.totalorder %v1588, 0
        %v1590 = vsel %vm1589, %v1588, 0
        %v1591 = vshrl.u32 %v1590, 5
        %v1592 = vand.u32 %v1590, 31
        %v1593 = vsub.s32 32, %v1592
        %v1594 = vshrl.u32 683565275, %v1593
        %v1595 = vshll.u32 683565275, %v1592
        %v1596 = vshrl.u32 2475754826, %v1593
        %v1597 = vor.u32 %v1595, %v1596
        %v1598 = vshll.u32 2475754826, %v1592
        %v1599 = vshrl.u32 2131351028, %v1593
        %v1600 = vor.u32 %v1598, %v1599
        %v1601 = vshll.u32 2131351028, %v1592
        %v1602 = vshrl.u32 2102212464, %v1593
        %v1603 = vor.u32 %v1601, %v1602
        %v1604 = vshll.u32 2102212464, %v1592
        %v1605 = vshrl.u32 920167782, %v1593
        %v1606 = vor.u32 %v1604, %v1605
        %v1607 = vshll.u32 920167782, %v1592
        %v1608 = vshrl.u32 1326507024, %v1593
        %v1609 = vor.u32 %v1607, %v1608
        %vm1610 = vcmp.lt.s32.totalorder %v1591, 1
        %vm1611 = vcmp.lt.s32.totalorder %v1591, 2
        %vm1612 = vcmp.lt.s32.totalorder %v1591, 3
        %vm1613 = vcmp.lt.s32.totalorder %v1591, 4
        %v1614 = vsel %vm1610, %v1594, %v1597
        %v1615 = vsel %vm1613, %v1603, 2102212464
        %v1616 = vsel %vm1612, %v1600, %v1615
        %v1617 = vsel %vm1611, %v1614, %v1616
        %v1618 = vsel %vm1610, %v1597, %v1600
        %v1619 = vsel %vm1613, %v1606, 920167782
        %v1620 = vsel %vm1612, %v1603, %v1619
        %v1621 = vsel %vm1611, %v1618, %v1620
        %v1622 = vsel %vm1610, %v1600, %v1603
        %v1623 = vsel %vm1613, %v1609, 1326507024
        %v1624 = vsel %vm1612, %v1606, %v1623
        %v1625 = vsel %vm1611, %v1622, %v1624
        %v1626 = vshll.u32 %v1586, 8
        %v1627 = vmul.u32.u64.compose %v1626, %v1625
        %v1628 = vextract.low.u32 %v1627
        %v1629 = vextract.high.u32 %v1627
        %v1630 = vmul.u32.u64.compose %v1626, %v1621
        %v1631 = vextract.low.u32 %v1630
        %v1632 = vextract.high.u32 %v1630
        %v1633 = vmul.u32 %v1626, %v1617
        %v1634 = vadd.s32 %v1629, %v1631
        %vm1635 = vc.u32 %v1629, %v1631
        %v1636 = vadd.s32 %v1632, 1
        %v1637 = vsel %vm1635, %v1636, %v1632
        %v1638 = vadd.s32 %v1633, %v1637
        %v1639 = vadd.s32 %v1638, 536870912
        %v1640 = vshrl.u32 %v1639, 30
        %v1641 = vshll.u32 %v1640, 30
        %v1642 = vsub.s32 %v1638, %v1641
        %vm1643 = vcmp.lt.s32.totalorder %v1642, 0
        %v1644 = vsub.s32 0, %v1642
        %v1645 = vsel %vm1643, %v1644, %v1642
        %v1646 = vclz %v1645
        %v1647 = vsub.s32 %v1646, 2
        %vm1648 = vcmp.gt.s32.totalorder 0, %v1647
        %v1649 = vsel %vm1648, 0, %v1647
        %v1650 = vsub.s32 32, %v1649
        %v1651 = vshll.u32 %v1642, %v1649
        %v1652 = vshrl.u32 %v1634, %v1650
        %v1653 = vor.u32 %v1651, %v1652
        %v1654 = vsub.s32 4294967266, %v1649
        %v1655 = vadd.s32 %v1654, 127
        %v1656 = vshll.u32 %v1655, 23
        %v1657 = vor.u32 4788187, %v1656
        %v1658 = vand.u32 2147483647, %v1657
        %v1660 = vcvt.s32.f32 %v1653
        %v1661 = vmul.f32 %v1660, %v1658
        %v1662 = vxor.u32 %v1661, 2147483648
        %v1663 = vsel %vm1580, %v1662, %v1661
        %v1664 = vsub.s32 4, %v1640
        %v1665 = vsel %vm1580, %v1664, %v1640
        %v1666 = vsel %vm1579, %v532, %v1663
        %v1667 = vsel %vm1579, 0, %v1665
        %v1668 = vcosq.f32.pop %v1666
        %v1669 = vsinq.f32.pop %v1666
        %vm1670 = vweird.f32 %v532
        %v1671 = vadd.s32 %v1667, 3
        %v1672 = vand.u32 %v1671, 3
        %vm1673 = vcmp.lt.s32.totalorder %v1672, 2
        %vm1674 = vcmp.eq.s32.totalorder %v1672, 0
        %v1675 = vxor.u32 %v1669, 2147483648
        %v1676 = vsel %vm1674, %v1668, %v1675
        %vm1677 = vcmp.eq.s32.totalorder %v1672, 2
        %v1678 = vxor.u32 %v1668, 2147483648
        %v1679 = vsel %vm1677, %v1678, %v1669
        %v1680 = vsel %vm1673, %v1676, %v1679
        %v1681 = vsel %vm1670, nan, %v1680
        %v1682 = vand.u32 2147483647, %v533
        %vm1683 = vcmp.le.f32.partialorder %v1682, 0.7853982
        %vm1684 = vcmp.lt.s32.totalorder %v533, 0
        %v1685 = vand.u32 %v533, 2139095040
        %v1686 = vshrl.u32 %v1685, 23
        %v1687 = vsub.s32 %v1686, 127
        %v1688 = vand.u32 2147483647, %v533
        %v1689 = vand.u32 %v1688, 8388607
        %v1690 = vor.u32 %v1689, 8388608
        %v1691 = vsub.s32 0, %v1690
        %v1692 = vadd.s32 %v1687, 1
        %vm1693 = vcmp.gt.s32.totalorder %v1692, 0
        %v1694 = vsel %vm1693, %v1692, 0
        %v1695 = vshrl.u32 %v1694, 5
        %v1696 = vand.u32 %v1694, 31
        %v1697 = vsub.s32 32, %v1696
        %v1698 = vshrl.u32 683565275, %v1697
        %v1699 = vshll.u32 683565275, %v1696
        %v1700 = vshrl.u32 2475754826, %v1697
        %v1701 = vor.u32 %v1699, %v1700
        %v1702 = vshll.u32 2475754826, %v1696
        %v1703 = vshrl.u32 2131351028, %v1697
        %v1704 = vor.u32 %v1702, %v1703
        %v1705 = vshll.u32 2131351028, %v1696
        %v1706 = vshrl.u32 2102212464, %v1697
        %v1707 = vor.u32 %v1705, %v1706
        %v1708 = vshll.u32 2102212464, %v1696
        %v1709 = vshrl.u32 920167782, %v1697
        %v1710 = vor.u32 %v1708, %v1709
        %v1711 = vshll.u32 920167782, %v1696
        %v1712 = vshrl.u32 1326507024, %v1697
        %v1713 = vor.u32 %v1711, %v1712
        %vm1714 = vcmp.lt.s32.totalorder %v1695, 1
        %vm1715 = vcmp.lt.s32.totalorder %v1695, 2
        %vm1716 = vcmp.lt.s32.totalorder %v1695, 3
        %vm1717 = vcmp.lt.s32.totalorder %v1695, 4
        %v1718 = vsel %vm1714, %v1698, %v1701
        %v1719 = vsel %vm1717, %v1707, 2102212464
        %v1720 = vsel %vm1716, %v1704, %v1719
        %v1721 = vsel %vm1715, %v1718, %v1720
        %v1722 = vsel %vm1714, %v1701, %v1704
        %v1723 = vsel %vm1717, %v1710, 920167782
        %v1724 = vsel %vm1716, %v1707, %v1723
        %v1725 = vsel %vm1715, %v1722, %v1724
        %v1726 = vsel %vm1714, %v1704, %v1707
        %v1727 = vsel %vm1717, %v1713, 1326507024
        %v1728 = vsel %vm1716, %v1710, %v1727
        %v1729 = vsel %vm1715, %v1726, %v1728
        %v1730 = vshll.u32 %v1690, 8
        %v1731 = vmul.u32.u64.compose %v1730, %v1729
        %v1732 = vextract.low.u32 %v1731
        %v1733 = vextract.high.u32 %v1731
        %v1734 = vmul.u32.u64.compose %v1730, %v1725
        %v1735 = vextract.low.u32 %v1734
        %v1736 = vextract.high.u32 %v1734
        %v1737 = vmul.u32 %v1730, %v1721
        %v1738 = vadd.s32 %v1733, %v1735
        %vm1739 = vc.u32 %v1733, %v1735
        %v1740 = vadd.s32 %v1736, 1
        %v1741 = vsel %vm1739, %v1740, %v1736
        %v1742 = vadd.s32 %v1737, %v1741
        %v1743 = vadd.s32 %v1742, 536870912
        %v1744 = vshrl.u32 %v1743, 30
        %v1745 = vshll.u32 %v1744, 30
        %v1746 = vsub.s32 %v1742, %v1745
        %vm1747 = vcmp.lt.s32.totalorder %v1746, 0
        %v1748 = vsub.s32 0, %v1746
        %v1749 = vsel %vm1747, %v1748, %v1746
        %v1750 = vclz %v1749
        %v1751 = vsub.s32 %v1750, 2
        %vm1752 = vcmp.gt.s32.totalorder 0, %v1751
        %v1753 = vsel %vm1752, 0, %v1751
        %v1754 = vsub.s32 32, %v1753
        %v1755 = vshll.u32 %v1746, %v1753
        %v1756 = vshrl.u32 %v1738, %v1754
        %v1757 = vor.u32 %v1755, %v1756
        %v1758 = vsub.s32 4294967266, %v1753
        %v1759 = vadd.s32 %v1758, 127
        %v1760 = vshll.u32 %v1759, 23
        %v1761 = vor.u32 4788187, %v1760
        %v1762 = vand.u32 2147483647, %v1761
        %v1764 = vcvt.s32.f32 %v1757
        %v1765 = vmul.f32 %v1764, %v1762
        %v1766 = vxor.u32 %v1765, 2147483648
        %v1767 = vsel %vm1684, %v1766, %v1765
        %v1768 = vsub.s32 4, %v1744
        %v1769 = vsel %vm1684, %v1768, %v1744
        %v1770 = vsel %vm1683, %v533, %v1767
        %v1771 = vsel %vm1683, 0, %v1769
        %v1772 = vcosq.f32.pop %v1770
        %v1773 = vsinq.f32.pop %v1770
        %vm1774 = vweird.f32 %v533
        %v1775 = vadd.s32 %v1771, 3
        %v1776 = vand.u32 %v1775, 3
        %vm1777 = vcmp.lt.s32.totalorder %v1776, 2
        %vm1778 = vcmp.eq.s32.totalorder %v1776, 0
        %v1779 = vxor.u32 %v1773, 2147483648
        %v1780 = vsel %vm1778, %v1772, %v1779
        %vm1781 = vcmp.eq.s32.totalorder %v1776, 2
        %v1782 = vxor.u32 %v1772, 2147483648
        %v1783 = vsel %vm1781, %v1782, %v1773
        %v1784 = vsel %vm1777, %v1780, %v1783
        %v1785 = vsel %vm1774, nan, %v1784
        %v1786 = vand.u32 2147483647, %v534
        %vm1787 = vcmp.le.f32.partialorder %v1786, 0.7853982
        %vm1788 = vcmp.lt.s32.totalorder %v534, 0
        %v1789 = vand.u32 %v534, 2139095040
        %v1790 = vshrl.u32 %v1789, 23
        %v1791 = vsub.s32 %v1790, 127
        %v1792 = vand.u32 2147483647, %v534
        %v1793 = vand.u32 %v1792, 8388607
        %v1794 = vor.u32 %v1793, 8388608
        %v1795 = vsub.s32 0, %v1794
        %v1796 = vadd.s32 %v1791, 1
        %vm1797 = vcmp.gt.s32.totalorder %v1796, 0
        %v1798 = vsel %vm1797, %v1796, 0
        %v1799 = vshrl.u32 %v1798, 5
        %v1800 = vand.u32 %v1798, 31
        %v1801 = vsub.s32 32, %v1800
        %v1802 = vshrl.u32 683565275, %v1801
        %v1803 = vshll.u32 683565275, %v1800
        %v1804 = vshrl.u32 2475754826, %v1801
        %v1805 = vor.u32 %v1803, %v1804
        %v1806 = vshll.u32 2475754826, %v1800
        %v1807 = vshrl.u32 2131351028, %v1801
        %v1808 = vor.u32 %v1806, %v1807
        %v1809 = vshll.u32 2131351028, %v1800
        %v1810 = vshrl.u32 2102212464, %v1801
        %v1811 = vor.u32 %v1809, %v1810
        %v1812 = vshll.u32 2102212464, %v1800
        %v1813 = vshrl.u32 920167782, %v1801
        %v1814 = vor.u32 %v1812, %v1813
        %v1815 = vshll.u32 920167782, %v1800
        %v1816 = vshrl.u32 1326507024, %v1801
        %v1817 = vor.u32 %v1815, %v1816
        %vm1818 = vcmp.lt.s32.totalorder %v1799, 1
        %vm1819 = vcmp.lt.s32.totalorder %v1799, 2
        %vm1820 = vcmp.lt.s32.totalorder %v1799, 3
        %vm1821 = vcmp.lt.s32.totalorder %v1799, 4
        %v1822 = vsel %vm1818, %v1802, %v1805
        %v1823 = vsel %vm1821, %v1811, 2102212464
        %v1824 = vsel %vm1820, %v1808, %v1823
        %v1825 = vsel %vm1819, %v1822, %v1824
        %v1826 = vsel %vm1818, %v1805, %v1808
        %v1827 = vsel %vm1821, %v1814, 920167782
        %v1828 = vsel %vm1820, %v1811, %v1827
        %v1829 = vsel %vm1819, %v1826, %v1828
        %v1830 = vsel %vm1818, %v1808, %v1811
        %v1831 = vsel %vm1821, %v1817, 1326507024
        %v1832 = vsel %vm1820, %v1814, %v1831
        %v1833 = vsel %vm1819, %v1830, %v1832
        %v1834 = vshll.u32 %v1794, 8
        %v1835 = vmul.u32.u64.compose %v1834, %v1833
        %v1836 = vextract.low.u32 %v1835
        %v1837 = vextract.high.u32 %v1835
        %v1838 = vmul.u32.u64.compose %v1834, %v1829
        %v1839 = vextract.low.u32 %v1838
        %v1840 = vextract.high.u32 %v1838
        %v1841 = vmul.u32 %v1834, %v1825
        %v1842 = vadd.s32 %v1837, %v1839
        %vm1843 = vc.u32 %v1837, %v1839
        %v1844 = vadd.s32 %v1840, 1
        %v1845 = vsel %vm1843, %v1844, %v1840
        %v1846 = vadd.s32 %v1841, %v1845
        %v1847 = vadd.s32 %v1846, 536870912
        %v1848 = vshrl.u32 %v1847, 30
        %v1849 = vshll.u32 %v1848, 30
        %v1850 = vsub.s32 %v1846, %v1849
        %vm1851 = vcmp.lt.s32.totalorder %v1850, 0
        %v1852 = vsub.s32 0, %v1850
        %v1853 = vsel %vm1851, %v1852, %v1850
        %v1854 = vclz %v1853
        %v1855 = vsub.s32 %v1854, 2
        %vm1856 = vcmp.gt.s32.totalorder 0, %v1855
        %v1857 = vsel %vm1856, 0, %v1855
        %v1858 = vsub.s32 32, %v1857
        %v1859 = vshll.u32 %v1850, %v1857
        %v1860 = vshrl.u32 %v1842, %v1858
        %v1861 = vor.u32 %v1859, %v1860
        %v1862 = vsub.s32 4294967266, %v1857
        %v1863 = vadd.s32 %v1862, 127
        %v1864 = vshll.u32 %v1863, 23
        %v1865 = vor.u32 4788187, %v1864
        %v1866 = vand.u32 2147483647, %v1865
        %v1868 = vcvt.s32.f32 %v1861
        %v1869 = vmul.f32 %v1868, %v1866
        %v1870 = vxor.u32 %v1869, 2147483648
        %v1871 = vsel %vm1788, %v1870, %v1869
        %v1872 = vsub.s32 4, %v1848
        %v1873 = vsel %vm1788, %v1872, %v1848
        %v1874 = vsel %vm1787, %v534, %v1871
        %v1875 = vsel %vm1787, 0, %v1873
        %v1876 = vcosq.f32.pop %v1874
        %v1877 = vsinq.f32.pop %v1874
        %vm1878 = vweird.f32 %v534
        %v1879 = vadd.s32 %v1875, 3
        %v1880 = vand.u32 %v1879, 3
        %vm1881 = vcmp.lt.s32.totalorder %v1880, 2
        %vm1882 = vcmp.eq.s32.totalorder %v1880, 0
        %v1883 = vxor.u32 %v1877, 2147483648
        %v1884 = vsel %vm1882, %v1876, %v1883
        %vm1885 = vcmp.eq.s32.totalorder %v1880, 2
        %v1886 = vxor.u32 %v1876, 2147483648
        %v1887 = vsel %vm1885, %v1886, %v1877
        %v1888 = vsel %vm1881, %v1884, %v1887
        %v1889 = vsel %vm1878, nan, %v1888
        %v1890 = vand.u32 2147483647, %v535
        %vm1891 = vcmp.le.f32.partialorder %v1890, 0.7853982
        %vm1892 = vcmp.lt.s32.totalorder %v535, 0
        %v1893 = vand.u32 %v535, 2139095040
        %v1894 = vshrl.u32 %v1893, 23
        %v1895 = vsub.s32 %v1894, 127
        %v1896 = vand.u32 2147483647, %v535
        %v1897 = vand.u32 %v1896, 8388607
        %v1898 = vor.u32 %v1897, 8388608
        %v1899 = vsub.s32 0, %v1898
        %v1900 = vadd.s32 %v1895, 1
        %vm1901 = vcmp.gt.s32.totalorder %v1900, 0
        %v1902 = vsel %vm1901, %v1900, 0
        %v1903 = vshrl.u32 %v1902, 5
        %v1904 = vand.u32 %v1902, 31
        %v1905 = vsub.s32 32, %v1904
        %v1906 = vshrl.u32 683565275, %v1905
        %v1907 = vshll.u32 683565275, %v1904
        %v1908 = vshrl.u32 2475754826, %v1905
        %v1909 = vor.u32 %v1907, %v1908
        %v1910 = vshll.u32 2475754826, %v1904
        %v1911 = vshrl.u32 2131351028, %v1905
        %v1912 = vor.u32 %v1910, %v1911
        %v1913 = vshll.u32 2131351028, %v1904
        %v1914 = vshrl.u32 2102212464, %v1905
        %v1915 = vor.u32 %v1913, %v1914
        %v1916 = vshll.u32 2102212464, %v1904
        %v1917 = vshrl.u32 920167782, %v1905
        %v1918 = vor.u32 %v1916, %v1917
        %v1919 = vshll.u32 920167782, %v1904
        %v1920 = vshrl.u32 1326507024, %v1905
        %v1921 = vor.u32 %v1919, %v1920
        %vm1922 = vcmp.lt.s32.totalorder %v1903, 1
        %vm1923 = vcmp.lt.s32.totalorder %v1903, 2
        %vm1924 = vcmp.lt.s32.totalorder %v1903, 3
        %vm1925 = vcmp.lt.s32.totalorder %v1903, 4
        %v1926 = vsel %vm1922, %v1906, %v1909
        %v1927 = vsel %vm1925, %v1915, 2102212464
        %v1928 = vsel %vm1924, %v1912, %v1927
        %v1929 = vsel %vm1923, %v1926, %v1928
        %v1930 = vsel %vm1922, %v1909, %v1912
        %v1931 = vsel %vm1925, %v1918, 920167782
        %v1932 = vsel %vm1924, %v1915, %v1931
        %v1933 = vsel %vm1923, %v1930, %v1932
        %v1934 = vsel %vm1922, %v1912, %v1915
        %v1935 = vsel %vm1925, %v1921, 1326507024
        %v1936 = vsel %vm1924, %v1918, %v1935
        %v1937 = vsel %vm1923, %v1934, %v1936
        %v1938 = vshll.u32 %v1898, 8
        %v1939 = vmul.u32.u64.compose %v1938, %v1937
        %v1940 = vextract.low.u32 %v1939
        %v1941 = vextract.high.u32 %v1939
        %v1942 = vmul.u32.u64.compose %v1938, %v1933
        %v1943 = vextract.low.u32 %v1942
        %v1944 = vextract.high.u32 %v1942
        %v1945 = vmul.u32 %v1938, %v1929
        %v1946 = vadd.s32 %v1941, %v1943
        %vm1947 = vc.u32 %v1941, %v1943
        %v1948 = vadd.s32 %v1944, 1
        %v1949 = vsel %vm1947, %v1948, %v1944
        %v1950 = vadd.s32 %v1945, %v1949
        %v1951 = vadd.s32 %v1950, 536870912
        %v1952 = vshrl.u32 %v1951, 30
        %v1953 = vshll.u32 %v1952, 30
        %v1954 = vsub.s32 %v1950, %v1953
        %vm1955 = vcmp.lt.s32.totalorder %v1954, 0
        %v1956 = vsub.s32 0, %v1954
        %v1957 = vsel %vm1955, %v1956, %v1954
        %v1958 = vclz %v1957
        %v1959 = vsub.s32 %v1958, 2
        %vm1960 = vcmp.gt.s32.totalorder 0, %v1959
        %v1961 = vsel %vm1960, 0, %v1959
        %v1962 = vsub.s32 32, %v1961
        %v1963 = vshll.u32 %v1954, %v1961
        %v1964 = vshrl.u32 %v1946, %v1962
        %v1965 = vor.u32 %v1963, %v1964
        %v1966 = vsub.s32 4294967266, %v1961
        %v1967 = vadd.s32 %v1966, 127
        %v1968 = vshll.u32 %v1967, 23
        %v1969 = vor.u32 4788187, %v1968
        %v1970 = vand.u32 2147483647, %v1969
        %v1972 = vcvt.s32.f32 %v1965
        %v1973 = vmul.f32 %v1972, %v1970
        %v1974 = vxor.u32 %v1973, 2147483648
        %v1975 = vsel %vm1892, %v1974, %v1973
        %v1976 = vsub.s32 4, %v1952
        %v1977 = vsel %vm1892, %v1976, %v1952
        %v1978 = vsel %vm1891, %v535, %v1975
        %v1979 = vsel %vm1891, 0, %v1977
        %v1980 = vcosq.f32.pop %v1978
        %v1981 = vsinq.f32.pop %v1978
        %vm1982 = vweird.f32 %v535
        %v1983 = vadd.s32 %v1979, 3
        %v1984 = vand.u32 %v1983, 3
        %vm1985 = vcmp.lt.s32.totalorder %v1984, 2
        %vm1986 = vcmp.eq.s32.totalorder %v1984, 0
        %v1987 = vxor.u32 %v1981, 2147483648
        %v1988 = vsel %vm1986, %v1980, %v1987
        %vm1989 = vcmp.eq.s32.totalorder %v1984, 2
        %v1990 = vxor.u32 %v1980, 2147483648
        %v1991 = vsel %vm1989, %v1990, %v1981
        %v1992 = vsel %vm1985, %v1988, %v1991
        %v1993 = vsel %vm1982, nan, %v1992
        %v1994 = vand.u32 2147483647, %v536
        %vm1995 = vcmp.le.f32.partialorder %v1994, 0.7853982
        %vm1996 = vcmp.lt.s32.totalorder %v536, 0
        %v1997 = vand.u32 %v536, 2139095040
        %v1998 = vshrl.u32 %v1997, 23
        %v1999 = vsub.s32 %v1998, 127
        %v2000 = vand.u32 2147483647, %v536
        %v2001 = vand.u32 %v2000, 8388607
        %v2002 = vor.u32 %v2001, 8388608
        %v2003 = vsub.s32 0, %v2002
        %v2004 = vadd.s32 %v1999, 1
        %vm2005 = vcmp.gt.s32.totalorder %v2004, 0
        %v2006 = vsel %vm2005, %v2004, 0
        %v2007 = vshrl.u32 %v2006, 5
        %v2008 = vand.u32 %v2006, 31
        %v2009 = vsub.s32 32, %v2008
        %v2010 = vshrl.u32 683565275, %v2009
        %v2011 = vshll.u32 683565275, %v2008
        %v2012 = vshrl.u32 2475754826, %v2009
        %v2013 = vor.u32 %v2011, %v2012
        %v2014 = vshll.u32 2475754826, %v2008
        %v2015 = vshrl.u32 2131351028, %v2009
        %v2016 = vor.u32 %v2014, %v2015
        %v2017 = vshll.u32 2131351028, %v2008
        %v2018 = vshrl.u32 2102212464, %v2009
        %v2019 = vor.u32 %v2017, %v2018
        %v2020 = vshll.u32 2102212464, %v2008
        %v2021 = vshrl.u32 920167782, %v2009
        %v2022 = vor.u32 %v2020, %v2021
        %v2023 = vshll.u32 920167782, %v2008
        %v2024 = vshrl.u32 1326507024, %v2009
        %v2025 = vor.u32 %v2023, %v2024
        %vm2026 = vcmp.lt.s32.totalorder %v2007, 1
        %vm2027 = vcmp.lt.s32.totalorder %v2007, 2
        %vm2028 = vcmp.lt.s32.totalorder %v2007, 3
        %vm2029 = vcmp.lt.s32.totalorder %v2007, 4
        %v2030 = vsel %vm2026, %v2010, %v2013
        %v2031 = vsel %vm2029, %v2019, 2102212464
        %v2032 = vsel %vm2028, %v2016, %v2031
        %v2033 = vsel %vm2027, %v2030, %v2032
        %v2034 = vsel %vm2026, %v2013, %v2016
        %v2035 = vsel %vm2029, %v2022, 920167782
        %v2036 = vsel %vm2028, %v2019, %v2035
        %v2037 = vsel %vm2027, %v2034, %v2036
        %v2038 = vsel %vm2026, %v2016, %v2019
        %v2039 = vsel %vm2029, %v2025, 1326507024
        %v2040 = vsel %vm2028, %v2022, %v2039
        %v2041 = vsel %vm2027, %v2038, %v2040
        %v2042 = vshll.u32 %v2002, 8
        %v2043 = vmul.u32.u64.compose %v2042, %v2041
        %v2044 = vextract.low.u32 %v2043
        %v2045 = vextract.high.u32 %v2043
        %v2046 = vmul.u32.u64.compose %v2042, %v2037
        %v2047 = vextract.low.u32 %v2046
        %v2048 = vextract.high.u32 %v2046
        %v2049 = vmul.u32 %v2042, %v2033
        %v2050 = vadd.s32 %v2045, %v2047
        %vm2051 = vc.u32 %v2045, %v2047
        %v2052 = vadd.s32 %v2048, 1
        %v2053 = vsel %vm2051, %v2052, %v2048
        %v2054 = vadd.s32 %v2049, %v2053
        %v2055 = vadd.s32 %v2054, 536870912
        %v2056 = vshrl.u32 %v2055, 30
        %v2057 = vshll.u32 %v2056, 30
        %v2058 = vsub.s32 %v2054, %v2057
        %vm2059 = vcmp.lt.s32.totalorder %v2058, 0
        %v2060 = vsub.s32 0, %v2058
        %v2061 = vsel %vm2059, %v2060, %v2058
        %v2062 = vclz %v2061
        %v2063 = vsub.s32 %v2062, 2
        %vm2064 = vcmp.gt.s32.totalorder 0, %v2063
        %v2065 = vsel %vm2064, 0, %v2063
        %v2066 = vsub.s32 32, %v2065
        %v2067 = vshll.u32 %v2058, %v2065
        %v2068 = vshrl.u32 %v2050, %v2066
        %v2069 = vor.u32 %v2067, %v2068
        %v2070 = vsub.s32 4294967266, %v2065
        %v2071 = vadd.s32 %v2070, 127
        %v2072 = vshll.u32 %v2071, 23
        %v2073 = vor.u32 4788187, %v2072
        %v2074 = vand.u32 2147483647, %v2073
        %v2076 = vcvt.s32.f32 %v2069
        %v2077 = vmul.f32 %v2076, %v2074
        %v2078 = vxor.u32 %v2077, 2147483648
        %v2079 = vsel %vm1996, %v2078, %v2077
        %v2080 = vsub.s32 4, %v2056
        %v2081 = vsel %vm1996, %v2080, %v2056
        %v2082 = vsel %vm1995, %v536, %v2079
        %v2083 = vsel %vm1995, 0, %v2081
        %v2084 = vcosq.f32.pop %v2082
        %v2085 = vsinq.f32.pop %v2082
        %vm2086 = vweird.f32 %v536
        %v2087 = vadd.s32 %v2083, 3
        %v2088 = vand.u32 %v2087, 3
        %vm2089 = vcmp.lt.s32.totalorder %v2088, 2
        %vm2090 = vcmp.eq.s32.totalorder %v2088, 0
        %v2091 = vxor.u32 %v2085, 2147483648
        %v2092 = vsel %vm2090, %v2084, %v2091
        %vm2093 = vcmp.eq.s32.totalorder %v2088, 2
        %v2094 = vxor.u32 %v2084, 2147483648
        %v2095 = vsel %vm2093, %v2094, %v2085
        %v2096 = vsel %vm2089, %v2092, %v2095
        %v2097 = vsel %vm2086, nan, %v2096
        %v2098 = vand.u32 2147483647, %v537
        %vm2099 = vcmp.le.f32.partialorder %v2098, 0.7853982
        %vm2100 = vcmp.lt.s32.totalorder %v537, 0
        %v2101 = vand.u32 %v537, 2139095040
        %v2102 = vshrl.u32 %v2101, 23
        %v2103 = vsub.s32 %v2102, 127
        %v2104 = vand.u32 2147483647, %v537
        %v2105 = vand.u32 %v2104, 8388607
        %v2106 = vor.u32 %v2105, 8388608
        %v2107 = vsub.s32 0, %v2106
        %v2108 = vadd.s32 %v2103, 1
        %vm2109 = vcmp.gt.s32.totalorder %v2108, 0
        %v2110 = vsel %vm2109, %v2108, 0
        %v2111 = vshrl.u32 %v2110, 5
        %v2112 = vand.u32 %v2110, 31
        %v2113 = vsub.s32 32, %v2112
        %v2114 = vshrl.u32 683565275, %v2113
        %v2115 = vshll.u32 683565275, %v2112
        %v2116 = vshrl.u32 2475754826, %v2113
        %v2117 = vor.u32 %v2115, %v2116
        %v2118 = vshll.u32 2475754826, %v2112
        %v2119 = vshrl.u32 2131351028, %v2113
        %v2120 = vor.u32 %v2118, %v2119
        %v2121 = vshll.u32 2131351028, %v2112
        %v2122 = vshrl.u32 2102212464, %v2113
        %v2123 = vor.u32 %v2121, %v2122
        %v2124 = vshll.u32 2102212464, %v2112
        %v2125 = vshrl.u32 920167782, %v2113
        %v2126 = vor.u32 %v2124, %v2125
        %v2127 = vshll.u32 920167782, %v2112
        %v2128 = vshrl.u32 1326507024, %v2113
        %v2129 = vor.u32 %v2127, %v2128
        %vm2130 = vcmp.lt.s32.totalorder %v2111, 1
        %vm2131 = vcmp.lt.s32.totalorder %v2111, 2
        %vm2132 = vcmp.lt.s32.totalorder %v2111, 3
        %vm2133 = vcmp.lt.s32.totalorder %v2111, 4
        %v2134 = vsel %vm2130, %v2114, %v2117
        %v2135 = vsel %vm2133, %v2123, 2102212464
        %v2136 = vsel %vm2132, %v2120, %v2135
        %v2137 = vsel %vm2131, %v2134, %v2136
        %v2138 = vsel %vm2130, %v2117, %v2120
        %v2139 = vsel %vm2133, %v2126, 920167782
        %v2140 = vsel %vm2132, %v2123, %v2139
        %v2141 = vsel %vm2131, %v2138, %v2140
        %v2142 = vsel %vm2130, %v2120, %v2123
        %v2143 = vsel %vm2133, %v2129, 1326507024
        %v2144 = vsel %vm2132, %v2126, %v2143
        %v2145 = vsel %vm2131, %v2142, %v2144
        %v2146 = vshll.u32 %v2106, 8
        %v2147 = vmul.u32.u64.compose %v2146, %v2145
        %v2148 = vextract.low.u32 %v2147
        %v2149 = vextract.high.u32 %v2147
        %v2150 = vmul.u32.u64.compose %v2146, %v2141
        %v2151 = vextract.low.u32 %v2150
        %v2152 = vextract.high.u32 %v2150
        %v2153 = vmul.u32 %v2146, %v2137
        %v2154 = vadd.s32 %v2149, %v2151
        %vm2155 = vc.u32 %v2149, %v2151
        %v2156 = vadd.s32 %v2152, 1
        %v2157 = vsel %vm2155, %v2156, %v2152
        %v2158 = vadd.s32 %v2153, %v2157
        %v2159 = vadd.s32 %v2158, 536870912
        %v2160 = vshrl.u32 %v2159, 30
        %v2161 = vshll.u32 %v2160, 30
        %v2162 = vsub.s32 %v2158, %v2161
        %vm2163 = vcmp.lt.s32.totalorder %v2162, 0
        %v2164 = vsub.s32 0, %v2162
        %v2165 = vsel %vm2163, %v2164, %v2162
        %v2166 = vclz %v2165
        %v2167 = vsub.s32 %v2166, 2
        %vm2168 = vcmp.gt.s32.totalorder 0, %v2167
        %v2169 = vsel %vm2168, 0, %v2167
        %v2170 = vsub.s32 32, %v2169
        %v2171 = vshll.u32 %v2162, %v2169
        %v2172 = vshrl.u32 %v2154, %v2170
        %v2173 = vor.u32 %v2171, %v2172
        %v2174 = vsub.s32 4294967266, %v2169
        %v2175 = vadd.s32 %v2174, 127
        %v2176 = vshll.u32 %v2175, 23
        %v2177 = vor.u32 4788187, %v2176
        %v2178 = vand.u32 2147483647, %v2177
        %v2180 = vcvt.s32.f32 %v2173
        %v2181 = vmul.f32 %v2180, %v2178
        %v2182 = vxor.u32 %v2181, 2147483648
        %v2183 = vsel %vm2100, %v2182, %v2181
        %v2184 = vsub.s32 4, %v2160
        %v2185 = vsel %vm2100, %v2184, %v2160
        %v2186 = vsel %vm2099, %v537, %v2183
        %v2187 = vsel %vm2099, 0, %v2185
        %v2188 = vcosq.f32.pop %v2186
        %v2189 = vsinq.f32.pop %v2186
        %vm2190 = vweird.f32 %v537
        %v2191 = vadd.s32 %v2187, 3
        %v2192 = vand.u32 %v2191, 3
        %vm2193 = vcmp.lt.s32.totalorder %v2192, 2
        %vm2194 = vcmp.eq.s32.totalorder %v2192, 0
        %v2195 = vxor.u32 %v2189, 2147483648
        %v2196 = vsel %vm2194, %v2188, %v2195
        %vm2197 = vcmp.eq.s32.totalorder %v2192, 2
        %v2198 = vxor.u32 %v2188, 2147483648
        %v2199 = vsel %vm2197, %v2198, %v2189
        %v2200 = vsel %vm2193, %v2196, %v2199
        %v2201 = vsel %vm2190, nan, %v2200
        %v2202 = vld [vmem:[%s3] sm:$0xff]
        %v2203 = vld [vmem:[%s3 + $0x8] sm:$0xff]
        %v2204 = vld [vmem:[%s3 + $0x10] sm:$0xff]
        %v2205 = vld [vmem:[%s3 + $0x18] sm:$0xff]
        %v2206 = vld [vmem:[%s4] sm:$0xff]
        %v2207 = vld [vmem:[%s4 + $0x8] sm:$0xff]
        %v2208 = vld [vmem:[%s4 + $0x10] sm:$0xff]
        %v2209 = vld [vmem:[%s4 + $0x18] sm:$0xff]
        %2211 = vset.pattern.permute.xlu0 0
        %2212 = vperm.xlu0 %2211, %v2206
        %v2213 = vpop.permute.xlu0 %2212
        %2216 = vset.pattern.permute.xlu0 0
        %2217 = vperm.xlu0 %2216, %v2207
        %v2218 = vpop.permute.xlu0 %2217
        %2221 = vset.pattern.permute.xlu0 0
        %2222 = vperm.xlu0 %2221, %v2208
        %v2223 = vpop.permute.xlu0 %2222
        %2226 = vset.pattern.permute.xlu0 0
        %2227 = vperm.xlu0 %2226, %v2209
        %v2228 = vpop.permute.xlu0 %2227
        %vm2230 = vcmask 261120
        %v2232 = vsel %vm2230, %v2202, 0
        %v2235 = vsel %vm2230, %v2203, 0
        %v2238 = vsel %vm2230, %v2204, 0
        %v2241 = vsel %vm2230, %v2205, 0
        %2243 = vmatprep.subr.mxu0 0.0
        %2244 = vmatpush1.msra.mxu0 0.0
        %2245 = vmatprep.subr.mxu0 0.0
        %2246 = vmatpush1.msra.mxu0 0.0
        %2247 = vmatprep.subr.mxu0 0.0
        %2248 = vmatpush1.msra.mxu0 0.0
        %2249 = vmatprep.subr.mxu0 0.0
        %2250 = vmatpush1.msra.mxu0 0.0
        %2251 = vmatprep.subr.mxu0 0.0
        %2252 = vmatpush1.msra.mxu0 0.0
        %2253 = vmatprep.subr.mxu0 0.0
        %2254 = vmatpush1.msra.mxu0 0.0
        %2255 = vmatprep.subr.mxu0 0.0
        %2256 = vmatpush1.msra.mxu0 0.0
        %2257 = vmatprep.subr.mxu0 0.0
        %2258 = vmatpush1.msra.mxu0 0.0
        %2259 = vmatprep.subr.mxu0 0.0
        %2260 = vmatpush1.msra.mxu0 0.0
        %2261 = vmatprep.subr.mxu0 0.0
        %2262 = vmatpush1.msra.mxu0 0.0
        %2263 = vmatprep.subr.mxu0 0.0
        %2264 = vmatpush1.msra.mxu0 0.0
        %2265 = vmatprep.subr.mxu0 0.0
        %2266 = vmatpush1.msra.mxu0 0.0
        %2267 = vmatprep.subr.mxu0 %v1993
        %2268 = vmatpush1.msra.mxu0 %v1889
        %2269 = vmatprep.subr.mxu0 %v1577
        %2270 = vmatpush1.msra.mxu0 %v1473
        %2271 = vmatprep.subr.mxu0 %v1161
        %2272 = vmatpush1.msra.mxu0 %v1057
        %2273 = vmatprep.subr.mxu0 %v745
        %2274 = vmatpush1.msra.mxu0 %v641
        %2275 = vmatprep.subr.mxu0 0.0
        %2276 = vmatpush2.msra.mxu0 0.0
        %2277 = vmatprep.subr.mxu0 0.0
        %2278 = vmatpush2.msra.mxu0 0.0
        %2279 = vmatprep.subr.mxu0 0.0
        %2280 = vmatpush2.msra.mxu0 0.0
        %2281 = vmatprep.subr.mxu0 0.0
        %2282 = vmatpush2.msra.mxu0 0.0
        %2283 = vmatprep.subr.mxu0 0.0
        %2284 = vmatpush2.msra.mxu0 0.0
        %2285 = vmatprep.subr.mxu0 0.0
        %2286 = vmatpush2.msra.mxu0 0.0
        %2287 = vmatprep.subr.mxu0 0.0
        %2288 = vmatpush2.msra.mxu0 0.0
        %2289 = vmatprep.subr.mxu0 0.0
        %2290 = vmatpush2.msra.mxu0 0.0
        %2291 = vmatprep.subr.mxu0 0.0
        %2292 = vmatpush2.msra.mxu0 0.0
        %2293 = vmatprep.subr.mxu0 0.0
        %2294 = vmatpush2.msra.mxu0 0.0
        %2295 = vmatprep.subr.mxu0 0.0
        %2296 = vmatpush2.msra.mxu0 0.0
        %2297 = vmatprep.subr.mxu0 0.0
        %2298 = vmatpush2.msra.mxu0 0.0
        %2299 = vmatprep.subr.mxu0 0.0
        %2300 = vmatpush2.msra.mxu0 0.0
        %2301 = vmatprep.subr.mxu0 0.0
        %2302 = vmatpush2.msra.mxu0 0.0
        %2303 = vmatprep.subr.mxu0 0.0
        %2304 = vmatpush2.msra.mxu0 0.0
        %2305 = vmatprep.subr.mxu0 0.0
        %2306 = vmatpush2.msra.mxu0 0.0
        %2307 = vmatprep.mubr.f32.mxu0 0.0
        %2308 = vmatmul.mubr.f32.gmra.mxu0 %v2232
        %v2309 = vpop.f32.mrf.mxu0
        %v2310 = vadd.f32 %v2213, %v2309
        %v2311 = vpop.f32.mrf.mxu0
        %v2312 = vadd.f32 %v2213, %v2311
        %2313 = vmatprep.mubr.f32.mxu0 0.0
        %2314 = vmatmul.mubr.f32.gmra.mxu0 %v2235
        %v2315 = vpop.f32.mrf.mxu0
        %v2316 = vadd.f32 %v2218, %v2315
        %v2317 = vpop.f32.mrf.mxu0
        %v2318 = vadd.f32 %v2218, %v2317
        %2319 = vmatprep.mubr.f32.mxu0 0.0
        %2320 = vmatmul.mubr.f32.gmra.mxu0 %v2238
        %v2321 = vpop.f32.mrf.mxu0
        %v2322 = vadd.f32 %v2223, %v2321
        %v2323 = vpop.f32.mrf.mxu0
        %v2324 = vadd.f32 %v2223, %v2323
        %2325 = vmatprep.mubr.f32.mxu0 0.0
        %2326 = vmatmul.mubr.f32.gmra.mxu0 %v2241
        %v2327 = vpop.f32.mrf.mxu0
        %v2328 = vadd.f32 %v2228, %v2327
        %v2329 = vpop.f32.mrf.mxu0
        %v2330 = vadd.f32 %v2228, %v2329
        %2331 = vdwg.mxu0
        %2332 = vmatprep.subr.mxu0 0.0
        %2333 = vmatpush1.msra.mxu0 0.0
        %2334 = vmatprep.subr.mxu0 0.0
        %2335 = vmatpush1.msra.mxu0 0.0
        %2336 = vmatprep.subr.mxu0 0.0
        %2337 = vmatpush1.msra.mxu0 0.0
        %2338 = vmatprep.subr.mxu0 0.0
        %2339 = vmatpush1.msra.mxu0 0.0
        %2340 = vmatprep.subr.mxu0 0.0
        %2341 = vmatpush1.msra.mxu0 0.0
        %2342 = vmatprep.subr.mxu0 0.0
        %2343 = vmatpush1.msra.mxu0 0.0
        %2344 = vmatprep.subr.mxu0 0.0
        %2345 = vmatpush1.msra.mxu0 0.0
        %2346 = vmatprep.subr.mxu0 0.0
        %2347 = vmatpush1.msra.mxu0 0.0
        %2348 = vmatprep.subr.mxu0 0.0
        %2349 = vmatpush1.msra.mxu0 0.0
        %2350 = vmatprep.subr.mxu0 0.0
        %2351 = vmatpush1.msra.mxu0 0.0
        %2352 = vmatprep.subr.mxu0 0.0
        %2353 = vmatpush1.msra.mxu0 0.0
        %2354 = vmatprep.subr.mxu0 0.0
        %2355 = vmatpush1.msra.mxu0 0.0
        %2356 = vmatprep.subr.mxu0 %v2201
        %2357 = vmatpush1.msra.mxu0 %v2097
        %2358 = vmatprep.subr.mxu0 %v1785
        %2359 = vmatpush1.msra.mxu0 %v1681
        %2360 = vmatprep.subr.mxu0 %v1369
        %2361 = vmatpush1.msra.mxu0 %v1265
        %2362 = vmatprep.subr.mxu0 %v953
        %2363 = vmatpush1.msra.mxu0 %v849
        %2364 = vmatprep.subr.mxu0 0.0
        %2365 = vmatpush2.msra.mxu0 0.0
        %2366 = vmatprep.subr.mxu0 0.0
        %2367 = vmatpush2.msra.mxu0 0.0
        %2368 = vmatprep.subr.mxu0 0.0
        %2369 = vmatpush2.msra.mxu0 0.0
        %2370 = vmatprep.subr.mxu0 0.0
        %2371 = vmatpush2.msra.mxu0 0.0
        %2372 = vmatprep.subr.mxu0 0.0
        %2373 = vmatpush2.msra.mxu0 0.0
        %2374 = vmatprep.subr.mxu0 0.0
        %2375 = vmatpush2.msra.mxu0 0.0
        %2376 = vmatprep.subr.mxu0 0.0
        %2377 = vmatpush2.msra.mxu0 0.0
        %2378 = vmatprep.subr.mxu0 0.0
        %2379 = vmatpush2.msra.mxu0 0.0
        %2380 = vmatprep.subr.mxu0 0.0
        %2381 = vmatpush2.msra.mxu0 0.0
        %2382 = vmatprep.subr.mxu0 0.0
        %2383 = vmatpush2.msra.mxu0 0.0
        %2384 = vmatprep.subr.mxu0 0.0
        %2385 = vmatpush2.msra.mxu0 0.0
        %2386 = vmatprep.subr.mxu0 0.0
        %2387 = vmatpush2.msra.mxu0 0.0
        %2388 = vmatprep.subr.mxu0 0.0
        %2389 = vmatpush2.msra.mxu0 0.0
        %2390 = vmatprep.subr.mxu0 0.0
        %2391 = vmatpush2.msra.mxu0 0.0
        %2392 = vmatprep.subr.mxu0 0.0
        %2393 = vmatpush2.msra.mxu0 0.0
        %2394 = vmatprep.subr.mxu0 0.0
        %2395 = vmatpush2.msra.mxu0 0.0
        %2396 = vmatprep.mubr.f32.mxu0 0.0
        %2397 = vmatmul.mubr.f32.gmra.mxu0 %v2232
        %v2398 = vpop.f32.mrf.mxu0
        %v2399 = vadd.f32 %v2213, %v2398
        %v2400 = vpop.f32.mrf.mxu0
        %v2401 = vadd.f32 %v2213, %v2400
        %2402 = vmatprep.mubr.f32.mxu0 0.0
        %2403 = vmatmul.mubr.f32.gmra.mxu0 %v2235
        %v2404 = vpop.f32.mrf.mxu0
        %v2405 = vadd.f32 %v2218, %v2404
        %v2406 = vpop.f32.mrf.mxu0
        %v2407 = vadd.f32 %v2218, %v2406
        %2408 = vmatprep.mubr.f32.mxu0 0.0
        %2409 = vmatmul.mubr.f32.gmra.mxu0 %v2238
        %v2410 = vpop.f32.mrf.mxu0
        %v2411 = vadd.f32 %v2223, %v2410
        %v2412 = vpop.f32.mrf.mxu0
        %v2413 = vadd.f32 %v2223, %v2412
        %2414 = vmatprep.mubr.f32.mxu0 0.0
        %2415 = vmatmul.mubr.f32.gmra.mxu0 %v2241
        %v2416 = vpop.f32.mrf.mxu0
        %v2417 = vadd.f32 %v2228, %v2416
        %v2418 = vpop.f32.mrf.mxu0
        %v2419 = vadd.f32 %v2228, %v2418
        %2420 = vdwg.mxu0
        %v2421 = vand.u32 2147483647, %v2310
        %vm2422 = vcmp.le.f32.partialorder %v2421, 0.7853982
        %vm2423 = vcmp.lt.s32.totalorder %v2310, 0
        %v2424 = vand.u32 %v2310, 2139095040
        %v2425 = vshrl.u32 %v2424, 23
        %v2426 = vsub.s32 %v2425, 127
        %v2427 = vand.u32 2147483647, %v2310
        %v2428 = vand.u32 %v2427, 8388607
        %v2429 = vor.u32 %v2428, 8388608
        %v2430 = vsub.s32 0, %v2429
        %v2431 = vadd.s32 %v2426, 1
        %vm2432 = vcmp.gt.s32.totalorder %v2431, 0
        %v2433 = vsel %vm2432, %v2431, 0
        %v2434 = vshrl.u32 %v2433, 5
        %v2435 = vand.u32 %v2433, 31
        %v2436 = vsub.s32 32, %v2435
        %v2437 = vshrl.u32 683565275, %v2436
        %v2438 = vshll.u32 683565275, %v2435
        %v2439 = vshrl.u32 2475754826, %v2436
        %v2440 = vor.u32 %v2438, %v2439
        %v2441 = vshll.u32 2475754826, %v2435
        %v2442 = vshrl.u32 2131351028, %v2436
        %v2443 = vor.u32 %v2441, %v2442
        %v2444 = vshll.u32 2131351028, %v2435
        %v2445 = vshrl.u32 2102212464, %v2436
        %v2446 = vor.u32 %v2444, %v2445
        %v2447 = vshll.u32 2102212464, %v2435
        %v2448 = vshrl.u32 920167782, %v2436
        %v2449 = vor.u32 %v2447, %v2448
        %v2450 = vshll.u32 920167782, %v2435
        %v2451 = vshrl.u32 1326507024, %v2436
        %v2452 = vor.u32 %v2450, %v2451
        %vm2453 = vcmp.lt.s32.totalorder %v2434, 1
        %vm2454 = vcmp.lt.s32.totalorder %v2434, 2
        %vm2455 = vcmp.lt.s32.totalorder %v2434, 3
        %vm2456 = vcmp.lt.s32.totalorder %v2434, 4
        %v2457 = vsel %vm2453, %v2437, %v2440
        %v2458 = vsel %vm2456, %v2446, 2102212464
        %v2459 = vsel %vm2455, %v2443, %v2458
        %v2460 = vsel %vm2454, %v2457, %v2459
        %v2461 = vsel %vm2453, %v2440, %v2443
        %v2462 = vsel %vm2456, %v2449, 920167782
        %v2463 = vsel %vm2455, %v2446, %v2462
        %v2464 = vsel %vm2454, %v2461, %v2463
        %v2465 = vsel %vm2453, %v2443, %v2446
        %v2466 = vsel %vm2456, %v2452, 1326507024
        %v2467 = vsel %vm2455, %v2449, %v2466
        %v2468 = vsel %vm2454, %v2465, %v2467
        %v2469 = vshll.u32 %v2429, 8
        %v2470 = vmul.u32.u64.compose %v2469, %v2468
        %v2471 = vextract.low.u32 %v2470
        %v2472 = vextract.high.u32 %v2470
        %v2473 = vmul.u32.u64.compose %v2469, %v2464
        %v2474 = vextract.low.u32 %v2473
        %v2475 = vextract.high.u32 %v2473
        %v2476 = vmul.u32 %v2469, %v2460
        %v2477 = vadd.s32 %v2472, %v2474
        %vm2478 = vc.u32 %v2472, %v2474
        %v2479 = vadd.s32 %v2475, 1
        %v2480 = vsel %vm2478, %v2479, %v2475
        %v2481 = vadd.s32 %v2476, %v2480
        %v2482 = vadd.s32 %v2481, 536870912
        %v2483 = vshrl.u32 %v2482, 30
        %v2484 = vshll.u32 %v2483, 30
        %v2485 = vsub.s32 %v2481, %v2484
        %vm2486 = vcmp.lt.s32.totalorder %v2485, 0
        %v2487 = vsub.s32 0, %v2485
        %v2488 = vsel %vm2486, %v2487, %v2485
        %v2489 = vclz %v2488
        %v2490 = vsub.s32 %v2489, 2
        %vm2491 = vcmp.gt.s32.totalorder 0, %v2490
        %v2492 = vsel %vm2491, 0, %v2490
        %v2493 = vsub.s32 32, %v2492
        %v2494 = vshll.u32 %v2485, %v2492
        %v2495 = vshrl.u32 %v2477, %v2493
        %v2496 = vor.u32 %v2494, %v2495
        %v2497 = vsub.s32 4294967266, %v2492
        %v2498 = vadd.s32 %v2497, 127
        %v2499 = vshll.u32 %v2498, 23
        %v2500 = vor.u32 4788187, %v2499
        %v2501 = vand.u32 2147483647, %v2500
        %v2503 = vcvt.s32.f32 %v2496
        %v2504 = vmul.f32 %v2503, %v2501
        %v2505 = vxor.u32 %v2504, 2147483648
        %v2506 = vsel %vm2423, %v2505, %v2504
        %v2507 = vsub.s32 4, %v2483
        %v2508 = vsel %vm2423, %v2507, %v2483
        %v2509 = vsel %vm2422, %v2310, %v2506
        %v2510 = vsel %vm2422, 0, %v2508
        %v2511 = vcosq.f32.pop %v2509
        %v2512 = vsinq.f32.pop %v2509
        %vm2513 = vweird.f32 %v2310
        %v2514 = vadd.s32 %v2510, 3
        %v2515 = vand.u32 %v2514, 3
        %vm2516 = vcmp.lt.s32.totalorder %v2515, 2
        %vm2517 = vcmp.eq.s32.totalorder %v2515, 0
        %v2518 = vxor.u32 %v2512, 2147483648
        %v2519 = vsel %vm2517, %v2511, %v2518
        %vm2520 = vcmp.eq.s32.totalorder %v2515, 2
        %v2521 = vxor.u32 %v2511, 2147483648
        %v2522 = vsel %vm2520, %v2521, %v2512
        %v2523 = vsel %vm2516, %v2519, %v2522
        %v2524 = vsel %vm2513, nan, %v2523
        %v2525 = vand.u32 2147483647, %v2312
        %vm2526 = vcmp.le.f32.partialorder %v2525, 0.7853982
        %vm2527 = vcmp.lt.s32.totalorder %v2312, 0
        %v2528 = vand.u32 %v2312, 2139095040
        %v2529 = vshrl.u32 %v2528, 23
        %v2530 = vsub.s32 %v2529, 127
        %v2531 = vand.u32 2147483647, %v2312
        %v2532 = vand.u32 %v2531, 8388607
        %v2533 = vor.u32 %v2532, 8388608
        %v2534 = vsub.s32 0, %v2533
        %v2535 = vadd.s32 %v2530, 1
        %vm2536 = vcmp.gt.s32.totalorder %v2535, 0
        %v2537 = vsel %vm2536, %v2535, 0
        %v2538 = vshrl.u32 %v2537, 5
        %v2539 = vand.u32 %v2537, 31
        %v2540 = vsub.s32 32, %v2539
        %v2541 = vshrl.u32 683565275, %v2540
        %v2542 = vshll.u32 683565275, %v2539
        %v2543 = vshrl.u32 2475754826, %v2540
        %v2544 = vor.u32 %v2542, %v2543
        %v2545 = vshll.u32 2475754826, %v2539
        %v2546 = vshrl.u32 2131351028, %v2540
        %v2547 = vor.u32 %v2545, %v2546
        %v2548 = vshll.u32 2131351028, %v2539
        %v2549 = vshrl.u32 2102212464, %v2540
        %v2550 = vor.u32 %v2548, %v2549
        %v2551 = vshll.u32 2102212464, %v2539
        %v2552 = vshrl.u32 920167782, %v2540
        %v2553 = vor.u32 %v2551, %v2552
        %v2554 = vshll.u32 920167782, %v2539
        %v2555 = vshrl.u32 1326507024, %v2540
        %v2556 = vor.u32 %v2554, %v2555
        %vm2557 = vcmp.lt.s32.totalorder %v2538, 1
        %vm2558 = vcmp.lt.s32.totalorder %v2538, 2
        %vm2559 = vcmp.lt.s32.totalorder %v2538, 3
        %vm2560 = vcmp.lt.s32.totalorder %v2538, 4
        %v2561 = vsel %vm2557, %v2541, %v2544
        %v2562 = vsel %vm2560, %v2550, 2102212464
        %v2563 = vsel %vm2559, %v2547, %v2562
        %v2564 = vsel %vm2558, %v2561, %v2563
        %v2565 = vsel %vm2557, %v2544, %v2547
        %v2566 = vsel %vm2560, %v2553, 920167782
        %v2567 = vsel %vm2559, %v2550, %v2566
        %v2568 = vsel %vm2558, %v2565, %v2567
        %v2569 = vsel %vm2557, %v2547, %v2550
        %v2570 = vsel %vm2560, %v2556, 1326507024
        %v2571 = vsel %vm2559, %v2553, %v2570
        %v2572 = vsel %vm2558, %v2569, %v2571
        %v2573 = vshll.u32 %v2533, 8
        %v2574 = vmul.u32.u64.compose %v2573, %v2572
        %v2575 = vextract.low.u32 %v2574
        %v2576 = vextract.high.u32 %v2574
        %v2577 = vmul.u32.u64.compose %v2573, %v2568
        %v2578 = vextract.low.u32 %v2577
        %v2579 = vextract.high.u32 %v2577
        %v2580 = vmul.u32 %v2573, %v2564
        %v2581 = vadd.s32 %v2576, %v2578
        %vm2582 = vc.u32 %v2576, %v2578
        %v2583 = vadd.s32 %v2579, 1
        %v2584 = vsel %vm2582, %v2583, %v2579
        %v2585 = vadd.s32 %v2580, %v2584
        %v2586 = vadd.s32 %v2585, 536870912
        %v2587 = vshrl.u32 %v2586, 30
        %v2588 = vshll.u32 %v2587, 30
        %v2589 = vsub.s32 %v2585, %v2588
        %vm2590 = vcmp.lt.s32.totalorder %v2589, 0
        %v2591 = vsub.s32 0, %v2589
        %v2592 = vsel %vm2590, %v2591, %v2589
        %v2593 = vclz %v2592
        %v2594 = vsub.s32 %v2593, 2
        %vm2595 = vcmp.gt.s32.totalorder 0, %v2594
        %v2596 = vsel %vm2595, 0, %v2594
        %v2597 = vsub.s32 32, %v2596
        %v2598 = vshll.u32 %v2589, %v2596
        %v2599 = vshrl.u32 %v2581, %v2597
        %v2600 = vor.u32 %v2598, %v2599
        %v2601 = vsub.s32 4294967266, %v2596
        %v2602 = vadd.s32 %v2601, 127
        %v2603 = vshll.u32 %v2602, 23
        %v2604 = vor.u32 4788187, %v2603
        %v2605 = vand.u32 2147483647, %v2604
        %v2607 = vcvt.s32.f32 %v2600
        %v2608 = vmul.f32 %v2607, %v2605
        %v2609 = vxor.u32 %v2608, 2147483648
        %v2610 = vsel %vm2527, %v2609, %v2608
        %v2611 = vsub.s32 4, %v2587
        %v2612 = vsel %vm2527, %v2611, %v2587
        %v2613 = vsel %vm2526, %v2312, %v2610
        %v2614 = vsel %vm2526, 0, %v2612
        %v2615 = vcosq.f32.pop %v2613
        %v2616 = vsinq.f32.pop %v2613
        %vm2617 = vweird.f32 %v2312
        %v2618 = vadd.s32 %v2614, 3
        %v2619 = vand.u32 %v2618, 3
        %vm2620 = vcmp.lt.s32.totalorder %v2619, 2
        %vm2621 = vcmp.eq.s32.totalorder %v2619, 0
        %v2622 = vxor.u32 %v2616, 2147483648
        %v2623 = vsel %vm2621, %v2615, %v2622
        %vm2624 = vcmp.eq.s32.totalorder %v2619, 2
        %v2625 = vxor.u32 %v2615, 2147483648
        %v2626 = vsel %vm2624, %v2625, %v2616
        %v2627 = vsel %vm2620, %v2623, %v2626
        %v2628 = vsel %vm2617, nan, %v2627
        %v2629 = vand.u32 2147483647, %v2399
        %vm2630 = vcmp.le.f32.partialorder %v2629, 0.7853982
        %vm2631 = vcmp.lt.s32.totalorder %v2399, 0
        %v2632 = vand.u32 %v2399, 2139095040
        %v2633 = vshrl.u32 %v2632, 23
        %v2634 = vsub.s32 %v2633, 127
        %v2635 = vand.u32 2147483647, %v2399
        %v2636 = vand.u32 %v2635, 8388607
        %v2637 = vor.u32 %v2636, 8388608
        %v2638 = vsub.s32 0, %v2637
        %v2639 = vadd.s32 %v2634, 1
        %vm2640 = vcmp.gt.s32.totalorder %v2639, 0
        %v2641 = vsel %vm2640, %v2639, 0
        %v2642 = vshrl.u32 %v2641, 5
        %v2643 = vand.u32 %v2641, 31
        %v2644 = vsub.s32 32, %v2643
        %v2645 = vshrl.u32 683565275, %v2644
        %v2646 = vshll.u32 683565275, %v2643
        %v2647 = vshrl.u32 2475754826, %v2644
        %v2648 = vor.u32 %v2646, %v2647
        %v2649 = vshll.u32 2475754826, %v2643
        %v2650 = vshrl.u32 2131351028, %v2644
        %v2651 = vor.u32 %v2649, %v2650
        %v2652 = vshll.u32 2131351028, %v2643
        %v2653 = vshrl.u32 2102212464, %v2644
        %v2654 = vor.u32 %v2652, %v2653
        %v2655 = vshll.u32 2102212464, %v2643
        %v2656 = vshrl.u32 920167782, %v2644
        %v2657 = vor.u32 %v2655, %v2656
        %v2658 = vshll.u32 920167782, %v2643
        %v2659 = vshrl.u32 1326507024, %v2644
        %v2660 = vor.u32 %v2658, %v2659
        %vm2661 = vcmp.lt.s32.totalorder %v2642, 1
        %vm2662 = vcmp.lt.s32.totalorder %v2642, 2
        %vm2663 = vcmp.lt.s32.totalorder %v2642, 3
        %vm2664 = vcmp.lt.s32.totalorder %v2642, 4
        %v2665 = vsel %vm2661, %v2645, %v2648
        %v2666 = vsel %vm2664, %v2654, 2102212464
        %v2667 = vsel %vm2663, %v2651, %v2666
        %v2668 = vsel %vm2662, %v2665, %v2667
        %v2669 = vsel %vm2661, %v2648, %v2651
        %v2670 = vsel %vm2664, %v2657, 920167782
        %v2671 = vsel %vm2663, %v2654, %v2670
        %v2672 = vsel %vm2662, %v2669, %v2671
        %v2673 = vsel %vm2661, %v2651, %v2654
        %v2674 = vsel %vm2664, %v2660, 1326507024
        %v2675 = vsel %vm2663, %v2657, %v2674
        %v2676 = vsel %vm2662, %v2673, %v2675
        %v2677 = vshll.u32 %v2637, 8
        %v2678 = vmul.u32.u64.compose %v2677, %v2676
        %v2679 = vextract.low.u32 %v2678
        %v2680 = vextract.high.u32 %v2678
        %v2681 = vmul.u32.u64.compose %v2677, %v2672
        %v2682 = vextract.low.u32 %v2681
        %v2683 = vextract.high.u32 %v2681
        %v2684 = vmul.u32 %v2677, %v2668
        %v2685 = vadd.s32 %v2680, %v2682
        %vm2686 = vc.u32 %v2680, %v2682
        %v2687 = vadd.s32 %v2683, 1
        %v2688 = vsel %vm2686, %v2687, %v2683
        %v2689 = vadd.s32 %v2684, %v2688
        %v2690 = vadd.s32 %v2689, 536870912
        %v2691 = vshrl.u32 %v2690, 30
        %v2692 = vshll.u32 %v2691, 30
        %v2693 = vsub.s32 %v2689, %v2692
        %vm2694 = vcmp.lt.s32.totalorder %v2693, 0
        %v2695 = vsub.s32 0, %v2693
        %v2696 = vsel %vm2694, %v2695, %v2693
        %v2697 = vclz %v2696
        %v2698 = vsub.s32 %v2697, 2
        %vm2699 = vcmp.gt.s32.totalorder 0, %v2698
        %v2700 = vsel %vm2699, 0, %v2698
        %v2701 = vsub.s32 32, %v2700
        %v2702 = vshll.u32 %v2693, %v2700
        %v2703 = vshrl.u32 %v2685, %v2701
        %v2704 = vor.u32 %v2702, %v2703
        %v2705 = vsub.s32 4294967266, %v2700
        %v2706 = vadd.s32 %v2705, 127
        %v2707 = vshll.u32 %v2706, 23
        %v2708 = vor.u32 4788187, %v2707
        %v2709 = vand.u32 2147483647, %v2708
        %v2711 = vcvt.s32.f32 %v2704
        %v2712 = vmul.f32 %v2711, %v2709
        %v2713 = vxor.u32 %v2712, 2147483648
        %v2714 = vsel %vm2631, %v2713, %v2712
        %v2715 = vsub.s32 4, %v2691
        %v2716 = vsel %vm2631, %v2715, %v2691
        %v2717 = vsel %vm2630, %v2399, %v2714
        %v2718 = vsel %vm2630, 0, %v2716
        %v2719 = vcosq.f32.pop %v2717
        %v2720 = vsinq.f32.pop %v2717
        %vm2721 = vweird.f32 %v2399
        %v2722 = vadd.s32 %v2718, 3
        %v2723 = vand.u32 %v2722, 3
        %vm2724 = vcmp.lt.s32.totalorder %v2723, 2
        %vm2725 = vcmp.eq.s32.totalorder %v2723, 0
        %v2726 = vxor.u32 %v2720, 2147483648
        %v2727 = vsel %vm2725, %v2719, %v2726
        %vm2728 = vcmp.eq.s32.totalorder %v2723, 2
        %v2729 = vxor.u32 %v2719, 2147483648
        %v2730 = vsel %vm2728, %v2729, %v2720
        %v2731 = vsel %vm2724, %v2727, %v2730
        %v2732 = vsel %vm2721, nan, %v2731
        %v2733 = vand.u32 2147483647, %v2401
        %vm2734 = vcmp.le.f32.partialorder %v2733, 0.7853982
        %vm2735 = vcmp.lt.s32.totalorder %v2401, 0
        %v2736 = vand.u32 %v2401, 2139095040
        %v2737 = vshrl.u32 %v2736, 23
        %v2738 = vsub.s32 %v2737, 127
        %v2739 = vand.u32 2147483647, %v2401
        %v2740 = vand.u32 %v2739, 8388607
        %v2741 = vor.u32 %v2740, 8388608
        %v2742 = vsub.s32 0, %v2741
        %v2743 = vadd.s32 %v2738, 1
        %vm2744 = vcmp.gt.s32.totalorder %v2743, 0
        %v2745 = vsel %vm2744, %v2743, 0
        %v2746 = vshrl.u32 %v2745, 5
        %v2747 = vand.u32 %v2745, 31
        %v2748 = vsub.s32 32, %v2747
        %v2749 = vshrl.u32 683565275, %v2748
        %v2750 = vshll.u32 683565275, %v2747
        %v2751 = vshrl.u32 2475754826, %v2748
        %v2752 = vor.u32 %v2750, %v2751
        %v2753 = vshll.u32 2475754826, %v2747
        %v2754 = vshrl.u32 2131351028, %v2748
        %v2755 = vor.u32 %v2753, %v2754
        %v2756 = vshll.u32 2131351028, %v2747
        %v2757 = vshrl.u32 2102212464, %v2748
        %v2758 = vor.u32 %v2756, %v2757
        %v2759 = vshll.u32 2102212464, %v2747
        %v2760 = vshrl.u32 920167782, %v2748
        %v2761 = vor.u32 %v2759, %v2760
        %v2762 = vshll.u32 920167782, %v2747
        %v2763 = vshrl.u32 1326507024, %v2748
        %v2764 = vor.u32 %v2762, %v2763
        %vm2765 = vcmp.lt.s32.totalorder %v2746, 1
        %vm2766 = vcmp.lt.s32.totalorder %v2746, 2
        %vm2767 = vcmp.lt.s32.totalorder %v2746, 3
        %vm2768 = vcmp.lt.s32.totalorder %v2746, 4
        %v2769 = vsel %vm2765, %v2749, %v2752
        %v2770 = vsel %vm2768, %v2758, 2102212464
        %v2771 = vsel %vm2767, %v2755, %v2770
        %v2772 = vsel %vm2766, %v2769, %v2771
        %v2773 = vsel %vm2765, %v2752, %v2755
        %v2774 = vsel %vm2768, %v2761, 920167782
        %v2775 = vsel %vm2767, %v2758, %v2774
        %v2776 = vsel %vm2766, %v2773, %v2775
        %v2777 = vsel %vm2765, %v2755, %v2758
        %v2778 = vsel %vm2768, %v2764, 1326507024
        %v2779 = vsel %vm2767, %v2761, %v2778
        %v2780 = vsel %vm2766, %v2777, %v2779
        %v2781 = vshll.u32 %v2741, 8
        %v2782 = vmul.u32.u64.compose %v2781, %v2780
        %v2783 = vextract.low.u32 %v2782
        %v2784 = vextract.high.u32 %v2782
        %v2785 = vmul.u32.u64.compose %v2781, %v2776
        %v2786 = vextract.low.u32 %v2785
        %v2787 = vextract.high.u32 %v2785
        %v2788 = vmul.u32 %v2781, %v2772
        %v2789 = vadd.s32 %v2784, %v2786
        %vm2790 = vc.u32 %v2784, %v2786
        %v2791 = vadd.s32 %v2787, 1
        %v2792 = vsel %vm2790, %v2791, %v2787
        %v2793 = vadd.s32 %v2788, %v2792
        %v2794 = vadd.s32 %v2793, 536870912
        %v2795 = vshrl.u32 %v2794, 30
        %v2796 = vshll.u32 %v2795, 30
        %v2797 = vsub.s32 %v2793, %v2796
        %vm2798 = vcmp.lt.s32.totalorder %v2797, 0
        %v2799 = vsub.s32 0, %v2797
        %v2800 = vsel %vm2798, %v2799, %v2797
        %v2801 = vclz %v2800
        %v2802 = vsub.s32 %v2801, 2
        %vm2803 = vcmp.gt.s32.totalorder 0, %v2802
        %v2804 = vsel %vm2803, 0, %v2802
        %v2805 = vsub.s32 32, %v2804
        %v2806 = vshll.u32 %v2797, %v2804
        %v2807 = vshrl.u32 %v2789, %v2805
        %v2808 = vor.u32 %v2806, %v2807
        %v2809 = vsub.s32 4294967266, %v2804
        %v2810 = vadd.s32 %v2809, 127
        %v2811 = vshll.u32 %v2810, 23
        %v2812 = vor.u32 4788187, %v2811
        %v2813 = vand.u32 2147483647, %v2812
        %v2815 = vcvt.s32.f32 %v2808
        %v2816 = vmul.f32 %v2815, %v2813
        %v2817 = vxor.u32 %v2816, 2147483648
        %v2818 = vsel %vm2735, %v2817, %v2816
        %v2819 = vsub.s32 4, %v2795
        %v2820 = vsel %vm2735, %v2819, %v2795
        %v2821 = vsel %vm2734, %v2401, %v2818
        %v2822 = vsel %vm2734, 0, %v2820
        %v2823 = vcosq.f32.pop %v2821
        %v2824 = vsinq.f32.pop %v2821
        %vm2825 = vweird.f32 %v2401
        %v2826 = vadd.s32 %v2822, 3
        %v2827 = vand.u32 %v2826, 3
        %vm2828 = vcmp.lt.s32.totalorder %v2827, 2
        %vm2829 = vcmp.eq.s32.totalorder %v2827, 0
        %v2830 = vxor.u32 %v2824, 2147483648
        %v2831 = vsel %vm2829, %v2823, %v2830
        %vm2832 = vcmp.eq.s32.totalorder %v2827, 2
        %v2833 = vxor.u32 %v2823, 2147483648
        %v2834 = vsel %vm2832, %v2833, %v2824
        %v2835 = vsel %vm2828, %v2831, %v2834
        %v2836 = vsel %vm2825, nan, %v2835
        %v2837 = vand.u32 2147483647, %v2316
        %vm2838 = vcmp.le.f32.partialorder %v2837, 0.7853982
        %vm2839 = vcmp.lt.s32.totalorder %v2316, 0
        %v2840 = vand.u32 %v2316, 2139095040
        %v2841 = vshrl.u32 %v2840, 23
        %v2842 = vsub.s32 %v2841, 127
        %v2843 = vand.u32 2147483647, %v2316
        %v2844 = vand.u32 %v2843, 8388607
        %v2845 = vor.u32 %v2844, 8388608
        %v2846 = vsub.s32 0, %v2845
        %v2847 = vadd.s32 %v2842, 1
        %vm2848 = vcmp.gt.s32.totalorder %v2847, 0
        %v2849 = vsel %vm2848, %v2847, 0
        %v2850 = vshrl.u32 %v2849, 5
        %v2851 = vand.u32 %v2849, 31
        %v2852 = vsub.s32 32, %v2851
        %v2853 = vshrl.u32 683565275, %v2852
        %v2854 = vshll.u32 683565275, %v2851
        %v2855 = vshrl.u32 2475754826, %v2852
        %v2856 = vor.u32 %v2854, %v2855
        %v2857 = vshll.u32 2475754826, %v2851
        %v2858 = vshrl.u32 2131351028, %v2852
        %v2859 = vor.u32 %v2857, %v2858
        %v2860 = vshll.u32 2131351028, %v2851
        %v2861 = vshrl.u32 2102212464, %v2852
        %v2862 = vor.u32 %v2860, %v2861
        %v2863 = vshll.u32 2102212464, %v2851
        %v2864 = vshrl.u32 920167782, %v2852
        %v2865 = vor.u32 %v2863, %v2864
        %v2866 = vshll.u32 920167782, %v2851
        %v2867 = vshrl.u32 1326507024, %v2852
        %v2868 = vor.u32 %v2866, %v2867
        %vm2869 = vcmp.lt.s32.totalorder %v2850, 1
        %vm2870 = vcmp.lt.s32.totalorder %v2850, 2
        %vm2871 = vcmp.lt.s32.totalorder %v2850, 3
        %vm2872 = vcmp.lt.s32.totalorder %v2850, 4
        %v2873 = vsel %vm2869, %v2853, %v2856
        %v2874 = vsel %vm2872, %v2862, 2102212464
        %v2875 = vsel %vm2871, %v2859, %v2874
        %v2876 = vsel %vm2870, %v2873, %v2875
        %v2877 = vsel %vm2869, %v2856, %v2859
        %v2878 = vsel %vm2872, %v2865, 920167782
        %v2879 = vsel %vm2871, %v2862, %v2878
        %v2880 = vsel %vm2870, %v2877, %v2879
        %v2881 = vsel %vm2869, %v2859, %v2862
        %v2882 = vsel %vm2872, %v2868, 1326507024
        %v2883 = vsel %vm2871, %v2865, %v2882
        %v2884 = vsel %vm2870, %v2881, %v2883
        %v2885 = vshll.u32 %v2845, 8
        %v2886 = vmul.u32.u64.compose %v2885, %v2884
        %v2887 = vextract.low.u32 %v2886
        %v2888 = vextract.high.u32 %v2886
        %v2889 = vmul.u32.u64.compose %v2885, %v2880
        %v2890 = vextract.low.u32 %v2889
        %v2891 = vextract.high.u32 %v2889
        %v2892 = vmul.u32 %v2885, %v2876
        %v2893 = vadd.s32 %v2888, %v2890
        %vm2894 = vc.u32 %v2888, %v2890
        %v2895 = vadd.s32 %v2891, 1
        %v2896 = vsel %vm2894, %v2895, %v2891
        %v2897 = vadd.s32 %v2892, %v2896
        %v2898 = vadd.s32 %v2897, 536870912
        %v2899 = vshrl.u32 %v2898, 30
        %v2900 = vshll.u32 %v2899, 30
        %v2901 = vsub.s32 %v2897, %v2900
        %vm2902 = vcmp.lt.s32.totalorder %v2901, 0
        %v2903 = vsub.s32 0, %v2901
        %v2904 = vsel %vm2902, %v2903, %v2901
        %v2905 = vclz %v2904
        %v2906 = vsub.s32 %v2905, 2
        %vm2907 = vcmp.gt.s32.totalorder 0, %v2906
        %v2908 = vsel %vm2907, 0, %v2906
        %v2909 = vsub.s32 32, %v2908
        %v2910 = vshll.u32 %v2901, %v2908
        %v2911 = vshrl.u32 %v2893, %v2909
        %v2912 = vor.u32 %v2910, %v2911
        %v2913 = vsub.s32 4294967266, %v2908
        %v2914 = vadd.s32 %v2913, 127
        %v2915 = vshll.u32 %v2914, 23
        %v2916 = vor.u32 4788187, %v2915
        %v2917 = vand.u32 2147483647, %v2916
        %v2919 = vcvt.s32.f32 %v2912
        %v2920 = vmul.f32 %v2919, %v2917
        %v2921 = vxor.u32 %v2920, 2147483648
        %v2922 = vsel %vm2839, %v2921, %v2920
        %v2923 = vsub.s32 4, %v2899
        %v2924 = vsel %vm2839, %v2923, %v2899
        %v2925 = vsel %vm2838, %v2316, %v2922
        %v2926 = vsel %vm2838, 0, %v2924
        %v2927 = vcosq.f32.pop %v2925
        %v2928 = vsinq.f32.pop %v2925
        %vm2929 = vweird.f32 %v2316
        %v2930 = vadd.s32 %v2926, 3
        %v2931 = vand.u32 %v2930, 3
        %vm2932 = vcmp.lt.s32.totalorder %v2931, 2
        %vm2933 = vcmp.eq.s32.totalorder %v2931, 0
        %v2934 = vxor.u32 %v2928, 2147483648
        %v2935 = vsel %vm2933, %v2927, %v2934
        %vm2936 = vcmp.eq.s32.totalorder %v2931, 2
        %v2937 = vxor.u32 %v2927, 2147483648
        %v2938 = vsel %vm2936, %v2937, %v2928
        %v2939 = vsel %vm2932, %v2935, %v2938
        %v2940 = vsel %vm2929, nan, %v2939
        %v2941 = vand.u32 2147483647, %v2318
        %vm2942 = vcmp.le.f32.partialorder %v2941, 0.7853982
        %vm2943 = vcmp.lt.s32.totalorder %v2318, 0
        %v2944 = vand.u32 %v2318, 2139095040
        %v2945 = vshrl.u32 %v2944, 23
        %v2946 = vsub.s32 %v2945, 127
        %v2947 = vand.u32 2147483647, %v2318
        %v2948 = vand.u32 %v2947, 8388607
        %v2949 = vor.u32 %v2948, 8388608
        %v2950 = vsub.s32 0, %v2949
        %v2951 = vadd.s32 %v2946, 1
        %vm2952 = vcmp.gt.s32.totalorder %v2951, 0
        %v2953 = vsel %vm2952, %v2951, 0
        %v2954 = vshrl.u32 %v2953, 5
        %v2955 = vand.u32 %v2953, 31
        %v2956 = vsub.s32 32, %v2955
        %v2957 = vshrl.u32 683565275, %v2956
        %v2958 = vshll.u32 683565275, %v2955
        %v2959 = vshrl.u32 2475754826, %v2956
        %v2960 = vor.u32 %v2958, %v2959
        %v2961 = vshll.u32 2475754826, %v2955
        %v2962 = vshrl.u32 2131351028, %v2956
        %v2963 = vor.u32 %v2961, %v2962
        %v2964 = vshll.u32 2131351028, %v2955
        %v2965 = vshrl.u32 2102212464, %v2956
        %v2966 = vor.u32 %v2964, %v2965
        %v2967 = vshll.u32 2102212464, %v2955
        %v2968 = vshrl.u32 920167782, %v2956
        %v2969 = vor.u32 %v2967, %v2968
        %v2970 = vshll.u32 920167782, %v2955
        %v2971 = vshrl.u32 1326507024, %v2956
        %v2972 = vor.u32 %v2970, %v2971
        %vm2973 = vcmp.lt.s32.totalorder %v2954, 1
        %vm2974 = vcmp.lt.s32.totalorder %v2954, 2
        %vm2975 = vcmp.lt.s32.totalorder %v2954, 3
        %vm2976 = vcmp.lt.s32.totalorder %v2954, 4
        %v2977 = vsel %vm2973, %v2957, %v2960
        %v2978 = vsel %vm2976, %v2966, 2102212464
        %v2979 = vsel %vm2975, %v2963, %v2978
        %v2980 = vsel %vm2974, %v2977, %v2979
        %v2981 = vsel %vm2973, %v2960, %v2963
        %v2982 = vsel %vm2976, %v2969, 920167782
        %v2983 = vsel %vm2975, %v2966, %v2982
        %v2984 = vsel %vm2974, %v2981, %v2983
        %v2985 = vsel %vm2973, %v2963, %v2966
        %v2986 = vsel %vm2976, %v2972, 1326507024
        %v2987 = vsel %vm2975, %v2969, %v2986
        %v2988 = vsel %vm2974, %v2985, %v2987
        %v2989 = vshll.u32 %v2949, 8
        %v2990 = vmul.u32.u64.compose %v2989, %v2988
        %v2991 = vextract.low.u32 %v2990
        %v2992 = vextract.high.u32 %v2990
        %v2993 = vmul.u32.u64.compose %v2989, %v2984
        %v2994 = vextract.low.u32 %v2993
        %v2995 = vextract.high.u32 %v2993
        %v2996 = vmul.u32 %v2989, %v2980
        %v2997 = vadd.s32 %v2992, %v2994
        %vm2998 = vc.u32 %v2992, %v2994
        %v2999 = vadd.s32 %v2995, 1
        %v3000 = vsel %vm2998, %v2999, %v2995
        %v3001 = vadd.s32 %v2996, %v3000
        %v3002 = vadd.s32 %v3001, 536870912
        %v3003 = vshrl.u32 %v3002, 30
        %v3004 = vshll.u32 %v3003, 30
        %v3005 = vsub.s32 %v3001, %v3004
        %vm3006 = vcmp.lt.s32.totalorder %v3005, 0
        %v3007 = vsub.s32 0, %v3005
        %v3008 = vsel %vm3006, %v3007, %v3005
        %v3009 = vclz %v3008
        %v3010 = vsub.s32 %v3009, 2
        %vm3011 = vcmp.gt.s32.totalorder 0, %v3010
        %v3012 = vsel %vm3011, 0, %v3010
        %v3013 = vsub.s32 32, %v3012
        %v3014 = vshll.u32 %v3005, %v3012
        %v3015 = vshrl.u32 %v2997, %v3013
        %v3016 = vor.u32 %v3014, %v3015
        %v3017 = vsub.s32 4294967266, %v3012
        %v3018 = vadd.s32 %v3017, 127
        %v3019 = vshll.u32 %v3018, 23
        %v3020 = vor.u32 4788187, %v3019
        %v3021 = vand.u32 2147483647, %v3020
        %v3023 = vcvt.s32.f32 %v3016
        %v3024 = vmul.f32 %v3023, %v3021
        %v3025 = vxor.u32 %v3024, 2147483648
        %v3026 = vsel %vm2943, %v3025, %v3024
        %v3027 = vsub.s32 4, %v3003
        %v3028 = vsel %vm2943, %v3027, %v3003
        %v3029 = vsel %vm2942, %v2318, %v3026
        %v3030 = vsel %vm2942, 0, %v3028
        %v3031 = vcosq.f32.pop %v3029
        %v3032 = vsinq.f32.pop %v3029
        %vm3033 = vweird.f32 %v2318
        %v3034 = vadd.s32 %v3030, 3
        %v3035 = vand.u32 %v3034, 3
        %vm3036 = vcmp.lt.s32.totalorder %v3035, 2
        %vm3037 = vcmp.eq.s32.totalorder %v3035, 0
        %v3038 = vxor.u32 %v3032, 2147483648
        %v3039 = vsel %vm3037, %v3031, %v3038
        %vm3040 = vcmp.eq.s32.totalorder %v3035, 2
        %v3041 = vxor.u32 %v3031, 2147483648
        %v3042 = vsel %vm3040, %v3041, %v3032
        %v3043 = vsel %vm3036, %v3039, %v3042
        %v3044 = vsel %vm3033, nan, %v3043
        %v3045 = vand.u32 2147483647, %v2405
        %vm3046 = vcmp.le.f32.partialorder %v3045, 0.7853982
        %vm3047 = vcmp.lt.s32.totalorder %v2405, 0
        %v3048 = vand.u32 %v2405, 2139095040
        %v3049 = vshrl.u32 %v3048, 23
        %v3050 = vsub.s32 %v3049, 127
        %v3051 = vand.u32 2147483647, %v2405
        %v3052 = vand.u32 %v3051, 8388607
        %v3053 = vor.u32 %v3052, 8388608
        %v3054 = vsub.s32 0, %v3053
        %v3055 = vadd.s32 %v3050, 1
        %vm3056 = vcmp.gt.s32.totalorder %v3055, 0
        %v3057 = vsel %vm3056, %v3055, 0
        %v3058 = vshrl.u32 %v3057, 5
        %v3059 = vand.u32 %v3057, 31
        %v3060 = vsub.s32 32, %v3059
        %v3061 = vshrl.u32 683565275, %v3060
        %v3062 = vshll.u32 683565275, %v3059
        %v3063 = vshrl.u32 2475754826, %v3060
        %v3064 = vor.u32 %v3062, %v3063
        %v3065 = vshll.u32 2475754826, %v3059
        %v3066 = vshrl.u32 2131351028, %v3060
        %v3067 = vor.u32 %v3065, %v3066
        %v3068 = vshll.u32 2131351028, %v3059
        %v3069 = vshrl.u32 2102212464, %v3060
        %v3070 = vor.u32 %v3068, %v3069
        %v3071 = vshll.u32 2102212464, %v3059
        %v3072 = vshrl.u32 920167782, %v3060
        %v3073 = vor.u32 %v3071, %v3072
        %v3074 = vshll.u32 920167782, %v3059
        %v3075 = vshrl.u32 1326507024, %v3060
        %v3076 = vor.u32 %v3074, %v3075
        %vm3077 = vcmp.lt.s32.totalorder %v3058, 1
        %vm3078 = vcmp.lt.s32.totalorder %v3058, 2
        %vm3079 = vcmp.lt.s32.totalorder %v3058, 3
        %vm3080 = vcmp.lt.s32.totalorder %v3058, 4
        %v3081 = vsel %vm3077, %v3061, %v3064
        %v3082 = vsel %vm3080, %v3070, 2102212464
        %v3083 = vsel %vm3079, %v3067, %v3082
        %v3084 = vsel %vm3078, %v3081, %v3083
        %v3085 = vsel %vm3077, %v3064, %v3067
        %v3086 = vsel %vm3080, %v3073, 920167782
        %v3087 = vsel %vm3079, %v3070, %v3086
        %v3088 = vsel %vm3078, %v3085, %v3087
        %v3089 = vsel %vm3077, %v3067, %v3070
        %v3090 = vsel %vm3080, %v3076, 1326507024
        %v3091 = vsel %vm3079, %v3073, %v3090
        %v3092 = vsel %vm3078, %v3089, %v3091
        %v3093 = vshll.u32 %v3053, 8
        %v3094 = vmul.u32.u64.compose %v3093, %v3092
        %v3095 = vextract.low.u32 %v3094
        %v3096 = vextract.high.u32 %v3094
        %v3097 = vmul.u32.u64.compose %v3093, %v3088
        %v3098 = vextract.low.u32 %v3097
        %v3099 = vextract.high.u32 %v3097
        %v3100 = vmul.u32 %v3093, %v3084
        %v3101 = vadd.s32 %v3096, %v3098
        %vm3102 = vc.u32 %v3096, %v3098
        %v3103 = vadd.s32 %v3099, 1
        %v3104 = vsel %vm3102, %v3103, %v3099
        %v3105 = vadd.s32 %v3100, %v3104
        %v3106 = vadd.s32 %v3105, 536870912
        %v3107 = vshrl.u32 %v3106, 30
        %v3108 = vshll.u32 %v3107, 30
        %v3109 = vsub.s32 %v3105, %v3108
        %vm3110 = vcmp.lt.s32.totalorder %v3109, 0
        %v3111 = vsub.s32 0, %v3109
        %v3112 = vsel %vm3110, %v3111, %v3109
        %v3113 = vclz %v3112
        %v3114 = vsub.s32 %v3113, 2
        %vm3115 = vcmp.gt.s32.totalorder 0, %v3114
        %v3116 = vsel %vm3115, 0, %v3114
        %v3117 = vsub.s32 32, %v3116
        %v3118 = vshll.u32 %v3109, %v3116
        %v3119 = vshrl.u32 %v3101, %v3117
        %v3120 = vor.u32 %v3118, %v3119
        %v3121 = vsub.s32 4294967266, %v3116
        %v3122 = vadd.s32 %v3121, 127
        %v3123 = vshll.u32 %v3122, 23
        %v3124 = vor.u32 4788187, %v3123
        %v3125 = vand.u32 2147483647, %v3124
        %v3127 = vcvt.s32.f32 %v3120
        %v3128 = vmul.f32 %v3127, %v3125
        %v3129 = vxor.u32 %v3128, 2147483648
        %v3130 = vsel %vm3047, %v3129, %v3128
        %v3131 = vsub.s32 4, %v3107
        %v3132 = vsel %vm3047, %v3131, %v3107
        %v3133 = vsel %vm3046, %v2405, %v3130
        %v3134 = vsel %vm3046, 0, %v3132
        %v3135 = vcosq.f32.pop %v3133
        %v3136 = vsinq.f32.pop %v3133
        %vm3137 = vweird.f32 %v2405
        %v3138 = vadd.s32 %v3134, 3
        %v3139 = vand.u32 %v3138, 3
        %vm3140 = vcmp.lt.s32.totalorder %v3139, 2
        %vm3141 = vcmp.eq.s32.totalorder %v3139, 0
        %v3142 = vxor.u32 %v3136, 2147483648
        %v3143 = vsel %vm3141, %v3135, %v3142
        %vm3144 = vcmp.eq.s32.totalorder %v3139, 2
        %v3145 = vxor.u32 %v3135, 2147483648
        %v3146 = vsel %vm3144, %v3145, %v3136
        %v3147 = vsel %vm3140, %v3143, %v3146
        %v3148 = vsel %vm3137, nan, %v3147
        %v3149 = vand.u32 2147483647, %v2407
        %vm3150 = vcmp.le.f32.partialorder %v3149, 0.7853982
        %vm3151 = vcmp.lt.s32.totalorder %v2407, 0
        %v3152 = vand.u32 %v2407, 2139095040
        %v3153 = vshrl.u32 %v3152, 23
        %v3154 = vsub.s32 %v3153, 127
        %v3155 = vand.u32 2147483647, %v2407
        %v3156 = vand.u32 %v3155, 8388607
        %v3157 = vor.u32 %v3156, 8388608
        %v3158 = vsub.s32 0, %v3157
        %v3159 = vadd.s32 %v3154, 1
        %vm3160 = vcmp.gt.s32.totalorder %v3159, 0
        %v3161 = vsel %vm3160, %v3159, 0
        %v3162 = vshrl.u32 %v3161, 5
        %v3163 = vand.u32 %v3161, 31
        %v3164 = vsub.s32 32, %v3163
        %v3165 = vshrl.u32 683565275, %v3164
        %v3166 = vshll.u32 683565275, %v3163
        %v3167 = vshrl.u32 2475754826, %v3164
        %v3168 = vor.u32 %v3166, %v3167
        %v3169 = vshll.u32 2475754826, %v3163
        %v3170 = vshrl.u32 2131351028, %v3164
        %v3171 = vor.u32 %v3169, %v3170
        %v3172 = vshll.u32 2131351028, %v3163
        %v3173 = vshrl.u32 2102212464, %v3164
        %v3174 = vor.u32 %v3172, %v3173
        %v3175 = vshll.u32 2102212464, %v3163
        %v3176 = vshrl.u32 920167782, %v3164
        %v3177 = vor.u32 %v3175, %v3176
        %v3178 = vshll.u32 920167782, %v3163
        %v3179 = vshrl.u32 1326507024, %v3164
        %v3180 = vor.u32 %v3178, %v3179
        %vm3181 = vcmp.lt.s32.totalorder %v3162, 1
        %vm3182 = vcmp.lt.s32.totalorder %v3162, 2
        %vm3183 = vcmp.lt.s32.totalorder %v3162, 3
        %vm3184 = vcmp.lt.s32.totalorder %v3162, 4
        %v3185 = vsel %vm3181, %v3165, %v3168
        %v3186 = vsel %vm3184, %v3174, 2102212464
        %v3187 = vsel %vm3183, %v3171, %v3186
        %v3188 = vsel %vm3182, %v3185, %v3187
        %v3189 = vsel %vm3181, %v3168, %v3171
        %v3190 = vsel %vm3184, %v3177, 920167782
        %v3191 = vsel %vm3183, %v3174, %v3190
        %v3192 = vsel %vm3182, %v3189, %v3191
        %v3193 = vsel %vm3181, %v3171, %v3174
        %v3194 = vsel %vm3184, %v3180, 1326507024
        %v3195 = vsel %vm3183, %v3177, %v3194
        %v3196 = vsel %vm3182, %v3193, %v3195
        %v3197 = vshll.u32 %v3157, 8
        %v3198 = vmul.u32.u64.compose %v3197, %v3196
        %v3199 = vextract.low.u32 %v3198
        %v3200 = vextract.high.u32 %v3198
        %v3201 = vmul.u32.u64.compose %v3197, %v3192
        %v3202 = vextract.low.u32 %v3201
        %v3203 = vextract.high.u32 %v3201
        %v3204 = vmul.u32 %v3197, %v3188
        %v3205 = vadd.s32 %v3200, %v3202
        %vm3206 = vc.u32 %v3200, %v3202
        %v3207 = vadd.s32 %v3203, 1
        %v3208 = vsel %vm3206, %v3207, %v3203
        %v3209 = vadd.s32 %v3204, %v3208
        %v3210 = vadd.s32 %v3209, 536870912
        %v3211 = vshrl.u32 %v3210, 30
        %v3212 = vshll.u32 %v3211, 30
        %v3213 = vsub.s32 %v3209, %v3212
        %vm3214 = vcmp.lt.s32.totalorder %v3213, 0
        %v3215 = vsub.s32 0, %v3213
        %v3216 = vsel %vm3214, %v3215, %v3213
        %v3217 = vclz %v3216
        %v3218 = vsub.s32 %v3217, 2
        %vm3219 = vcmp.gt.s32.totalorder 0, %v3218
        %v3220 = vsel %vm3219, 0, %v3218
        %v3221 = vsub.s32 32, %v3220
        %v3222 = vshll.u32 %v3213, %v3220
        %v3223 = vshrl.u32 %v3205, %v3221
        %v3224 = vor.u32 %v3222, %v3223
        %v3225 = vsub.s32 4294967266, %v3220
        %v3226 = vadd.s32 %v3225, 127
        %v3227 = vshll.u32 %v3226, 23
        %v3228 = vor.u32 4788187, %v3227
        %v3229 = vand.u32 2147483647, %v3228
        %v3231 = vcvt.s32.f32 %v3224
        %v3232 = vmul.f32 %v3231, %v3229
        %v3233 = vxor.u32 %v3232, 2147483648
        %v3234 = vsel %vm3151, %v3233, %v3232
        %v3235 = vsub.s32 4, %v3211
        %v3236 = vsel %vm3151, %v3235, %v3211
        %v3237 = vsel %vm3150, %v2407, %v3234
        %v3238 = vsel %vm3150, 0, %v3236
        %v3239 = vcosq.f32.pop %v3237
        %v3240 = vsinq.f32.pop %v3237
        %vm3241 = vweird.f32 %v2407
        %v3242 = vadd.s32 %v3238, 3
        %v3243 = vand.u32 %v3242, 3
        %vm3244 = vcmp.lt.s32.totalorder %v3243, 2
        %vm3245 = vcmp.eq.s32.totalorder %v3243, 0
        %v3246 = vxor.u32 %v3240, 2147483648
        %v3247 = vsel %vm3245, %v3239, %v3246
        %vm3248 = vcmp.eq.s32.totalorder %v3243, 2
        %v3249 = vxor.u32 %v3239, 2147483648
        %v3250 = vsel %vm3248, %v3249, %v3240
        %v3251 = vsel %vm3244, %v3247, %v3250
        %v3252 = vsel %vm3241, nan, %v3251
        %v3253 = vand.u32 2147483647, %v2322
        %vm3254 = vcmp.le.f32.partialorder %v3253, 0.7853982
        %vm3255 = vcmp.lt.s32.totalorder %v2322, 0
        %v3256 = vand.u32 %v2322, 2139095040
        %v3257 = vshrl.u32 %v3256, 23
        %v3258 = vsub.s32 %v3257, 127
        %v3259 = vand.u32 2147483647, %v2322
        %v3260 = vand.u32 %v3259, 8388607
        %v3261 = vor.u32 %v3260, 8388608
        %v3262 = vsub.s32 0, %v3261
        %v3263 = vadd.s32 %v3258, 1
        %vm3264 = vcmp.gt.s32.totalorder %v3263, 0
        %v3265 = vsel %vm3264, %v3263, 0
        %v3266 = vshrl.u32 %v3265, 5
        %v3267 = vand.u32 %v3265, 31
        %v3268 = vsub.s32 32, %v3267
        %v3269 = vshrl.u32 683565275, %v3268
        %v3270 = vshll.u32 683565275, %v3267
        %v3271 = vshrl.u32 2475754826, %v3268
        %v3272 = vor.u32 %v3270, %v3271
        %v3273 = vshll.u32 2475754826, %v3267
        %v3274 = vshrl.u32 2131351028, %v3268
        %v3275 = vor.u32 %v3273, %v3274
        %v3276 = vshll.u32 2131351028, %v3267
        %v3277 = vshrl.u32 2102212464, %v3268
        %v3278 = vor.u32 %v3276, %v3277
        %v3279 = vshll.u32 2102212464, %v3267
        %v3280 = vshrl.u32 920167782, %v3268
        %v3281 = vor.u32 %v3279, %v3280
        %v3282 = vshll.u32 920167782, %v3267
        %v3283 = vshrl.u32 1326507024, %v3268
        %v3284 = vor.u32 %v3282, %v3283
        %vm3285 = vcmp.lt.s32.totalorder %v3266, 1
        %vm3286 = vcmp.lt.s32.totalorder %v3266, 2
        %vm3287 = vcmp.lt.s32.totalorder %v3266, 3
        %vm3288 = vcmp.lt.s32.totalorder %v3266, 4
        %v3289 = vsel %vm3285, %v3269, %v3272
        %v3290 = vsel %vm3288, %v3278, 2102212464
        %v3291 = vsel %vm3287, %v3275, %v3290
        %v3292 = vsel %vm3286, %v3289, %v3291
        %v3293 = vsel %vm3285, %v3272, %v3275
        %v3294 = vsel %vm3288, %v3281, 920167782
        %v3295 = vsel %vm3287, %v3278, %v3294
        %v3296 = vsel %vm3286, %v3293, %v3295
        %v3297 = vsel %vm3285, %v3275, %v3278
        %v3298 = vsel %vm3288, %v3284, 1326507024
        %v3299 = vsel %vm3287, %v3281, %v3298
        %v3300 = vsel %vm3286, %v3297, %v3299
        %v3301 = vshll.u32 %v3261, 8
        %v3302 = vmul.u32.u64.compose %v3301, %v3300
        %v3303 = vextract.low.u32 %v3302
        %v3304 = vextract.high.u32 %v3302
        %v3305 = vmul.u32.u64.compose %v3301, %v3296
        %v3306 = vextract.low.u32 %v3305
        %v3307 = vextract.high.u32 %v3305
        %v3308 = vmul.u32 %v3301, %v3292
        %v3309 = vadd.s32 %v3304, %v3306
        %vm3310 = vc.u32 %v3304, %v3306
        %v3311 = vadd.s32 %v3307, 1
        %v3312 = vsel %vm3310, %v3311, %v3307
        %v3313 = vadd.s32 %v3308, %v3312
        %v3314 = vadd.s32 %v3313, 536870912
        %v3315 = vshrl.u32 %v3314, 30
        %v3316 = vshll.u32 %v3315, 30
        %v3317 = vsub.s32 %v3313, %v3316
        %vm3318 = vcmp.lt.s32.totalorder %v3317, 0
        %v3319 = vsub.s32 0, %v3317
        %v3320 = vsel %vm3318, %v3319, %v3317
        %v3321 = vclz %v3320
        %v3322 = vsub.s32 %v3321, 2
        %vm3323 = vcmp.gt.s32.totalorder 0, %v3322
        %v3324 = vsel %vm3323, 0, %v3322
        %v3325 = vsub.s32 32, %v3324
        %v3326 = vshll.u32 %v3317, %v3324
        %v3327 = vshrl.u32 %v3309, %v3325
        %v3328 = vor.u32 %v3326, %v3327
        %v3329 = vsub.s32 4294967266, %v3324
        %v3330 = vadd.s32 %v3329, 127
        %v3331 = vshll.u32 %v3330, 23
        %v3332 = vor.u32 4788187, %v3331
        %v3333 = vand.u32 2147483647, %v3332
        %v3335 = vcvt.s32.f32 %v3328
        %v3336 = vmul.f32 %v3335, %v3333
        %v3337 = vxor.u32 %v3336, 2147483648
        %v3338 = vsel %vm3255, %v3337, %v3336
        %v3339 = vsub.s32 4, %v3315
        %v3340 = vsel %vm3255, %v3339, %v3315
        %v3341 = vsel %vm3254, %v2322, %v3338
        %v3342 = vsel %vm3254, 0, %v3340
        %v3343 = vcosq.f32.pop %v3341
        %v3344 = vsinq.f32.pop %v3341
        %vm3345 = vweird.f32 %v2322
        %v3346 = vadd.s32 %v3342, 3
        %v3347 = vand.u32 %v3346, 3
        %vm3348 = vcmp.lt.s32.totalorder %v3347, 2
        %vm3349 = vcmp.eq.s32.totalorder %v3347, 0
        %v3350 = vxor.u32 %v3344, 2147483648
        %v3351 = vsel %vm3349, %v3343, %v3350
        %vm3352 = vcmp.eq.s32.totalorder %v3347, 2
        %v3353 = vxor.u32 %v3343, 2147483648
        %v3354 = vsel %vm3352, %v3353, %v3344
        %v3355 = vsel %vm3348, %v3351, %v3354
        %v3356 = vsel %vm3345, nan, %v3355
        %v3357 = vand.u32 2147483647, %v2324
        %vm3358 = vcmp.le.f32.partialorder %v3357, 0.7853982
        %vm3359 = vcmp.lt.s32.totalorder %v2324, 0
        %v3360 = vand.u32 %v2324, 2139095040
        %v3361 = vshrl.u32 %v3360, 23
        %v3362 = vsub.s32 %v3361, 127
        %v3363 = vand.u32 2147483647, %v2324
        %v3364 = vand.u32 %v3363, 8388607
        %v3365 = vor.u32 %v3364, 8388608
        %v3366 = vsub.s32 0, %v3365
        %v3367 = vadd.s32 %v3362, 1
        %vm3368 = vcmp.gt.s32.totalorder %v3367, 0
        %v3369 = vsel %vm3368, %v3367, 0
        %v3370 = vshrl.u32 %v3369, 5
        %v3371 = vand.u32 %v3369, 31
        %v3372 = vsub.s32 32, %v3371
        %v3373 = vshrl.u32 683565275, %v3372
        %v3374 = vshll.u32 683565275, %v3371
        %v3375 = vshrl.u32 2475754826, %v3372
        %v3376 = vor.u32 %v3374, %v3375
        %v3377 = vshll.u32 2475754826, %v3371
        %v3378 = vshrl.u32 2131351028, %v3372
        %v3379 = vor.u32 %v3377, %v3378
        %v3380 = vshll.u32 2131351028, %v3371
        %v3381 = vshrl.u32 2102212464, %v3372
        %v3382 = vor.u32 %v3380, %v3381
        %v3383 = vshll.u32 2102212464, %v3371
        %v3384 = vshrl.u32 920167782, %v3372
        %v3385 = vor.u32 %v3383, %v3384
        %v3386 = vshll.u32 920167782, %v3371
        %v3387 = vshrl.u32 1326507024, %v3372
        %v3388 = vor.u32 %v3386, %v3387
        %vm3389 = vcmp.lt.s32.totalorder %v3370, 1
        %vm3390 = vcmp.lt.s32.totalorder %v3370, 2
        %vm3391 = vcmp.lt.s32.totalorder %v3370, 3
        %vm3392 = vcmp.lt.s32.totalorder %v3370, 4
        %v3393 = vsel %vm3389, %v3373, %v3376
        %v3394 = vsel %vm3392, %v3382, 2102212464
        %v3395 = vsel %vm3391, %v3379, %v3394
        %v3396 = vsel %vm3390, %v3393, %v3395
        %v3397 = vsel %vm3389, %v3376, %v3379
        %v3398 = vsel %vm3392, %v3385, 920167782
        %v3399 = vsel %vm3391, %v3382, %v3398
        %v3400 = vsel %vm3390, %v3397, %v3399
        %v3401 = vsel %vm3389, %v3379, %v3382
        %v3402 = vsel %vm3392, %v3388, 1326507024
        %v3403 = vsel %vm3391, %v3385, %v3402
        %v3404 = vsel %vm3390, %v3401, %v3403
        %v3405 = vshll.u32 %v3365, 8
        %v3406 = vmul.u32.u64.compose %v3405, %v3404
        %v3407 = vextract.low.u32 %v3406
        %v3408 = vextract.high.u32 %v3406
        %v3409 = vmul.u32.u64.compose %v3405, %v3400
        %v3410 = vextract.low.u32 %v3409
        %v3411 = vextract.high.u32 %v3409
        %v3412 = vmul.u32 %v3405, %v3396
        %v3413 = vadd.s32 %v3408, %v3410
        %vm3414 = vc.u32 %v3408, %v3410
        %v3415 = vadd.s32 %v3411, 1
        %v3416 = vsel %vm3414, %v3415, %v3411
        %v3417 = vadd.s32 %v3412, %v3416
        %v3418 = vadd.s32 %v3417, 536870912
        %v3419 = vshrl.u32 %v3418, 30
        %v3420 = vshll.u32 %v3419, 30
        %v3421 = vsub.s32 %v3417, %v3420
        %vm3422 = vcmp.lt.s32.totalorder %v3421, 0
        %v3423 = vsub.s32 0, %v3421
        %v3424 = vsel %vm3422, %v3423, %v3421
        %v3425 = vclz %v3424
        %v3426 = vsub.s32 %v3425, 2
        %vm3427 = vcmp.gt.s32.totalorder 0, %v3426
        %v3428 = vsel %vm3427, 0, %v3426
        %v3429 = vsub.s32 32, %v3428
        %v3430 = vshll.u32 %v3421, %v3428
        %v3431 = vshrl.u32 %v3413, %v3429
        %v3432 = vor.u32 %v3430, %v3431
        %v3433 = vsub.s32 4294967266, %v3428
        %v3434 = vadd.s32 %v3433, 127
        %v3435 = vshll.u32 %v3434, 23
        %v3436 = vor.u32 4788187, %v3435
        %v3437 = vand.u32 2147483647, %v3436
        %v3439 = vcvt.s32.f32 %v3432
        %v3440 = vmul.f32 %v3439, %v3437
        %v3441 = vxor.u32 %v3440, 2147483648
        %v3442 = vsel %vm3359, %v3441, %v3440
        %v3443 = vsub.s32 4, %v3419
        %v3444 = vsel %vm3359, %v3443, %v3419
        %v3445 = vsel %vm3358, %v2324, %v3442
        %v3446 = vsel %vm3358, 0, %v3444
        %v3447 = vcosq.f32.pop %v3445
        %v3448 = vsinq.f32.pop %v3445
        %vm3449 = vweird.f32 %v2324
        %v3450 = vadd.s32 %v3446, 3
        %v3451 = vand.u32 %v3450, 3
        %vm3452 = vcmp.lt.s32.totalorder %v3451, 2
        %vm3453 = vcmp.eq.s32.totalorder %v3451, 0
        %v3454 = vxor.u32 %v3448, 2147483648
        %v3455 = vsel %vm3453, %v3447, %v3454
        %vm3456 = vcmp.eq.s32.totalorder %v3451, 2
        %v3457 = vxor.u32 %v3447, 2147483648
        %v3458 = vsel %vm3456, %v3457, %v3448
        %v3459 = vsel %vm3452, %v3455, %v3458
        %v3460 = vsel %vm3449, nan, %v3459
        %v3461 = vand.u32 2147483647, %v2411
        %vm3462 = vcmp.le.f32.partialorder %v3461, 0.7853982
        %vm3463 = vcmp.lt.s32.totalorder %v2411, 0
        %v3464 = vand.u32 %v2411, 2139095040
        %v3465 = vshrl.u32 %v3464, 23
        %v3466 = vsub.s32 %v3465, 127
        %v3467 = vand.u32 2147483647, %v2411
        %v3468 = vand.u32 %v3467, 8388607
        %v3469 = vor.u32 %v3468, 8388608
        %v3470 = vsub.s32 0, %v3469
        %v3471 = vadd.s32 %v3466, 1
        %vm3472 = vcmp.gt.s32.totalorder %v3471, 0
        %v3473 = vsel %vm3472, %v3471, 0
        %v3474 = vshrl.u32 %v3473, 5
        %v3475 = vand.u32 %v3473, 31
        %v3476 = vsub.s32 32, %v3475
        %v3477 = vshrl.u32 683565275, %v3476
        %v3478 = vshll.u32 683565275, %v3475
        %v3479 = vshrl.u32 2475754826, %v3476
        %v3480 = vor.u32 %v3478, %v3479
        %v3481 = vshll.u32 2475754826, %v3475
        %v3482 = vshrl.u32 2131351028, %v3476
        %v3483 = vor.u32 %v3481, %v3482
        %v3484 = vshll.u32 2131351028, %v3475
        %v3485 = vshrl.u32 2102212464, %v3476
        %v3486 = vor.u32 %v3484, %v3485
        %v3487 = vshll.u32 2102212464, %v3475
        %v3488 = vshrl.u32 920167782, %v3476
        %v3489 = vor.u32 %v3487, %v3488
        %v3490 = vshll.u32 920167782, %v3475
        %v3491 = vshrl.u32 1326507024, %v3476
        %v3492 = vor.u32 %v3490, %v3491
        %vm3493 = vcmp.lt.s32.totalorder %v3474, 1
        %vm3494 = vcmp.lt.s32.totalorder %v3474, 2
        %vm3495 = vcmp.lt.s32.totalorder %v3474, 3
        %vm3496 = vcmp.lt.s32.totalorder %v3474, 4
        %v3497 = vsel %vm3493, %v3477, %v3480
        %v3498 = vsel %vm3496, %v3486, 2102212464
        %v3499 = vsel %vm3495, %v3483, %v3498
        %v3500 = vsel %vm3494, %v3497, %v3499
        %v3501 = vsel %vm3493, %v3480, %v3483
        %v3502 = vsel %vm3496, %v3489, 920167782
        %v3503 = vsel %vm3495, %v3486, %v3502
        %v3504 = vsel %vm3494, %v3501, %v3503
        %v3505 = vsel %vm3493, %v3483, %v3486
        %v3506 = vsel %vm3496, %v3492, 1326507024
        %v3507 = vsel %vm3495, %v3489, %v3506
        %v3508 = vsel %vm3494, %v3505, %v3507
        %v3509 = vshll.u32 %v3469, 8
        %v3510 = vmul.u32.u64.compose %v3509, %v3508
        %v3511 = vextract.low.u32 %v3510
        %v3512 = vextract.high.u32 %v3510
        %v3513 = vmul.u32.u64.compose %v3509, %v3504
        %v3514 = vextract.low.u32 %v3513
        %v3515 = vextract.high.u32 %v3513
        %v3516 = vmul.u32 %v3509, %v3500
        %v3517 = vadd.s32 %v3512, %v3514
        %vm3518 = vc.u32 %v3512, %v3514
        %v3519 = vadd.s32 %v3515, 1
        %v3520 = vsel %vm3518, %v3519, %v3515
        %v3521 = vadd.s32 %v3516, %v3520
        %v3522 = vadd.s32 %v3521, 536870912
        %v3523 = vshrl.u32 %v3522, 30
        %v3524 = vshll.u32 %v3523, 30
        %v3525 = vsub.s32 %v3521, %v3524
        %vm3526 = vcmp.lt.s32.totalorder %v3525, 0
        %v3527 = vsub.s32 0, %v3525
        %v3528 = vsel %vm3526, %v3527, %v3525
        %v3529 = vclz %v3528
        %v3530 = vsub.s32 %v3529, 2
        %vm3531 = vcmp.gt.s32.totalorder 0, %v3530
        %v3532 = vsel %vm3531, 0, %v3530
        %v3533 = vsub.s32 32, %v3532
        %v3534 = vshll.u32 %v3525, %v3532
        %v3535 = vshrl.u32 %v3517, %v3533
        %v3536 = vor.u32 %v3534, %v3535
        %v3537 = vsub.s32 4294967266, %v3532
        %v3538 = vadd.s32 %v3537, 127
        %v3539 = vshll.u32 %v3538, 23
        %v3540 = vor.u32 4788187, %v3539
        %v3541 = vand.u32 2147483647, %v3540
        %v3543 = vcvt.s32.f32 %v3536
        %v3544 = vmul.f32 %v3543, %v3541
        %v3545 = vxor.u32 %v3544, 2147483648
        %v3546 = vsel %vm3463, %v3545, %v3544
        %v3547 = vsub.s32 4, %v3523
        %v3548 = vsel %vm3463, %v3547, %v3523
        %v3549 = vsel %vm3462, %v2411, %v3546
        %v3550 = vsel %vm3462, 0, %v3548
        %v3551 = vcosq.f32.pop %v3549
        %v3552 = vsinq.f32.pop %v3549
        %vm3553 = vweird.f32 %v2411
        %v3554 = vadd.s32 %v3550, 3
        %v3555 = vand.u32 %v3554, 3
        %vm3556 = vcmp.lt.s32.totalorder %v3555, 2
        %vm3557 = vcmp.eq.s32.totalorder %v3555, 0
        %v3558 = vxor.u32 %v3552, 2147483648
        %v3559 = vsel %vm3557, %v3551, %v3558
        %vm3560 = vcmp.eq.s32.totalorder %v3555, 2
        %v3561 = vxor.u32 %v3551, 2147483648
        %v3562 = vsel %vm3560, %v3561, %v3552
        %v3563 = vsel %vm3556, %v3559, %v3562
        %v3564 = vsel %vm3553, nan, %v3563
        %v3565 = vand.u32 2147483647, %v2413
        %vm3566 = vcmp.le.f32.partialorder %v3565, 0.7853982
        %vm3567 = vcmp.lt.s32.totalorder %v2413, 0
        %v3568 = vand.u32 %v2413, 2139095040
        %v3569 = vshrl.u32 %v3568, 23
        %v3570 = vsub.s32 %v3569, 127
        %v3571 = vand.u32 2147483647, %v2413
        %v3572 = vand.u32 %v3571, 8388607
        %v3573 = vor.u32 %v3572, 8388608
        %v3574 = vsub.s32 0, %v3573
        %v3575 = vadd.s32 %v3570, 1
        %vm3576 = vcmp.gt.s32.totalorder %v3575, 0
        %v3577 = vsel %vm3576, %v3575, 0
        %v3578 = vshrl.u32 %v3577, 5
        %v3579 = vand.u32 %v3577, 31
        %v3580 = vsub.s32 32, %v3579
        %v3581 = vshrl.u32 683565275, %v3580
        %v3582 = vshll.u32 683565275, %v3579
        %v3583 = vshrl.u32 2475754826, %v3580
        %v3584 = vor.u32 %v3582, %v3583
        %v3585 = vshll.u32 2475754826, %v3579
        %v3586 = vshrl.u32 2131351028, %v3580
        %v3587 = vor.u32 %v3585, %v3586
        %v3588 = vshll.u32 2131351028, %v3579
        %v3589 = vshrl.u32 2102212464, %v3580
        %v3590 = vor.u32 %v3588, %v3589
        %v3591 = vshll.u32 2102212464, %v3579
        %v3592 = vshrl.u32 920167782, %v3580
        %v3593 = vor.u32 %v3591, %v3592
        %v3594 = vshll.u32 920167782, %v3579
        %v3595 = vshrl.u32 1326507024, %v3580
        %v3596 = vor.u32 %v3594, %v3595
        %vm3597 = vcmp.lt.s32.totalorder %v3578, 1
        %vm3598 = vcmp.lt.s32.totalorder %v3578, 2
        %vm3599 = vcmp.lt.s32.totalorder %v3578, 3
        %vm3600 = vcmp.lt.s32.totalorder %v3578, 4
        %v3601 = vsel %vm3597, %v3581, %v3584
        %v3602 = vsel %vm3600, %v3590, 2102212464
        %v3603 = vsel %vm3599, %v3587, %v3602
        %v3604 = vsel %vm3598, %v3601, %v3603
        %v3605 = vsel %vm3597, %v3584, %v3587
        %v3606 = vsel %vm3600, %v3593, 920167782
        %v3607 = vsel %vm3599, %v3590, %v3606
        %v3608 = vsel %vm3598, %v3605, %v3607
        %v3609 = vsel %vm3597, %v3587, %v3590
        %v3610 = vsel %vm3600, %v3596, 1326507024
        %v3611 = vsel %vm3599, %v3593, %v3610
        %v3612 = vsel %vm3598, %v3609, %v3611
        %v3613 = vshll.u32 %v3573, 8
        %v3614 = vmul.u32.u64.compose %v3613, %v3612
        %v3615 = vextract.low.u32 %v3614
        %v3616 = vextract.high.u32 %v3614
        %v3617 = vmul.u32.u64.compose %v3613, %v3608
        %v3618 = vextract.low.u32 %v3617
        %v3619 = vextract.high.u32 %v3617
        %v3620 = vmul.u32 %v3613, %v3604
        %v3621 = vadd.s32 %v3616, %v3618
        %vm3622 = vc.u32 %v3616, %v3618
        %v3623 = vadd.s32 %v3619, 1
        %v3624 = vsel %vm3622, %v3623, %v3619
        %v3625 = vadd.s32 %v3620, %v3624
        %v3626 = vadd.s32 %v3625, 536870912
        %v3627 = vshrl.u32 %v3626, 30
        %v3628 = vshll.u32 %v3627, 30
        %v3629 = vsub.s32 %v3625, %v3628
        %vm3630 = vcmp.lt.s32.totalorder %v3629, 0
        %v3631 = vsub.s32 0, %v3629
        %v3632 = vsel %vm3630, %v3631, %v3629
        %v3633 = vclz %v3632
        %v3634 = vsub.s32 %v3633, 2
        %vm3635 = vcmp.gt.s32.totalorder 0, %v3634
        %v3636 = vsel %vm3635, 0, %v3634
        %v3637 = vsub.s32 32, %v3636
        %v3638 = vshll.u32 %v3629, %v3636
        %v3639 = vshrl.u32 %v3621, %v3637
        %v3640 = vor.u32 %v3638, %v3639
        %v3641 = vsub.s32 4294967266, %v3636
        %v3642 = vadd.s32 %v3641, 127
        %v3643 = vshll.u32 %v3642, 23
        %v3644 = vor.u32 4788187, %v3643
        %v3645 = vand.u32 2147483647, %v3644
        %v3647 = vcvt.s32.f32 %v3640
        %v3648 = vmul.f32 %v3647, %v3645
        %v3649 = vxor.u32 %v3648, 2147483648
        %v3650 = vsel %vm3567, %v3649, %v3648
        %v3651 = vsub.s32 4, %v3627
        %v3652 = vsel %vm3567, %v3651, %v3627
        %v3653 = vsel %vm3566, %v2413, %v3650
        %v3654 = vsel %vm3566, 0, %v3652
        %v3655 = vcosq.f32.pop %v3653
        %v3656 = vsinq.f32.pop %v3653
        %vm3657 = vweird.f32 %v2413
        %v3658 = vadd.s32 %v3654, 3
        %v3659 = vand.u32 %v3658, 3
        %vm3660 = vcmp.lt.s32.totalorder %v3659, 2
        %vm3661 = vcmp.eq.s32.totalorder %v3659, 0
        %v3662 = vxor.u32 %v3656, 2147483648
        %v3663 = vsel %vm3661, %v3655, %v3662
        %vm3664 = vcmp.eq.s32.totalorder %v3659, 2
        %v3665 = vxor.u32 %v3655, 2147483648
        %v3666 = vsel %vm3664, %v3665, %v3656
        %v3667 = vsel %vm3660, %v3663, %v3666
        %v3668 = vsel %vm3657, nan, %v3667
        %v3669 = vand.u32 2147483647, %v2328
        %vm3670 = vcmp.le.f32.partialorder %v3669, 0.7853982
        %vm3671 = vcmp.lt.s32.totalorder %v2328, 0
        %v3672 = vand.u32 %v2328, 2139095040
        %v3673 = vshrl.u32 %v3672, 23
        %v3674 = vsub.s32 %v3673, 127
        %v3675 = vand.u32 2147483647, %v2328
        %v3676 = vand.u32 %v3675, 8388607
        %v3677 = vor.u32 %v3676, 8388608
        %v3678 = vsub.s32 0, %v3677
        %v3679 = vadd.s32 %v3674, 1
        %vm3680 = vcmp.gt.s32.totalorder %v3679, 0
        %v3681 = vsel %vm3680, %v3679, 0
        %v3682 = vshrl.u32 %v3681, 5
        %v3683 = vand.u32 %v3681, 31
        %v3684 = vsub.s32 32, %v3683
        %v3685 = vshrl.u32 683565275, %v3684
        %v3686 = vshll.u32 683565275, %v3683
        %v3687 = vshrl.u32 2475754826, %v3684
        %v3688 = vor.u32 %v3686, %v3687
        %v3689 = vshll.u32 2475754826, %v3683
        %v3690 = vshrl.u32 2131351028, %v3684
        %v3691 = vor.u32 %v3689, %v3690
        %v3692 = vshll.u32 2131351028, %v3683
        %v3693 = vshrl.u32 2102212464, %v3684
        %v3694 = vor.u32 %v3692, %v3693
        %v3695 = vshll.u32 2102212464, %v3683
        %v3696 = vshrl.u32 920167782, %v3684
        %v3697 = vor.u32 %v3695, %v3696
        %v3698 = vshll.u32 920167782, %v3683
        %v3699 = vshrl.u32 1326507024, %v3684
        %v3700 = vor.u32 %v3698, %v3699
        %vm3701 = vcmp.lt.s32.totalorder %v3682, 1
        %vm3702 = vcmp.lt.s32.totalorder %v3682, 2
        %vm3703 = vcmp.lt.s32.totalorder %v3682, 3
        %vm3704 = vcmp.lt.s32.totalorder %v3682, 4
        %v3705 = vsel %vm3701, %v3685, %v3688
        %v3706 = vsel %vm3704, %v3694, 2102212464
        %v3707 = vsel %vm3703, %v3691, %v3706
        %v3708 = vsel %vm3702, %v3705, %v3707
        %v3709 = vsel %vm3701, %v3688, %v3691
        %v3710 = vsel %vm3704, %v3697, 920167782
        %v3711 = vsel %vm3703, %v3694, %v3710
        %v3712 = vsel %vm3702, %v3709, %v3711
        %v3713 = vsel %vm3701, %v3691, %v3694
        %v3714 = vsel %vm3704, %v3700, 1326507024
        %v3715 = vsel %vm3703, %v3697, %v3714
        %v3716 = vsel %vm3702, %v3713, %v3715
        %v3717 = vshll.u32 %v3677, 8
        %v3718 = vmul.u32.u64.compose %v3717, %v3716
        %v3719 = vextract.low.u32 %v3718
        %v3720 = vextract.high.u32 %v3718
        %v3721 = vmul.u32.u64.compose %v3717, %v3712
        %v3722 = vextract.low.u32 %v3721
        %v3723 = vextract.high.u32 %v3721
        %v3724 = vmul.u32 %v3717, %v3708
        %v3725 = vadd.s32 %v3720, %v3722
        %vm3726 = vc.u32 %v3720, %v3722
        %v3727 = vadd.s32 %v3723, 1
        %v3728 = vsel %vm3726, %v3727, %v3723
        %v3729 = vadd.s32 %v3724, %v3728
        %v3730 = vadd.s32 %v3729, 536870912
        %v3731 = vshrl.u32 %v3730, 30
        %v3732 = vshll.u32 %v3731, 30
        %v3733 = vsub.s32 %v3729, %v3732
        %vm3734 = vcmp.lt.s32.totalorder %v3733, 0
        %v3735 = vsub.s32 0, %v3733
        %v3736 = vsel %vm3734, %v3735, %v3733
        %v3737 = vclz %v3736
        %v3738 = vsub.s32 %v3737, 2
        %vm3739 = vcmp.gt.s32.totalorder 0, %v3738
        %v3740 = vsel %vm3739, 0, %v3738
        %v3741 = vsub.s32 32, %v3740
        %v3742 = vshll.u32 %v3733, %v3740
        %v3743 = vshrl.u32 %v3725, %v3741
        %v3744 = vor.u32 %v3742, %v3743
        %v3745 = vsub.s32 4294967266, %v3740
        %v3746 = vadd.s32 %v3745, 127
        %v3747 = vshll.u32 %v3746, 23
        %v3748 = vor.u32 4788187, %v3747
        %v3749 = vand.u32 2147483647, %v3748
        %v3751 = vcvt.s32.f32 %v3744
        %v3752 = vmul.f32 %v3751, %v3749
        %v3753 = vxor.u32 %v3752, 2147483648
        %v3754 = vsel %vm3671, %v3753, %v3752
        %v3755 = vsub.s32 4, %v3731
        %v3756 = vsel %vm3671, %v3755, %v3731
        %v3757 = vsel %vm3670, %v2328, %v3754
        %v3758 = vsel %vm3670, 0, %v3756
        %v3759 = vcosq.f32.pop %v3757
        %v3760 = vsinq.f32.pop %v3757
        %vm3761 = vweird.f32 %v2328
        %v3762 = vadd.s32 %v3758, 3
        %v3763 = vand.u32 %v3762, 3
        %vm3764 = vcmp.lt.s32.totalorder %v3763, 2
        %vm3765 = vcmp.eq.s32.totalorder %v3763, 0
        %v3766 = vxor.u32 %v3760, 2147483648
        %v3767 = vsel %vm3765, %v3759, %v3766
        %vm3768 = vcmp.eq.s32.totalorder %v3763, 2
        %v3769 = vxor.u32 %v3759, 2147483648
        %v3770 = vsel %vm3768, %v3769, %v3760
        %v3771 = vsel %vm3764, %v3767, %v3770
        %v3772 = vsel %vm3761, nan, %v3771
        %v3773 = vand.u32 2147483647, %v2330
        %vm3774 = vcmp.le.f32.partialorder %v3773, 0.7853982
        %vm3775 = vcmp.lt.s32.totalorder %v2330, 0
        %v3776 = vand.u32 %v2330, 2139095040
        %v3777 = vshrl.u32 %v3776, 23
        %v3778 = vsub.s32 %v3777, 127
        %v3779 = vand.u32 2147483647, %v2330
        %v3780 = vand.u32 %v3779, 8388607
        %v3781 = vor.u32 %v3780, 8388608
        %v3782 = vsub.s32 0, %v3781
        %v3783 = vadd.s32 %v3778, 1
        %vm3784 = vcmp.gt.s32.totalorder %v3783, 0
        %v3785 = vsel %vm3784, %v3783, 0
        %v3786 = vshrl.u32 %v3785, 5
        %v3787 = vand.u32 %v3785, 31
        %v3788 = vsub.s32 32, %v3787
        %v3789 = vshrl.u32 683565275, %v3788
        %v3790 = vshll.u32 683565275, %v3787
        %v3791 = vshrl.u32 2475754826, %v3788
        %v3792 = vor.u32 %v3790, %v3791
        %v3793 = vshll.u32 2475754826, %v3787
        %v3794 = vshrl.u32 2131351028, %v3788
        %v3795 = vor.u32 %v3793, %v3794
        %v3796 = vshll.u32 2131351028, %v3787
        %v3797 = vshrl.u32 2102212464, %v3788
        %v3798 = vor.u32 %v3796, %v3797
        %v3799 = vshll.u32 2102212464, %v3787
        %v3800 = vshrl.u32 920167782, %v3788
        %v3801 = vor.u32 %v3799, %v3800
        %v3802 = vshll.u32 920167782, %v3787
        %v3803 = vshrl.u32 1326507024, %v3788
        %v3804 = vor.u32 %v3802, %v3803
        %vm3805 = vcmp.lt.s32.totalorder %v3786, 1
        %vm3806 = vcmp.lt.s32.totalorder %v3786, 2
        %vm3807 = vcmp.lt.s32.totalorder %v3786, 3
        %vm3808 = vcmp.lt.s32.totalorder %v3786, 4
        %v3809 = vsel %vm3805, %v3789, %v3792
        %v3810 = vsel %vm3808, %v3798, 2102212464
        %v3811 = vsel %vm3807, %v3795, %v3810
        %v3812 = vsel %vm3806, %v3809, %v3811
        %v3813 = vsel %vm3805, %v3792, %v3795
        %v3814 = vsel %vm3808, %v3801, 920167782
        %v3815 = vsel %vm3807, %v3798, %v3814
        %v3816 = vsel %vm3806, %v3813, %v3815
        %v3817 = vsel %vm3805, %v3795, %v3798
        %v3818 = vsel %vm3808, %v3804, 1326507024
        %v3819 = vsel %vm3807, %v3801, %v3818
        %v3820 = vsel %vm3806, %v3817, %v3819
        %v3821 = vshll.u32 %v3781, 8
        %v3822 = vmul.u32.u64.compose %v3821, %v3820
        %v3823 = vextract.low.u32 %v3822
        %v3824 = vextract.high.u32 %v3822
        %v3825 = vmul.u32.u64.compose %v3821, %v3816
        %v3826 = vextract.low.u32 %v3825
        %v3827 = vextract.high.u32 %v3825
        %v3828 = vmul.u32 %v3821, %v3812
        %v3829 = vadd.s32 %v3824, %v3826
        %vm3830 = vc.u32 %v3824, %v3826
        %v3831 = vadd.s32 %v3827, 1
        %v3832 = vsel %vm3830, %v3831, %v3827
        %v3833 = vadd.s32 %v3828, %v3832
        %v3834 = vadd.s32 %v3833, 536870912
        %v3835 = vshrl.u32 %v3834, 30
        %v3836 = vshll.u32 %v3835, 30
        %v3837 = vsub.s32 %v3833, %v3836
        %vm3838 = vcmp.lt.s32.totalorder %v3837, 0
        %v3839 = vsub.s32 0, %v3837
        %v3840 = vsel %vm3838, %v3839, %v3837
        %v3841 = vclz %v3840
        %v3842 = vsub.s32 %v3841, 2
        %vm3843 = vcmp.gt.s32.totalorder 0, %v3842
        %v3844 = vsel %vm3843, 0, %v3842
        %v3845 = vsub.s32 32, %v3844
        %v3846 = vshll.u32 %v3837, %v3844
        %v3847 = vshrl.u32 %v3829, %v3845
        %v3848 = vor.u32 %v3846, %v3847
        %v3849 = vsub.s32 4294967266, %v3844
        %v3850 = vadd.s32 %v3849, 127
        %v3851 = vshll.u32 %v3850, 23
        %v3852 = vor.u32 4788187, %v3851
        %v3853 = vand.u32 2147483647, %v3852
        %v3855 = vcvt.s32.f32 %v3848
        %v3856 = vmul.f32 %v3855, %v3853
        %v3857 = vxor.u32 %v3856, 2147483648
        %v3858 = vsel %vm3775, %v3857, %v3856
        %v3859 = vsub.s32 4, %v3835
        %v3860 = vsel %vm3775, %v3859, %v3835
        %v3861 = vsel %vm3774, %v2330, %v3858
        %v3862 = vsel %vm3774, 0, %v3860
        %v3863 = vcosq.f32.pop %v3861
        %v3864 = vsinq.f32.pop %v3861
        %vm3865 = vweird.f32 %v2330
        %v3866 = vadd.s32 %v3862, 3
        %v3867 = vand.u32 %v3866, 3
        %vm3868 = vcmp.lt.s32.totalorder %v3867, 2
        %vm3869 = vcmp.eq.s32.totalorder %v3867, 0
        %v3870 = vxor.u32 %v3864, 2147483648
        %v3871 = vsel %vm3869, %v3863, %v3870
        %vm3872 = vcmp.eq.s32.totalorder %v3867, 2
        %v3873 = vxor.u32 %v3863, 2147483648
        %v3874 = vsel %vm3872, %v3873, %v3864
        %v3875 = vsel %vm3868, %v3871, %v3874
        %v3876 = vsel %vm3865, nan, %v3875
        %v3877 = vand.u32 2147483647, %v2417
        %vm3878 = vcmp.le.f32.partialorder %v3877, 0.7853982
        %vm3879 = vcmp.lt.s32.totalorder %v2417, 0
        %v3880 = vand.u32 %v2417, 2139095040
        %v3881 = vshrl.u32 %v3880, 23
        %v3882 = vsub.s32 %v3881, 127
        %v3883 = vand.u32 2147483647, %v2417
        %v3884 = vand.u32 %v3883, 8388607
        %v3885 = vor.u32 %v3884, 8388608
        %v3886 = vsub.s32 0, %v3885
        %v3887 = vadd.s32 %v3882, 1
        %vm3888 = vcmp.gt.s32.totalorder %v3887, 0
        %v3889 = vsel %vm3888, %v3887, 0
        %v3890 = vshrl.u32 %v3889, 5
        %v3891 = vand.u32 %v3889, 31
        %v3892 = vsub.s32 32, %v3891
        %v3893 = vshrl.u32 683565275, %v3892
        %v3894 = vshll.u32 683565275, %v3891
        %v3895 = vshrl.u32 2475754826, %v3892
        %v3896 = vor.u32 %v3894, %v3895
        %v3897 = vshll.u32 2475754826, %v3891
        %v3898 = vshrl.u32 2131351028, %v3892
        %v3899 = vor.u32 %v3897, %v3898
        %v3900 = vshll.u32 2131351028, %v3891
        %v3901 = vshrl.u32 2102212464, %v3892
        %v3902 = vor.u32 %v3900, %v3901
        %v3903 = vshll.u32 2102212464, %v3891
        %v3904 = vshrl.u32 920167782, %v3892
        %v3905 = vor.u32 %v3903, %v3904
        %v3906 = vshll.u32 920167782, %v3891
        %v3907 = vshrl.u32 1326507024, %v3892
        %v3908 = vor.u32 %v3906, %v3907
        %vm3909 = vcmp.lt.s32.totalorder %v3890, 1
        %vm3910 = vcmp.lt.s32.totalorder %v3890, 2
        %vm3911 = vcmp.lt.s32.totalorder %v3890, 3
        %vm3912 = vcmp.lt.s32.totalorder %v3890, 4
        %v3913 = vsel %vm3909, %v3893, %v3896
        %v3914 = vsel %vm3912, %v3902, 2102212464
        %v3915 = vsel %vm3911, %v3899, %v3914
        %v3916 = vsel %vm3910, %v3913, %v3915
        %v3917 = vsel %vm3909, %v3896, %v3899
        %v3918 = vsel %vm3912, %v3905, 920167782
        %v3919 = vsel %vm3911, %v3902, %v3918
        %v3920 = vsel %vm3910, %v3917, %v3919
        %v3921 = vsel %vm3909, %v3899, %v3902
        %v3922 = vsel %vm3912, %v3908, 1326507024
        %v3923 = vsel %vm3911, %v3905, %v3922
        %v3924 = vsel %vm3910, %v3921, %v3923
        %v3925 = vshll.u32 %v3885, 8
        %v3926 = vmul.u32.u64.compose %v3925, %v3924
        %v3927 = vextract.low.u32 %v3926
        %v3928 = vextract.high.u32 %v3926
        %v3929 = vmul.u32.u64.compose %v3925, %v3920
        %v3930 = vextract.low.u32 %v3929
        %v3931 = vextract.high.u32 %v3929
        %v3932 = vmul.u32 %v3925, %v3916
        %v3933 = vadd.s32 %v3928, %v3930
        %vm3934 = vc.u32 %v3928, %v3930
        %v3935 = vadd.s32 %v3931, 1
        %v3936 = vsel %vm3934, %v3935, %v3931
        %v3937 = vadd.s32 %v3932, %v3936
        %v3938 = vadd.s32 %v3937, 536870912
        %v3939 = vshrl.u32 %v3938, 30
        %v3940 = vshll.u32 %v3939, 30
        %v3941 = vsub.s32 %v3937, %v3940
        %vm3942 = vcmp.lt.s32.totalorder %v3941, 0
        %v3943 = vsub.s32 0, %v3941
        %v3944 = vsel %vm3942, %v3943, %v3941
        %v3945 = vclz %v3944
        %v3946 = vsub.s32 %v3945, 2
        %vm3947 = vcmp.gt.s32.totalorder 0, %v3946
        %v3948 = vsel %vm3947, 0, %v3946
        %v3949 = vsub.s32 32, %v3948
        %v3950 = vshll.u32 %v3941, %v3948
        %v3951 = vshrl.u32 %v3933, %v3949
        %v3952 = vor.u32 %v3950, %v3951
        %v3953 = vsub.s32 4294967266, %v3948
        %v3954 = vadd.s32 %v3953, 127
        %v3955 = vshll.u32 %v3954, 23
        %v3956 = vor.u32 4788187, %v3955
        %v3957 = vand.u32 2147483647, %v3956
        %v3959 = vcvt.s32.f32 %v3952
        %v3960 = vmul.f32 %v3959, %v3957
        %v3961 = vxor.u32 %v3960, 2147483648
        %v3962 = vsel %vm3879, %v3961, %v3960
        %v3963 = vsub.s32 4, %v3939
        %v3964 = vsel %vm3879, %v3963, %v3939
        %v3965 = vsel %vm3878, %v2417, %v3962
        %v3966 = vsel %vm3878, 0, %v3964
        %v3967 = vcosq.f32.pop %v3965
        %v3968 = vsinq.f32.pop %v3965
        %vm3969 = vweird.f32 %v2417
        %v3970 = vadd.s32 %v3966, 3
        %v3971 = vand.u32 %v3970, 3
        %vm3972 = vcmp.lt.s32.totalorder %v3971, 2
        %vm3973 = vcmp.eq.s32.totalorder %v3971, 0
        %v3974 = vxor.u32 %v3968, 2147483648
        %v3975 = vsel %vm3973, %v3967, %v3974
        %vm3976 = vcmp.eq.s32.totalorder %v3971, 2
        %v3977 = vxor.u32 %v3967, 2147483648
        %v3978 = vsel %vm3976, %v3977, %v3968
        %v3979 = vsel %vm3972, %v3975, %v3978
        %v3980 = vsel %vm3969, nan, %v3979
        %v3981 = vand.u32 2147483647, %v2419
        %vm3982 = vcmp.le.f32.partialorder %v3981, 0.7853982
        %vm3983 = vcmp.lt.s32.totalorder %v2419, 0
        %v3984 = vand.u32 %v2419, 2139095040
        %v3985 = vshrl.u32 %v3984, 23
        %v3986 = vsub.s32 %v3985, 127
        %v3987 = vand.u32 2147483647, %v2419
        %v3988 = vand.u32 %v3987, 8388607
        %v3989 = vor.u32 %v3988, 8388608
        %v3990 = vsub.s32 0, %v3989
        %v3991 = vadd.s32 %v3986, 1
        %vm3992 = vcmp.gt.s32.totalorder %v3991, 0
        %v3993 = vsel %vm3992, %v3991, 0
        %v3994 = vshrl.u32 %v3993, 5
        %v3995 = vand.u32 %v3993, 31
        %v3996 = vsub.s32 32, %v3995
        %v3997 = vshrl.u32 683565275, %v3996
        %v3998 = vshll.u32 683565275, %v3995
        %v3999 = vshrl.u32 2475754826, %v3996
        %v4000 = vor.u32 %v3998, %v3999
        %v4001 = vshll.u32 2475754826, %v3995
        %v4002 = vshrl.u32 2131351028, %v3996
        %v4003 = vor.u32 %v4001, %v4002
        %v4004 = vshll.u32 2131351028, %v3995
        %v4005 = vshrl.u32 2102212464, %v3996
        %v4006 = vor.u32 %v4004, %v4005
        %v4007 = vshll.u32 2102212464, %v3995
        %v4008 = vshrl.u32 920167782, %v3996
        %v4009 = vor.u32 %v4007, %v4008
        %v4010 = vshll.u32 920167782, %v3995
        %v4011 = vshrl.u32 1326507024, %v3996
        %v4012 = vor.u32 %v4010, %v4011
        %vm4013 = vcmp.lt.s32.totalorder %v3994, 1
        %vm4014 = vcmp.lt.s32.totalorder %v3994, 2
        %vm4015 = vcmp.lt.s32.totalorder %v3994, 3
        %vm4016 = vcmp.lt.s32.totalorder %v3994, 4
        %v4017 = vsel %vm4013, %v3997, %v4000
        %v4018 = vsel %vm4016, %v4006, 2102212464
        %v4019 = vsel %vm4015, %v4003, %v4018
        %v4020 = vsel %vm4014, %v4017, %v4019
        %v4021 = vsel %vm4013, %v4000, %v4003
        %v4022 = vsel %vm4016, %v4009, 920167782
        %v4023 = vsel %vm4015, %v4006, %v4022
        %v4024 = vsel %vm4014, %v4021, %v4023
        %v4025 = vsel %vm4013, %v4003, %v4006
        %v4026 = vsel %vm4016, %v4012, 1326507024
        %v4027 = vsel %vm4015, %v4009, %v4026
        %v4028 = vsel %vm4014, %v4025, %v4027
        %v4029 = vshll.u32 %v3989, 8
        %v4030 = vmul.u32.u64.compose %v4029, %v4028
        %v4031 = vextract.low.u32 %v4030
        %v4032 = vextract.high.u32 %v4030
        %v4033 = vmul.u32.u64.compose %v4029, %v4024
        %v4034 = vextract.low.u32 %v4033
        %v4035 = vextract.high.u32 %v4033
        %v4036 = vmul.u32 %v4029, %v4020
        %v4037 = vadd.s32 %v4032, %v4034
        %vm4038 = vc.u32 %v4032, %v4034
        %v4039 = vadd.s32 %v4035, 1
        %v4040 = vsel %vm4038, %v4039, %v4035
        %v4041 = vadd.s32 %v4036, %v4040
        %v4042 = vadd.s32 %v4041, 536870912
        %v4043 = vshrl.u32 %v4042, 30
        %v4044 = vshll.u32 %v4043, 30
        %v4045 = vsub.s32 %v4041, %v4044
        %vm4046 = vcmp.lt.s32.totalorder %v4045, 0
        %v4047 = vsub.s32 0, %v4045
        %v4048 = vsel %vm4046, %v4047, %v4045
        %v4049 = vclz %v4048
        %v4050 = vsub.s32 %v4049, 2
        %vm4051 = vcmp.gt.s32.totalorder 0, %v4050
        %v4052 = vsel %vm4051, 0, %v4050
        %v4053 = vsub.s32 32, %v4052
        %v4054 = vshll.u32 %v4045, %v4052
        %v4055 = vshrl.u32 %v4037, %v4053
        %v4056 = vor.u32 %v4054, %v4055
        %v4057 = vsub.s32 4294967266, %v4052
        %v4058 = vadd.s32 %v4057, 127
        %v4059 = vshll.u32 %v4058, 23
        %v4060 = vor.u32 4788187, %v4059
        %v4061 = vand.u32 2147483647, %v4060
        %v4063 = vcvt.s32.f32 %v4056
        %v4064 = vmul.f32 %v4063, %v4061
        %v4065 = vxor.u32 %v4064, 2147483648
        %v4066 = vsel %vm3983, %v4065, %v4064
        %v4067 = vsub.s32 4, %v4043
        %v4068 = vsel %vm3983, %v4067, %v4043
        %v4069 = vsel %vm3982, %v2419, %v4066
        %v4070 = vsel %vm3982, 0, %v4068
        %v4071 = vcosq.f32.pop %v4069
        %v4072 = vsinq.f32.pop %v4069
        %vm4073 = vweird.f32 %v2419
        %v4074 = vadd.s32 %v4070, 3
        %v4075 = vand.u32 %v4074, 3
        %vm4076 = vcmp.lt.s32.totalorder %v4075, 2
        %vm4077 = vcmp.eq.s32.totalorder %v4075, 0
        %v4078 = vxor.u32 %v4072, 2147483648
        %v4079 = vsel %vm4077, %v4071, %v4078
        %vm4080 = vcmp.eq.s32.totalorder %v4075, 2
        %v4081 = vxor.u32 %v4071, 2147483648
        %v4082 = vsel %vm4080, %v4081, %v4072
        %v4083 = vsel %vm4076, %v4079, %v4082
        %v4084 = vsel %vm4073, nan, %v4083
        %v4085 = vld [vmem:[%s5] sm:$0xff]
        %v4086 = vld [vmem:[%s5 + $0x8] sm:$0xff]
        %v4087 = vld [vmem:[%s5 + $0x10] sm:$0xff]
        %v4088 = vld [vmem:[%s5 + $0x18] sm:$0xff]
        %v4089 = vld [vmem:[%s6] sm:$0xff]
        %v4090 = vld [vmem:[%s6 + $0x8] sm:$0xff]
        %v4091 = vld [vmem:[%s6 + $0x10] sm:$0xff]
        %v4092 = vld [vmem:[%s6 + $0x18] sm:$0xff]
        %4094 = vset.pattern.permute.xlu0 0
        %4095 = vperm.xlu0 %4094, %v4089
        %v4096 = vpop.permute.xlu0 %4095
        %4099 = vset.pattern.permute.xlu0 0
        %4100 = vperm.xlu0 %4099, %v4090
        %v4101 = vpop.permute.xlu0 %4100
        %4104 = vset.pattern.permute.xlu0 0
        %4105 = vperm.xlu0 %4104, %v4091
        %v4106 = vpop.permute.xlu0 %4105
        %4109 = vset.pattern.permute.xlu0 0
        %4110 = vperm.xlu0 %4109, %v4092
        %v4111 = vpop.permute.xlu0 %4110
        %v4114 = vsel %vm2230, %v4085, 0
        %v4117 = vsel %vm2230, %v4086, 0
        %v4120 = vsel %vm2230, %v4087, 0
        %v4123 = vsel %vm2230, %v4088, 0
        %4125 = vmatprep.subr.mxu0 0.0
        %4126 = vmatpush1.msra.mxu0 0.0
        %4127 = vmatprep.subr.mxu0 0.0
        %4128 = vmatpush1.msra.mxu0 0.0
        %4129 = vmatprep.subr.mxu0 0.0
        %4130 = vmatpush1.msra.mxu0 0.0
        %4131 = vmatprep.subr.mxu0 0.0
        %4132 = vmatpush1.msra.mxu0 0.0
        %4133 = vmatprep.subr.mxu0 0.0
        %4134 = vmatpush1.msra.mxu0 0.0
        %4135 = vmatprep.subr.mxu0 0.0
        %4136 = vmatpush1.msra.mxu0 0.0
        %4137 = vmatprep.subr.mxu0 0.0
        %4138 = vmatpush1.msra.mxu0 0.0
        %4139 = vmatprep.subr.mxu0 0.0
        %4140 = vmatpush1.msra.mxu0 0.0
        %4141 = vmatprep.subr.mxu0 0.0
        %4142 = vmatpush1.msra.mxu0 0.0
        %4143 = vmatprep.subr.mxu0 0.0
        %4144 = vmatpush1.msra.mxu0 0.0
        %4145 = vmatprep.subr.mxu0 0.0
        %4146 = vmatpush1.msra.mxu0 0.0
        %4147 = vmatprep.subr.mxu0 0.0
        %4148 = vmatpush1.msra.mxu0 0.0
        %4149 = vmatprep.subr.mxu0 %v3876
        %4150 = vmatpush1.msra.mxu0 %v3772
        %4151 = vmatprep.subr.mxu0 %v3460
        %4152 = vmatpush1.msra.mxu0 %v3356
        %4153 = vmatprep.subr.mxu0 %v3044
        %4154 = vmatpush1.msra.mxu0 %v2940
        %4155 = vmatprep.subr.mxu0 %v2628
        %4156 = vmatpush1.msra.mxu0 %v2524
        %4157 = vmatprep.subr.mxu0 0.0
        %4158 = vmatpush2.msra.mxu0 0.0
        %4159 = vmatprep.subr.mxu0 0.0
        %4160 = vmatpush2.msra.mxu0 0.0
        %4161 = vmatprep.subr.mxu0 0.0
        %4162 = vmatpush2.msra.mxu0 0.0
        %4163 = vmatprep.subr.mxu0 0.0
        %4164 = vmatpush2.msra.mxu0 0.0
        %4165 = vmatprep.subr.mxu0 0.0
        %4166 = vmatpush2.msra.mxu0 0.0
        %4167 = vmatprep.subr.mxu0 0.0
        %4168 = vmatpush2.msra.mxu0 0.0
        %4169 = vmatprep.subr.mxu0 0.0
        %4170 = vmatpush2.msra.mxu0 0.0
        %4171 = vmatprep.subr.mxu0 0.0
        %4172 = vmatpush2.msra.mxu0 0.0
        %4173 = vmatprep.subr.mxu0 0.0
        %4174 = vmatpush2.msra.mxu0 0.0
        %4175 = vmatprep.subr.mxu0 0.0
        %4176 = vmatpush2.msra.mxu0 0.0
        %4177 = vmatprep.subr.mxu0 0.0
        %4178 = vmatpush2.msra.mxu0 0.0
        %4179 = vmatprep.subr.mxu0 0.0
        %4180 = vmatpush2.msra.mxu0 0.0
        %4181 = vmatprep.subr.mxu0 0.0
        %4182 = vmatpush2.msra.mxu0 0.0
        %4183 = vmatprep.subr.mxu0 0.0
        %4184 = vmatpush2.msra.mxu0 0.0
        %4185 = vmatprep.subr.mxu0 0.0
        %4186 = vmatpush2.msra.mxu0 0.0
        %4187 = vmatprep.subr.mxu0 0.0
        %4188 = vmatpush2.msra.mxu0 0.0
        %4189 = vmatprep.mubr.f32.mxu0 0.0
        %4190 = vmatmul.mubr.f32.gmra.mxu0 %v4114
        %v4191 = vpop.f32.mrf.mxu0
        %v4192 = vadd.f32 %v4096, %v4191
        %v4193 = vpop.f32.mrf.mxu0
        %v4194 = vadd.f32 %v4096, %v4193
        %4195 = vmatprep.mubr.f32.mxu0 0.0
        %4196 = vmatmul.mubr.f32.gmra.mxu0 %v4117
        %v4197 = vpop.f32.mrf.mxu0
        %v4198 = vadd.f32 %v4101, %v4197
        %v4199 = vpop.f32.mrf.mxu0
        %v4200 = vadd.f32 %v4101, %v4199
        %4201 = vmatprep.mubr.f32.mxu0 0.0
        %4202 = vmatmul.mubr.f32.gmra.mxu0 %v4120
        %v4203 = vpop.f32.mrf.mxu0
        %v4204 = vadd.f32 %v4106, %v4203
        %v4205 = vpop.f32.mrf.mxu0
        %v4206 = vadd.f32 %v4106, %v4205
        %4207 = vmatprep.mubr.f32.mxu0 0.0
        %4208 = vmatmul.mubr.f32.gmra.mxu0 %v4123
        %v4209 = vpop.f32.mrf.mxu0
        %v4210 = vadd.f32 %v4111, %v4209
        %v4211 = vpop.f32.mrf.mxu0
        %v4212 = vadd.f32 %v4111, %v4211
        %4213 = vdwg.mxu0
        %4214 = vmatprep.subr.mxu0 0.0
        %4215 = vmatpush1.msra.mxu0 0.0
        %4216 = vmatprep.subr.mxu0 0.0
        %4217 = vmatpush1.msra.mxu0 0.0
        %4218 = vmatprep.subr.mxu0 0.0
        %4219 = vmatpush1.msra.mxu0 0.0
        %4220 = vmatprep.subr.mxu0 0.0
        %4221 = vmatpush1.msra.mxu0 0.0
        %4222 = vmatprep.subr.mxu0 0.0
        %4223 = vmatpush1.msra.mxu0 0.0
        %4224 = vmatprep.subr.mxu0 0.0
        %4225 = vmatpush1.msra.mxu0 0.0
        %4226 = vmatprep.subr.mxu0 0.0
        %4227 = vmatpush1.msra.mxu0 0.0
        %4228 = vmatprep.subr.mxu0 0.0
        %4229 = vmatpush1.msra.mxu0 0.0
        %4230 = vmatprep.subr.mxu0 0.0
        %4231 = vmatpush1.msra.mxu0 0.0
        %4232 = vmatprep.subr.mxu0 0.0
        %4233 = vmatpush1.msra.mxu0 0.0
        %4234 = vmatprep.subr.mxu0 0.0
        %4235 = vmatpush1.msra.mxu0 0.0
        %4236 = vmatprep.subr.mxu0 0.0
        %4237 = vmatpush1.msra.mxu0 0.0
        %4238 = vmatprep.subr.mxu0 %v4084
        %4239 = vmatpush1.msra.mxu0 %v3980
        %4240 = vmatprep.subr.mxu0 %v3668
        %4241 = vmatpush1.msra.mxu0 %v3564
        %4242 = vmatprep.subr.mxu0 %v3252
        %4243 = vmatpush1.msra.mxu0 %v3148
        %4244 = vmatprep.subr.mxu0 %v2836
        %4245 = vmatpush1.msra.mxu0 %v2732
        %4246 = vmatprep.subr.mxu0 0.0
        %4247 = vmatpush2.msra.mxu0 0.0
        %4248 = vmatprep.subr.mxu0 0.0
        %4249 = vmatpush2.msra.mxu0 0.0
        %4250 = vmatprep.subr.mxu0 0.0
        %4251 = vmatpush2.msra.mxu0 0.0
        %4252 = vmatprep.subr.mxu0 0.0
        %4253 = vmatpush2.msra.mxu0 0.0
        %4254 = vmatprep.subr.mxu0 0.0
        %4255 = vmatpush2.msra.mxu0 0.0
        %4256 = vmatprep.subr.mxu0 0.0
        %4257 = vmatpush2.msra.mxu0 0.0
        %4258 = vmatprep.subr.mxu0 0.0
        %4259 = vmatpush2.msra.mxu0 0.0
        %4260 = vmatprep.subr.mxu0 0.0
        %4261 = vmatpush2.msra.mxu0 0.0
        %4262 = vmatprep.subr.mxu0 0.0
        %4263 = vmatpush2.msra.mxu0 0.0
        %4264 = vmatprep.subr.mxu0 0.0
        %4265 = vmatpush2.msra.mxu0 0.0
        %4266 = vmatprep.subr.mxu0 0.0
        %4267 = vmatpush2.msra.mxu0 0.0
        %4268 = vmatprep.subr.mxu0 0.0
        %4269 = vmatpush2.msra.mxu0 0.0
        %4270 = vmatprep.subr.mxu0 0.0
        %4271 = vmatpush2.msra.mxu0 0.0
        %4272 = vmatprep.subr.mxu0 0.0
        %4273 = vmatpush2.msra.mxu0 0.0
        %4274 = vmatprep.subr.mxu0 0.0
        %4275 = vmatpush2.msra.mxu0 0.0
        %4276 = vmatprep.subr.mxu0 0.0
        %4277 = vmatpush2.msra.mxu0 0.0
        %4278 = vmatprep.mubr.f32.mxu0 0.0
        %4279 = vmatmul.mubr.f32.gmra.mxu0 %v4114
        %v4280 = vpop.f32.mrf.mxu0
        %v4281 = vadd.f32 %v4096, %v4280
        %v4282 = vpop.f32.mrf.mxu0
        %v4283 = vadd.f32 %v4096, %v4282
        %4284 = vmatprep.mubr.f32.mxu0 0.0
        %4285 = vmatmul.mubr.f32.gmra.mxu0 %v4117
        %v4286 = vpop.f32.mrf.mxu0
        %v4287 = vadd.f32 %v4101, %v4286
        %v4288 = vpop.f32.mrf.mxu0
        %v4289 = vadd.f32 %v4101, %v4288
        %4290 = vmatprep.mubr.f32.mxu0 0.0
        %4291 = vmatmul.mubr.f32.gmra.mxu0 %v4120
        %v4292 = vpop.f32.mrf.mxu0
        %v4293 = vadd.f32 %v4106, %v4292
        %v4294 = vpop.f32.mrf.mxu0
        %v4295 = vadd.f32 %v4106, %v4294
        %4296 = vmatprep.mubr.f32.mxu0 0.0
        %4297 = vmatmul.mubr.f32.gmra.mxu0 %v4123
        %v4298 = vpop.f32.mrf.mxu0
        %v4299 = vadd.f32 %v4111, %v4298
        %v4300 = vpop.f32.mrf.mxu0
        %v4301 = vadd.f32 %v4111, %v4300
        %4302 = vdwg.mxu0
        %v4303 = vand.u32 2147483647, %v4192
        %vm4304 = vcmp.le.f32.partialorder %v4303, 0.7853982
        %vm4305 = vcmp.lt.s32.totalorder %v4192, 0
        %v4306 = vand.u32 %v4192, 2139095040
        %v4307 = vshrl.u32 %v4306, 23
        %v4308 = vsub.s32 %v4307, 127
        %v4309 = vand.u32 2147483647, %v4192
        %v4310 = vand.u32 %v4309, 8388607
        %v4311 = vor.u32 %v4310, 8388608
        %v4312 = vsub.s32 0, %v4311
        %v4313 = vadd.s32 %v4308, 1
        %vm4314 = vcmp.gt.s32.totalorder %v4313, 0
        %v4315 = vsel %vm4314, %v4313, 0
        %v4316 = vshrl.u32 %v4315, 5
        %v4317 = vand.u32 %v4315, 31
        %v4318 = vsub.s32 32, %v4317
        %v4319 = vshrl.u32 683565275, %v4318
        %v4320 = vshll.u32 683565275, %v4317
        %v4321 = vshrl.u32 2475754826, %v4318
        %v4322 = vor.u32 %v4320, %v4321
        %v4323 = vshll.u32 2475754826, %v4317
        %v4324 = vshrl.u32 2131351028, %v4318
        %v4325 = vor.u32 %v4323, %v4324
        %v4326 = vshll.u32 2131351028, %v4317
        %v4327 = vshrl.u32 2102212464, %v4318
        %v4328 = vor.u32 %v4326, %v4327
        %v4329 = vshll.u32 2102212464, %v4317
        %v4330 = vshrl.u32 920167782, %v4318
        %v4331 = vor.u32 %v4329, %v4330
        %v4332 = vshll.u32 920167782, %v4317
        %v4333 = vshrl.u32 1326507024, %v4318
        %v4334 = vor.u32 %v4332, %v4333
        %vm4335 = vcmp.lt.s32.totalorder %v4316, 1
        %vm4336 = vcmp.lt.s32.totalorder %v4316, 2
        %vm4337 = vcmp.lt.s32.totalorder %v4316, 3
        %vm4338 = vcmp.lt.s32.totalorder %v4316, 4
        %v4339 = vsel %vm4335, %v4319, %v4322
        %v4340 = vsel %vm4338, %v4328, 2102212464
        %v4341 = vsel %vm4337, %v4325, %v4340
        %v4342 = vsel %vm4336, %v4339, %v4341
        %v4343 = vsel %vm4335, %v4322, %v4325
        %v4344 = vsel %vm4338, %v4331, 920167782
        %v4345 = vsel %vm4337, %v4328, %v4344
        %v4346 = vsel %vm4336, %v4343, %v4345
        %v4347 = vsel %vm4335, %v4325, %v4328
        %v4348 = vsel %vm4338, %v4334, 1326507024
        %v4349 = vsel %vm4337, %v4331, %v4348
        %v4350 = vsel %vm4336, %v4347, %v4349
        %v4351 = vshll.u32 %v4311, 8
        %v4352 = vmul.u32.u64.compose %v4351, %v4350
        %v4353 = vextract.low.u32 %v4352
        %v4354 = vextract.high.u32 %v4352
        %v4355 = vmul.u32.u64.compose %v4351, %v4346
        %v4356 = vextract.low.u32 %v4355
        %v4357 = vextract.high.u32 %v4355
        %v4358 = vmul.u32 %v4351, %v4342
        %v4359 = vadd.s32 %v4354, %v4356
        %vm4360 = vc.u32 %v4354, %v4356
        %v4361 = vadd.s32 %v4357, 1
        %v4362 = vsel %vm4360, %v4361, %v4357
        %v4363 = vadd.s32 %v4358, %v4362
        %v4364 = vadd.s32 %v4363, 536870912
        %v4365 = vshrl.u32 %v4364, 30
        %v4366 = vshll.u32 %v4365, 30
        %v4367 = vsub.s32 %v4363, %v4366
        %vm4368 = vcmp.lt.s32.totalorder %v4367, 0
        %v4369 = vsub.s32 0, %v4367
        %v4370 = vsel %vm4368, %v4369, %v4367
        %v4371 = vclz %v4370
        %v4372 = vsub.s32 %v4371, 2
        %vm4373 = vcmp.gt.s32.totalorder 0, %v4372
        %v4374 = vsel %vm4373, 0, %v4372
        %v4375 = vsub.s32 32, %v4374
        %v4376 = vshll.u32 %v4367, %v4374
        %v4377 = vshrl.u32 %v4359, %v4375
        %v4378 = vor.u32 %v4376, %v4377
        %v4379 = vsub.s32 4294967266, %v4374
        %v4380 = vadd.s32 %v4379, 127
        %v4381 = vshll.u32 %v4380, 23
        %v4382 = vor.u32 4788187, %v4381
        %v4383 = vand.u32 2147483647, %v4382
        %v4385 = vcvt.s32.f32 %v4378
        %v4386 = vmul.f32 %v4385, %v4383
        %v4387 = vxor.u32 %v4386, 2147483648
        %v4388 = vsel %vm4305, %v4387, %v4386
        %v4389 = vsub.s32 4, %v4365
        %v4390 = vsel %vm4305, %v4389, %v4365
        %v4391 = vsel %vm4304, %v4192, %v4388
        %v4392 = vsel %vm4304, 0, %v4390
        %v4393 = vcosq.f32.pop %v4391
        %v4394 = vsinq.f32.pop %v4391
        %vm4395 = vweird.f32 %v4192
        %v4396 = vadd.s32 %v4392, 3
        %v4397 = vand.u32 %v4396, 3
        %vm4398 = vcmp.lt.s32.totalorder %v4397, 2
        %vm4399 = vcmp.eq.s32.totalorder %v4397, 0
        %v4400 = vxor.u32 %v4394, 2147483648
        %v4401 = vsel %vm4399, %v4393, %v4400
        %vm4402 = vcmp.eq.s32.totalorder %v4397, 2
        %v4403 = vxor.u32 %v4393, 2147483648
        %v4404 = vsel %vm4402, %v4403, %v4394
        %v4405 = vsel %vm4398, %v4401, %v4404
        %v4406 = vsel %vm4395, nan, %v4405
        %v4407 = vand.u32 2147483647, %v4194
        %vm4408 = vcmp.le.f32.partialorder %v4407, 0.7853982
        %vm4409 = vcmp.lt.s32.totalorder %v4194, 0
        %v4410 = vand.u32 %v4194, 2139095040
        %v4411 = vshrl.u32 %v4410, 23
        %v4412 = vsub.s32 %v4411, 127
        %v4413 = vand.u32 2147483647, %v4194
        %v4414 = vand.u32 %v4413, 8388607
        %v4415 = vor.u32 %v4414, 8388608
        %v4416 = vsub.s32 0, %v4415
        %v4417 = vadd.s32 %v4412, 1
        %vm4418 = vcmp.gt.s32.totalorder %v4417, 0
        %v4419 = vsel %vm4418, %v4417, 0
        %v4420 = vshrl.u32 %v4419, 5
        %v4421 = vand.u32 %v4419, 31
        %v4422 = vsub.s32 32, %v4421
        %v4423 = vshrl.u32 683565275, %v4422
        %v4424 = vshll.u32 683565275, %v4421
        %v4425 = vshrl.u32 2475754826, %v4422
        %v4426 = vor.u32 %v4424, %v4425
        %v4427 = vshll.u32 2475754826, %v4421
        %v4428 = vshrl.u32 2131351028, %v4422
        %v4429 = vor.u32 %v4427, %v4428
        %v4430 = vshll.u32 2131351028, %v4421
        %v4431 = vshrl.u32 2102212464, %v4422
        %v4432 = vor.u32 %v4430, %v4431
        %v4433 = vshll.u32 2102212464, %v4421
        %v4434 = vshrl.u32 920167782, %v4422
        %v4435 = vor.u32 %v4433, %v4434
        %v4436 = vshll.u32 920167782, %v4421
        %v4437 = vshrl.u32 1326507024, %v4422
        %v4438 = vor.u32 %v4436, %v4437
        %vm4439 = vcmp.lt.s32.totalorder %v4420, 1
        %vm4440 = vcmp.lt.s32.totalorder %v4420, 2
        %vm4441 = vcmp.lt.s32.totalorder %v4420, 3
        %vm4442 = vcmp.lt.s32.totalorder %v4420, 4
        %v4443 = vsel %vm4439, %v4423, %v4426
        %v4444 = vsel %vm4442, %v4432, 2102212464
        %v4445 = vsel %vm4441, %v4429, %v4444
        %v4446 = vsel %vm4440, %v4443, %v4445
        %v4447 = vsel %vm4439, %v4426, %v4429
        %v4448 = vsel %vm4442, %v4435, 920167782
        %v4449 = vsel %vm4441, %v4432, %v4448
        %v4450 = vsel %vm4440, %v4447, %v4449
        %v4451 = vsel %vm4439, %v4429, %v4432
        %v4452 = vsel %vm4442, %v4438, 1326507024
        %v4453 = vsel %vm4441, %v4435, %v4452
        %v4454 = vsel %vm4440, %v4451, %v4453
        %v4455 = vshll.u32 %v4415, 8
        %v4456 = vmul.u32.u64.compose %v4455, %v4454
        %v4457 = vextract.low.u32 %v4456
        %v4458 = vextract.high.u32 %v4456
        %v4459 = vmul.u32.u64.compose %v4455, %v4450
        %v4460 = vextract.low.u32 %v4459
        %v4461 = vextract.high.u32 %v4459
        %v4462 = vmul.u32 %v4455, %v4446
        %v4463 = vadd.s32 %v4458, %v4460
        %vm4464 = vc.u32 %v4458, %v4460
        %v4465 = vadd.s32 %v4461, 1
        %v4466 = vsel %vm4464, %v4465, %v4461
        %v4467 = vadd.s32 %v4462, %v4466
        %v4468 = vadd.s32 %v4467, 536870912
        %v4469 = vshrl.u32 %v4468, 30
        %v4470 = vshll.u32 %v4469, 30
        %v4471 = vsub.s32 %v4467, %v4470
        %vm4472 = vcmp.lt.s32.totalorder %v4471, 0
        %v4473 = vsub.s32 0, %v4471
        %v4474 = vsel %vm4472, %v4473, %v4471
        %v4475 = vclz %v4474
        %v4476 = vsub.s32 %v4475, 2
        %vm4477 = vcmp.gt.s32.totalorder 0, %v4476
        %v4478 = vsel %vm4477, 0, %v4476
        %v4479 = vsub.s32 32, %v4478
        %v4480 = vshll.u32 %v4471, %v4478
        %v4481 = vshrl.u32 %v4463, %v4479
        %v4482 = vor.u32 %v4480, %v4481
        %v4483 = vsub.s32 4294967266, %v4478
        %v4484 = vadd.s32 %v4483, 127
        %v4485 = vshll.u32 %v4484, 23
        %v4486 = vor.u32 4788187, %v4485
        %v4487 = vand.u32 2147483647, %v4486
        %v4489 = vcvt.s32.f32 %v4482
        %v4490 = vmul.f32 %v4489, %v4487
        %v4491 = vxor.u32 %v4490, 2147483648
        %v4492 = vsel %vm4409, %v4491, %v4490
        %v4493 = vsub.s32 4, %v4469
        %v4494 = vsel %vm4409, %v4493, %v4469
        %v4495 = vsel %vm4408, %v4194, %v4492
        %v4496 = vsel %vm4408, 0, %v4494
        %v4497 = vcosq.f32.pop %v4495
        %v4498 = vsinq.f32.pop %v4495
        %vm4499 = vweird.f32 %v4194
        %v4500 = vadd.s32 %v4496, 3
        %v4501 = vand.u32 %v4500, 3
        %vm4502 = vcmp.lt.s32.totalorder %v4501, 2
        %vm4503 = vcmp.eq.s32.totalorder %v4501, 0
        %v4504 = vxor.u32 %v4498, 2147483648
        %v4505 = vsel %vm4503, %v4497, %v4504
        %vm4506 = vcmp.eq.s32.totalorder %v4501, 2
        %v4507 = vxor.u32 %v4497, 2147483648
        %v4508 = vsel %vm4506, %v4507, %v4498
        %v4509 = vsel %vm4502, %v4505, %v4508
        %v4510 = vsel %vm4499, nan, %v4509
        %v4511 = vand.u32 2147483647, %v4281
        %vm4512 = vcmp.le.f32.partialorder %v4511, 0.7853982
        %vm4513 = vcmp.lt.s32.totalorder %v4281, 0
        %v4514 = vand.u32 %v4281, 2139095040
        %v4515 = vshrl.u32 %v4514, 23
        %v4516 = vsub.s32 %v4515, 127
        %v4517 = vand.u32 2147483647, %v4281
        %v4518 = vand.u32 %v4517, 8388607
        %v4519 = vor.u32 %v4518, 8388608
        %v4520 = vsub.s32 0, %v4519
        %v4521 = vadd.s32 %v4516, 1
        %vm4522 = vcmp.gt.s32.totalorder %v4521, 0
        %v4523 = vsel %vm4522, %v4521, 0
        %v4524 = vshrl.u32 %v4523, 5
        %v4525 = vand.u32 %v4523, 31
        %v4526 = vsub.s32 32, %v4525
        %v4527 = vshrl.u32 683565275, %v4526
        %v4528 = vshll.u32 683565275, %v4525
        %v4529 = vshrl.u32 2475754826, %v4526
        %v4530 = vor.u32 %v4528, %v4529
        %v4531 = vshll.u32 2475754826, %v4525
        %v4532 = vshrl.u32 2131351028, %v4526
        %v4533 = vor.u32 %v4531, %v4532
        %v4534 = vshll.u32 2131351028, %v4525
        %v4535 = vshrl.u32 2102212464, %v4526
        %v4536 = vor.u32 %v4534, %v4535
        %v4537 = vshll.u32 2102212464, %v4525
        %v4538 = vshrl.u32 920167782, %v4526
        %v4539 = vor.u32 %v4537, %v4538
        %v4540 = vshll.u32 920167782, %v4525
        %v4541 = vshrl.u32 1326507024, %v4526
        %v4542 = vor.u32 %v4540, %v4541
        %vm4543 = vcmp.lt.s32.totalorder %v4524, 1
        %vm4544 = vcmp.lt.s32.totalorder %v4524, 2
        %vm4545 = vcmp.lt.s32.totalorder %v4524, 3
        %vm4546 = vcmp.lt.s32.totalorder %v4524, 4
        %v4547 = vsel %vm4543, %v4527, %v4530
        %v4548 = vsel %vm4546, %v4536, 2102212464
        %v4549 = vsel %vm4545, %v4533, %v4548
        %v4550 = vsel %vm4544, %v4547, %v4549
        %v4551 = vsel %vm4543, %v4530, %v4533
        %v4552 = vsel %vm4546, %v4539, 920167782
        %v4553 = vsel %vm4545, %v4536, %v4552
        %v4554 = vsel %vm4544, %v4551, %v4553
        %v4555 = vsel %vm4543, %v4533, %v4536
        %v4556 = vsel %vm4546, %v4542, 1326507024
        %v4557 = vsel %vm4545, %v4539, %v4556
        %v4558 = vsel %vm4544, %v4555, %v4557
        %v4559 = vshll.u32 %v4519, 8
        %v4560 = vmul.u32.u64.compose %v4559, %v4558
        %v4561 = vextract.low.u32 %v4560
        %v4562 = vextract.high.u32 %v4560
        %v4563 = vmul.u32.u64.compose %v4559, %v4554
        %v4564 = vextract.low.u32 %v4563
        %v4565 = vextract.high.u32 %v4563
        %v4566 = vmul.u32 %v4559, %v4550
        %v4567 = vadd.s32 %v4562, %v4564
        %vm4568 = vc.u32 %v4562, %v4564
        %v4569 = vadd.s32 %v4565, 1
        %v4570 = vsel %vm4568, %v4569, %v4565
        %v4571 = vadd.s32 %v4566, %v4570
        %v4572 = vadd.s32 %v4571, 536870912
        %v4573 = vshrl.u32 %v4572, 30
        %v4574 = vshll.u32 %v4573, 30
        %v4575 = vsub.s32 %v4571, %v4574
        %vm4576 = vcmp.lt.s32.totalorder %v4575, 0
        %v4577 = vsub.s32 0, %v4575
        %v4578 = vsel %vm4576, %v4577, %v4575
        %v4579 = vclz %v4578
        %v4580 = vsub.s32 %v4579, 2
        %vm4581 = vcmp.gt.s32.totalorder 0, %v4580
        %v4582 = vsel %vm4581, 0, %v4580
        %v4583 = vsub.s32 32, %v4582
        %v4584 = vshll.u32 %v4575, %v4582
        %v4585 = vshrl.u32 %v4567, %v4583
        %v4586 = vor.u32 %v4584, %v4585
        %v4587 = vsub.s32 4294967266, %v4582
        %v4588 = vadd.s32 %v4587, 127
        %v4589 = vshll.u32 %v4588, 23
        %v4590 = vor.u32 4788187, %v4589
        %v4591 = vand.u32 2147483647, %v4590
        %v4593 = vcvt.s32.f32 %v4586
        %v4594 = vmul.f32 %v4593, %v4591
        %v4595 = vxor.u32 %v4594, 2147483648
        %v4596 = vsel %vm4513, %v4595, %v4594
        %v4597 = vsub.s32 4, %v4573
        %v4598 = vsel %vm4513, %v4597, %v4573
        %v4599 = vsel %vm4512, %v4281, %v4596
        %v4600 = vsel %vm4512, 0, %v4598
        %v4601 = vcosq.f32.pop %v4599
        %v4602 = vsinq.f32.pop %v4599
        %vm4603 = vweird.f32 %v4281
        %v4604 = vadd.s32 %v4600, 3
        %v4605 = vand.u32 %v4604, 3
        %vm4606 = vcmp.lt.s32.totalorder %v4605, 2
        %vm4607 = vcmp.eq.s32.totalorder %v4605, 0
        %v4608 = vxor.u32 %v4602, 2147483648
        %v4609 = vsel %vm4607, %v4601, %v4608
        %vm4610 = vcmp.eq.s32.totalorder %v4605, 2
        %v4611 = vxor.u32 %v4601, 2147483648
        %v4612 = vsel %vm4610, %v4611, %v4602
        %v4613 = vsel %vm4606, %v4609, %v4612
        %v4614 = vsel %vm4603, nan, %v4613
        %v4615 = vand.u32 2147483647, %v4283
        %vm4616 = vcmp.le.f32.partialorder %v4615, 0.7853982
        %vm4617 = vcmp.lt.s32.totalorder %v4283, 0
        %v4618 = vand.u32 %v4283, 2139095040
        %v4619 = vshrl.u32 %v4618, 23
        %v4620 = vsub.s32 %v4619, 127
        %v4621 = vand.u32 2147483647, %v4283
        %v4622 = vand.u32 %v4621, 8388607
        %v4623 = vor.u32 %v4622, 8388608
        %v4624 = vsub.s32 0, %v4623
        %v4625 = vadd.s32 %v4620, 1
        %vm4626 = vcmp.gt.s32.totalorder %v4625, 0
        %v4627 = vsel %vm4626, %v4625, 0
        %v4628 = vshrl.u32 %v4627, 5
        %v4629 = vand.u32 %v4627, 31
        %v4630 = vsub.s32 32, %v4629
        %v4631 = vshrl.u32 683565275, %v4630
        %v4632 = vshll.u32 683565275, %v4629
        %v4633 = vshrl.u32 2475754826, %v4630
        %v4634 = vor.u32 %v4632, %v4633
        %v4635 = vshll.u32 2475754826, %v4629
        %v4636 = vshrl.u32 2131351028, %v4630
        %v4637 = vor.u32 %v4635, %v4636
        %v4638 = vshll.u32 2131351028, %v4629
        %v4639 = vshrl.u32 2102212464, %v4630
        %v4640 = vor.u32 %v4638, %v4639
        %v4641 = vshll.u32 2102212464, %v4629
        %v4642 = vshrl.u32 920167782, %v4630
        %v4643 = vor.u32 %v4641, %v4642
        %v4644 = vshll.u32 920167782, %v4629
        %v4645 = vshrl.u32 1326507024, %v4630
        %v4646 = vor.u32 %v4644, %v4645
        %vm4647 = vcmp.lt.s32.totalorder %v4628, 1
        %vm4648 = vcmp.lt.s32.totalorder %v4628, 2
        %vm4649 = vcmp.lt.s32.totalorder %v4628, 3
        %vm4650 = vcmp.lt.s32.totalorder %v4628, 4
        %v4651 = vsel %vm4647, %v4631, %v4634
        %v4652 = vsel %vm4650, %v4640, 2102212464
        %v4653 = vsel %vm4649, %v4637, %v4652
        %v4654 = vsel %vm4648, %v4651, %v4653
        %v4655 = vsel %vm4647, %v4634, %v4637
        %v4656 = vsel %vm4650, %v4643, 920167782
        %v4657 = vsel %vm4649, %v4640, %v4656
        %v4658 = vsel %vm4648, %v4655, %v4657
        %v4659 = vsel %vm4647, %v4637, %v4640
        %v4660 = vsel %vm4650, %v4646, 1326507024
        %v4661 = vsel %vm4649, %v4643, %v4660
        %v4662 = vsel %vm4648, %v4659, %v4661
        %v4663 = vshll.u32 %v4623, 8
        %v4664 = vmul.u32.u64.compose %v4663, %v4662
        %v4665 = vextract.low.u32 %v4664
        %v4666 = vextract.high.u32 %v4664
        %v4667 = vmul.u32.u64.compose %v4663, %v4658
        %v4668 = vextract.low.u32 %v4667
        %v4669 = vextract.high.u32 %v4667
        %v4670 = vmul.u32 %v4663, %v4654
        %v4671 = vadd.s32 %v4666, %v4668
        %vm4672 = vc.u32 %v4666, %v4668
        %v4673 = vadd.s32 %v4669, 1
        %v4674 = vsel %vm4672, %v4673, %v4669
        %v4675 = vadd.s32 %v4670, %v4674
        %v4676 = vadd.s32 %v4675, 536870912
        %v4677 = vshrl.u32 %v4676, 30
        %v4678 = vshll.u32 %v4677, 30
        %v4679 = vsub.s32 %v4675, %v4678
        %vm4680 = vcmp.lt.s32.totalorder %v4679, 0
        %v4681 = vsub.s32 0, %v4679
        %v4682 = vsel %vm4680, %v4681, %v4679
        %v4683 = vclz %v4682
        %v4684 = vsub.s32 %v4683, 2
        %vm4685 = vcmp.gt.s32.totalorder 0, %v4684
        %v4686 = vsel %vm4685, 0, %v4684
        %v4687 = vsub.s32 32, %v4686
        %v4688 = vshll.u32 %v4679, %v4686
        %v4689 = vshrl.u32 %v4671, %v4687
        %v4690 = vor.u32 %v4688, %v4689
        %v4691 = vsub.s32 4294967266, %v4686
        %v4692 = vadd.s32 %v4691, 127
        %v4693 = vshll.u32 %v4692, 23
        %v4694 = vor.u32 4788187, %v4693
        %v4695 = vand.u32 2147483647, %v4694
        %v4697 = vcvt.s32.f32 %v4690
        %v4698 = vmul.f32 %v4697, %v4695
        %v4699 = vxor.u32 %v4698, 2147483648
        %v4700 = vsel %vm4617, %v4699, %v4698
        %v4701 = vsub.s32 4, %v4677
        %v4702 = vsel %vm4617, %v4701, %v4677
        %v4703 = vsel %vm4616, %v4283, %v4700
        %v4704 = vsel %vm4616, 0, %v4702
        %v4705 = vcosq.f32.pop %v4703
        %v4706 = vsinq.f32.pop %v4703
        %vm4707 = vweird.f32 %v4283
        %v4708 = vadd.s32 %v4704, 3
        %v4709 = vand.u32 %v4708, 3
        %vm4710 = vcmp.lt.s32.totalorder %v4709, 2
        %vm4711 = vcmp.eq.s32.totalorder %v4709, 0
        %v4712 = vxor.u32 %v4706, 2147483648
        %v4713 = vsel %vm4711, %v4705, %v4712
        %vm4714 = vcmp.eq.s32.totalorder %v4709, 2
        %v4715 = vxor.u32 %v4705, 2147483648
        %v4716 = vsel %vm4714, %v4715, %v4706
        %v4717 = vsel %vm4710, %v4713, %v4716
        %v4718 = vsel %vm4707, nan, %v4717
        %v4719 = vand.u32 2147483647, %v4198
        %vm4720 = vcmp.le.f32.partialorder %v4719, 0.7853982
        %vm4721 = vcmp.lt.s32.totalorder %v4198, 0
        %v4722 = vand.u32 %v4198, 2139095040
        %v4723 = vshrl.u32 %v4722, 23
        %v4724 = vsub.s32 %v4723, 127
        %v4725 = vand.u32 2147483647, %v4198
        %v4726 = vand.u32 %v4725, 8388607
        %v4727 = vor.u32 %v4726, 8388608
        %v4728 = vsub.s32 0, %v4727
        %v4729 = vadd.s32 %v4724, 1
        %vm4730 = vcmp.gt.s32.totalorder %v4729, 0
        %v4731 = vsel %vm4730, %v4729, 0
        %v4732 = vshrl.u32 %v4731, 5
        %v4733 = vand.u32 %v4731, 31
        %v4734 = vsub.s32 32, %v4733
        %v4735 = vshrl.u32 683565275, %v4734
        %v4736 = vshll.u32 683565275, %v4733
        %v4737 = vshrl.u32 2475754826, %v4734
        %v4738 = vor.u32 %v4736, %v4737
        %v4739 = vshll.u32 2475754826, %v4733
        %v4740 = vshrl.u32 2131351028, %v4734
        %v4741 = vor.u32 %v4739, %v4740
        %v4742 = vshll.u32 2131351028, %v4733
        %v4743 = vshrl.u32 2102212464, %v4734
        %v4744 = vor.u32 %v4742, %v4743
        %v4745 = vshll.u32 2102212464, %v4733
        %v4746 = vshrl.u32 920167782, %v4734
        %v4747 = vor.u32 %v4745, %v4746
        %v4748 = vshll.u32 920167782, %v4733
        %v4749 = vshrl.u32 1326507024, %v4734
        %v4750 = vor.u32 %v4748, %v4749
        %vm4751 = vcmp.lt.s32.totalorder %v4732, 1
        %vm4752 = vcmp.lt.s32.totalorder %v4732, 2
        %vm4753 = vcmp.lt.s32.totalorder %v4732, 3
        %vm4754 = vcmp.lt.s32.totalorder %v4732, 4
        %v4755 = vsel %vm4751, %v4735, %v4738
        %v4756 = vsel %vm4754, %v4744, 2102212464
        %v4757 = vsel %vm4753, %v4741, %v4756
        %v4758 = vsel %vm4752, %v4755, %v4757
        %v4759 = vsel %vm4751, %v4738, %v4741
        %v4760 = vsel %vm4754, %v4747, 920167782
        %v4761 = vsel %vm4753, %v4744, %v4760
        %v4762 = vsel %vm4752, %v4759, %v4761
        %v4763 = vsel %vm4751, %v4741, %v4744
        %v4764 = vsel %vm4754, %v4750, 1326507024
        %v4765 = vsel %vm4753, %v4747, %v4764
        %v4766 = vsel %vm4752, %v4763, %v4765
        %v4767 = vshll.u32 %v4727, 8
        %v4768 = vmul.u32.u64.compose %v4767, %v4766
        %v4769 = vextract.low.u32 %v4768
        %v4770 = vextract.high.u32 %v4768
        %v4771 = vmul.u32.u64.compose %v4767, %v4762
        %v4772 = vextract.low.u32 %v4771
        %v4773 = vextract.high.u32 %v4771
        %v4774 = vmul.u32 %v4767, %v4758
        %v4775 = vadd.s32 %v4770, %v4772
        %vm4776 = vc.u32 %v4770, %v4772
        %v4777 = vadd.s32 %v4773, 1
        %v4778 = vsel %vm4776, %v4777, %v4773
        %v4779 = vadd.s32 %v4774, %v4778
        %v4780 = vadd.s32 %v4779, 536870912
        %v4781 = vshrl.u32 %v4780, 30
        %v4782 = vshll.u32 %v4781, 30
        %v4783 = vsub.s32 %v4779, %v4782
        %vm4784 = vcmp.lt.s32.totalorder %v4783, 0
        %v4785 = vsub.s32 0, %v4783
        %v4786 = vsel %vm4784, %v4785, %v4783
        %v4787 = vclz %v4786
        %v4788 = vsub.s32 %v4787, 2
        %vm4789 = vcmp.gt.s32.totalorder 0, %v4788
        %v4790 = vsel %vm4789, 0, %v4788
        %v4791 = vsub.s32 32, %v4790
        %v4792 = vshll.u32 %v4783, %v4790
        %v4793 = vshrl.u32 %v4775, %v4791
        %v4794 = vor.u32 %v4792, %v4793
        %v4795 = vsub.s32 4294967266, %v4790
        %v4796 = vadd.s32 %v4795, 127
        %v4797 = vshll.u32 %v4796, 23
        %v4798 = vor.u32 4788187, %v4797
        %v4799 = vand.u32 2147483647, %v4798
        %v4801 = vcvt.s32.f32 %v4794
        %v4802 = vmul.f32 %v4801, %v4799
        %v4803 = vxor.u32 %v4802, 2147483648
        %v4804 = vsel %vm4721, %v4803, %v4802
        %v4805 = vsub.s32 4, %v4781
        %v4806 = vsel %vm4721, %v4805, %v4781
        %v4807 = vsel %vm4720, %v4198, %v4804
        %v4808 = vsel %vm4720, 0, %v4806
        %v4809 = vcosq.f32.pop %v4807
        %v4810 = vsinq.f32.pop %v4807
        %vm4811 = vweird.f32 %v4198
        %v4812 = vadd.s32 %v4808, 3
        %v4813 = vand.u32 %v4812, 3
        %vm4814 = vcmp.lt.s32.totalorder %v4813, 2
        %vm4815 = vcmp.eq.s32.totalorder %v4813, 0
        %v4816 = vxor.u32 %v4810, 2147483648
        %v4817 = vsel %vm4815, %v4809, %v4816
        %vm4818 = vcmp.eq.s32.totalorder %v4813, 2
        %v4819 = vxor.u32 %v4809, 2147483648
        %v4820 = vsel %vm4818, %v4819, %v4810
        %v4821 = vsel %vm4814, %v4817, %v4820
        %v4822 = vsel %vm4811, nan, %v4821
        %v4823 = vand.u32 2147483647, %v4200
        %vm4824 = vcmp.le.f32.partialorder %v4823, 0.7853982
        %vm4825 = vcmp.lt.s32.totalorder %v4200, 0
        %v4826 = vand.u32 %v4200, 2139095040
        %v4827 = vshrl.u32 %v4826, 23
        %v4828 = vsub.s32 %v4827, 127
        %v4829 = vand.u32 2147483647, %v4200
        %v4830 = vand.u32 %v4829, 8388607
        %v4831 = vor.u32 %v4830, 8388608
        %v4832 = vsub.s32 0, %v4831
        %v4833 = vadd.s32 %v4828, 1
        %vm4834 = vcmp.gt.s32.totalorder %v4833, 0
        %v4835 = vsel %vm4834, %v4833, 0
        %v4836 = vshrl.u32 %v4835, 5
        %v4837 = vand.u32 %v4835, 31
        %v4838 = vsub.s32 32, %v4837
        %v4839 = vshrl.u32 683565275, %v4838
        %v4840 = vshll.u32 683565275, %v4837
        %v4841 = vshrl.u32 2475754826, %v4838
        %v4842 = vor.u32 %v4840, %v4841
        %v4843 = vshll.u32 2475754826, %v4837
        %v4844 = vshrl.u32 2131351028, %v4838
        %v4845 = vor.u32 %v4843, %v4844
        %v4846 = vshll.u32 2131351028, %v4837
        %v4847 = vshrl.u32 2102212464, %v4838
        %v4848 = vor.u32 %v4846, %v4847
        %v4849 = vshll.u32 2102212464, %v4837
        %v4850 = vshrl.u32 920167782, %v4838
        %v4851 = vor.u32 %v4849, %v4850
        %v4852 = vshll.u32 920167782, %v4837
        %v4853 = vshrl.u32 1326507024, %v4838
        %v4854 = vor.u32 %v4852, %v4853
        %vm4855 = vcmp.lt.s32.totalorder %v4836, 1
        %vm4856 = vcmp.lt.s32.totalorder %v4836, 2
        %vm4857 = vcmp.lt.s32.totalorder %v4836, 3
        %vm4858 = vcmp.lt.s32.totalorder %v4836, 4
        %v4859 = vsel %vm4855, %v4839, %v4842
        %v4860 = vsel %vm4858, %v4848, 2102212464
        %v4861 = vsel %vm4857, %v4845, %v4860
        %v4862 = vsel %vm4856, %v4859, %v4861
        %v4863 = vsel %vm4855, %v4842, %v4845
        %v4864 = vsel %vm4858, %v4851, 920167782
        %v4865 = vsel %vm4857, %v4848, %v4864
        %v4866 = vsel %vm4856, %v4863, %v4865
        %v4867 = vsel %vm4855, %v4845, %v4848
        %v4868 = vsel %vm4858, %v4854, 1326507024
        %v4869 = vsel %vm4857, %v4851, %v4868
        %v4870 = vsel %vm4856, %v4867, %v4869
        %v4871 = vshll.u32 %v4831, 8
        %v4872 = vmul.u32.u64.compose %v4871, %v4870
        %v4873 = vextract.low.u32 %v4872
        %v4874 = vextract.high.u32 %v4872
        %v4875 = vmul.u32.u64.compose %v4871, %v4866
        %v4876 = vextract.low.u32 %v4875
        %v4877 = vextract.high.u32 %v4875
        %v4878 = vmul.u32 %v4871, %v4862
        %v4879 = vadd.s32 %v4874, %v4876
        %vm4880 = vc.u32 %v4874, %v4876
        %v4881 = vadd.s32 %v4877, 1
        %v4882 = vsel %vm4880, %v4881, %v4877
        %v4883 = vadd.s32 %v4878, %v4882
        %v4884 = vadd.s32 %v4883, 536870912
        %v4885 = vshrl.u32 %v4884, 30
        %v4886 = vshll.u32 %v4885, 30
        %v4887 = vsub.s32 %v4883, %v4886
        %vm4888 = vcmp.lt.s32.totalorder %v4887, 0
        %v4889 = vsub.s32 0, %v4887
        %v4890 = vsel %vm4888, %v4889, %v4887
        %v4891 = vclz %v4890
        %v4892 = vsub.s32 %v4891, 2
        %vm4893 = vcmp.gt.s32.totalorder 0, %v4892
        %v4894 = vsel %vm4893, 0, %v4892
        %v4895 = vsub.s32 32, %v4894
        %v4896 = vshll.u32 %v4887, %v4894
        %v4897 = vshrl.u32 %v4879, %v4895
        %v4898 = vor.u32 %v4896, %v4897
        %v4899 = vsub.s32 4294967266, %v4894
        %v4900 = vadd.s32 %v4899, 127
        %v4901 = vshll.u32 %v4900, 23
        %v4902 = vor.u32 4788187, %v4901
        %v4903 = vand.u32 2147483647, %v4902
        %v4905 = vcvt.s32.f32 %v4898
        %v4906 = vmul.f32 %v4905, %v4903
        %v4907 = vxor.u32 %v4906, 2147483648
        %v4908 = vsel %vm4825, %v4907, %v4906
        %v4909 = vsub.s32 4, %v4885
        %v4910 = vsel %vm4825, %v4909, %v4885
        %v4911 = vsel %vm4824, %v4200, %v4908
        %v4912 = vsel %vm4824, 0, %v4910
        %v4913 = vcosq.f32.pop %v4911
        %v4914 = vsinq.f32.pop %v4911
        %vm4915 = vweird.f32 %v4200
        %v4916 = vadd.s32 %v4912, 3
        %v4917 = vand.u32 %v4916, 3
        %vm4918 = vcmp.lt.s32.totalorder %v4917, 2
        %vm4919 = vcmp.eq.s32.totalorder %v4917, 0
        %v4920 = vxor.u32 %v4914, 2147483648
        %v4921 = vsel %vm4919, %v4913, %v4920
        %vm4922 = vcmp.eq.s32.totalorder %v4917, 2
        %v4923 = vxor.u32 %v4913, 2147483648
        %v4924 = vsel %vm4922, %v4923, %v4914
        %v4925 = vsel %vm4918, %v4921, %v4924
        %v4926 = vsel %vm4915, nan, %v4925
        %v4927 = vand.u32 2147483647, %v4287
        %vm4928 = vcmp.le.f32.partialorder %v4927, 0.7853982
        %vm4929 = vcmp.lt.s32.totalorder %v4287, 0
        %v4930 = vand.u32 %v4287, 2139095040
        %v4931 = vshrl.u32 %v4930, 23
        %v4932 = vsub.s32 %v4931, 127
        %v4933 = vand.u32 2147483647, %v4287
        %v4934 = vand.u32 %v4933, 8388607
        %v4935 = vor.u32 %v4934, 8388608
        %v4936 = vsub.s32 0, %v4935
        %v4937 = vadd.s32 %v4932, 1
        %vm4938 = vcmp.gt.s32.totalorder %v4937, 0
        %v4939 = vsel %vm4938, %v4937, 0
        %v4940 = vshrl.u32 %v4939, 5
        %v4941 = vand.u32 %v4939, 31
        %v4942 = vsub.s32 32, %v4941
        %v4943 = vshrl.u32 683565275, %v4942
        %v4944 = vshll.u32 683565275, %v4941
        %v4945 = vshrl.u32 2475754826, %v4942
        %v4946 = vor.u32 %v4944, %v4945
        %v4947 = vshll.u32 2475754826, %v4941
        %v4948 = vshrl.u32 2131351028, %v4942
        %v4949 = vor.u32 %v4947, %v4948
        %v4950 = vshll.u32 2131351028, %v4941
        %v4951 = vshrl.u32 2102212464, %v4942
        %v4952 = vor.u32 %v4950, %v4951
        %v4953 = vshll.u32 2102212464, %v4941
        %v4954 = vshrl.u32 920167782, %v4942
        %v4955 = vor.u32 %v4953, %v4954
        %v4956 = vshll.u32 920167782, %v4941
        %v4957 = vshrl.u32 1326507024, %v4942
        %v4958 = vor.u32 %v4956, %v4957
        %vm4959 = vcmp.lt.s32.totalorder %v4940, 1
        %vm4960 = vcmp.lt.s32.totalorder %v4940, 2
        %vm4961 = vcmp.lt.s32.totalorder %v4940, 3
        %vm4962 = vcmp.lt.s32.totalorder %v4940, 4
        %v4963 = vsel %vm4959, %v4943, %v4946
        %v4964 = vsel %vm4962, %v4952, 2102212464
        %v4965 = vsel %vm4961, %v4949, %v4964
        %v4966 = vsel %vm4960, %v4963, %v4965
        %v4967 = vsel %vm4959, %v4946, %v4949
        %v4968 = vsel %vm4962, %v4955, 920167782
        %v4969 = vsel %vm4961, %v4952, %v4968
        %v4970 = vsel %vm4960, %v4967, %v4969
        %v4971 = vsel %vm4959, %v4949, %v4952
        %v4972 = vsel %vm4962, %v4958, 1326507024
        %v4973 = vsel %vm4961, %v4955, %v4972
        %v4974 = vsel %vm4960, %v4971, %v4973
        %v4975 = vshll.u32 %v4935, 8
        %v4976 = vmul.u32.u64.compose %v4975, %v4974
        %v4977 = vextract.low.u32 %v4976
        %v4978 = vextract.high.u32 %v4976
        %v4979 = vmul.u32.u64.compose %v4975, %v4970
        %v4980 = vextract.low.u32 %v4979
        %v4981 = vextract.high.u32 %v4979
        %v4982 = vmul.u32 %v4975, %v4966
        %v4983 = vadd.s32 %v4978, %v4980
        %vm4984 = vc.u32 %v4978, %v4980
        %v4985 = vadd.s32 %v4981, 1
        %v4986 = vsel %vm4984, %v4985, %v4981
        %v4987 = vadd.s32 %v4982, %v4986
        %v4988 = vadd.s32 %v4987, 536870912
        %v4989 = vshrl.u32 %v4988, 30
        %v4990 = vshll.u32 %v4989, 30
        %v4991 = vsub.s32 %v4987, %v4990
        %vm4992 = vcmp.lt.s32.totalorder %v4991, 0
        %v4993 = vsub.s32 0, %v4991
        %v4994 = vsel %vm4992, %v4993, %v4991
        %v4995 = vclz %v4994
        %v4996 = vsub.s32 %v4995, 2
        %vm4997 = vcmp.gt.s32.totalorder 0, %v4996
        %v4998 = vsel %vm4997, 0, %v4996
        %v4999 = vsub.s32 32, %v4998
        %v5000 = vshll.u32 %v4991, %v4998
        %v5001 = vshrl.u32 %v4983, %v4999
        %v5002 = vor.u32 %v5000, %v5001
        %v5003 = vsub.s32 4294967266, %v4998
        %v5004 = vadd.s32 %v5003, 127
        %v5005 = vshll.u32 %v5004, 23
        %v5006 = vor.u32 4788187, %v5005
        %v5007 = vand.u32 2147483647, %v5006
        %v5009 = vcvt.s32.f32 %v5002
        %v5010 = vmul.f32 %v5009, %v5007
        %v5011 = vxor.u32 %v5010, 2147483648
        %v5012 = vsel %vm4929, %v5011, %v5010
        %v5013 = vsub.s32 4, %v4989
        %v5014 = vsel %vm4929, %v5013, %v4989
        %v5015 = vsel %vm4928, %v4287, %v5012
        %v5016 = vsel %vm4928, 0, %v5014
        %v5017 = vcosq.f32.pop %v5015
        %v5018 = vsinq.f32.pop %v5015
        %vm5019 = vweird.f32 %v4287
        %v5020 = vadd.s32 %v5016, 3
        %v5021 = vand.u32 %v5020, 3
        %vm5022 = vcmp.lt.s32.totalorder %v5021, 2
        %vm5023 = vcmp.eq.s32.totalorder %v5021, 0
        %v5024 = vxor.u32 %v5018, 2147483648
        %v5025 = vsel %vm5023, %v5017, %v5024
        %vm5026 = vcmp.eq.s32.totalorder %v5021, 2
        %v5027 = vxor.u32 %v5017, 2147483648
        %v5028 = vsel %vm5026, %v5027, %v5018
        %v5029 = vsel %vm5022, %v5025, %v5028
        %v5030 = vsel %vm5019, nan, %v5029
        %v5031 = vand.u32 2147483647, %v4289
        %vm5032 = vcmp.le.f32.partialorder %v5031, 0.7853982
        %vm5033 = vcmp.lt.s32.totalorder %v4289, 0
        %v5034 = vand.u32 %v4289, 2139095040
        %v5035 = vshrl.u32 %v5034, 23
        %v5036 = vsub.s32 %v5035, 127
        %v5037 = vand.u32 2147483647, %v4289
        %v5038 = vand.u32 %v5037, 8388607
        %v5039 = vor.u32 %v5038, 8388608
        %v5040 = vsub.s32 0, %v5039
        %v5041 = vadd.s32 %v5036, 1
        %vm5042 = vcmp.gt.s32.totalorder %v5041, 0
        %v5043 = vsel %vm5042, %v5041, 0
        %v5044 = vshrl.u32 %v5043, 5
        %v5045 = vand.u32 %v5043, 31
        %v5046 = vsub.s32 32, %v5045
        %v5047 = vshrl.u32 683565275, %v5046
        %v5048 = vshll.u32 683565275, %v5045
        %v5049 = vshrl.u32 2475754826, %v5046
        %v5050 = vor.u32 %v5048, %v5049
        %v5051 = vshll.u32 2475754826, %v5045
        %v5052 = vshrl.u32 2131351028, %v5046
        %v5053 = vor.u32 %v5051, %v5052
        %v5054 = vshll.u32 2131351028, %v5045
        %v5055 = vshrl.u32 2102212464, %v5046
        %v5056 = vor.u32 %v5054, %v5055
        %v5057 = vshll.u32 2102212464, %v5045
        %v5058 = vshrl.u32 920167782, %v5046
        %v5059 = vor.u32 %v5057, %v5058
        %v5060 = vshll.u32 920167782, %v5045
        %v5061 = vshrl.u32 1326507024, %v5046
        %v5062 = vor.u32 %v5060, %v5061
        %vm5063 = vcmp.lt.s32.totalorder %v5044, 1
        %vm5064 = vcmp.lt.s32.totalorder %v5044, 2
        %vm5065 = vcmp.lt.s32.totalorder %v5044, 3
        %vm5066 = vcmp.lt.s32.totalorder %v5044, 4
        %v5067 = vsel %vm5063, %v5047, %v5050
        %v5068 = vsel %vm5066, %v5056, 2102212464
        %v5069 = vsel %vm5065, %v5053, %v5068
        %v5070 = vsel %vm5064, %v5067, %v5069
        %v5071 = vsel %vm5063, %v5050, %v5053
        %v5072 = vsel %vm5066, %v5059, 920167782
        %v5073 = vsel %vm5065, %v5056, %v5072
        %v5074 = vsel %vm5064, %v5071, %v5073
        %v5075 = vsel %vm5063, %v5053, %v5056
        %v5076 = vsel %vm5066, %v5062, 1326507024
        %v5077 = vsel %vm5065, %v5059, %v5076
        %v5078 = vsel %vm5064, %v5075, %v5077
        %v5079 = vshll.u32 %v5039, 8
        %v5080 = vmul.u32.u64.compose %v5079, %v5078
        %v5081 = vextract.low.u32 %v5080
        %v5082 = vextract.high.u32 %v5080
        %v5083 = vmul.u32.u64.compose %v5079, %v5074
        %v5084 = vextract.low.u32 %v5083
        %v5085 = vextract.high.u32 %v5083
        %v5086 = vmul.u32 %v5079, %v5070
        %v5087 = vadd.s32 %v5082, %v5084
        %vm5088 = vc.u32 %v5082, %v5084
        %v5089 = vadd.s32 %v5085, 1
        %v5090 = vsel %vm5088, %v5089, %v5085
        %v5091 = vadd.s32 %v5086, %v5090
        %v5092 = vadd.s32 %v5091, 536870912
        %v5093 = vshrl.u32 %v5092, 30
        %v5094 = vshll.u32 %v5093, 30
        %v5095 = vsub.s32 %v5091, %v5094
        %vm5096 = vcmp.lt.s32.totalorder %v5095, 0
        %v5097 = vsub.s32 0, %v5095
        %v5098 = vsel %vm5096, %v5097, %v5095
        %v5099 = vclz %v5098
        %v5100 = vsub.s32 %v5099, 2
        %vm5101 = vcmp.gt.s32.totalorder 0, %v5100
        %v5102 = vsel %vm5101, 0, %v5100
        %v5103 = vsub.s32 32, %v5102
        %v5104 = vshll.u32 %v5095, %v5102
        %v5105 = vshrl.u32 %v5087, %v5103
        %v5106 = vor.u32 %v5104, %v5105
        %v5107 = vsub.s32 4294967266, %v5102
        %v5108 = vadd.s32 %v5107, 127
        %v5109 = vshll.u32 %v5108, 23
        %v5110 = vor.u32 4788187, %v5109
        %v5111 = vand.u32 2147483647, %v5110
        %v5113 = vcvt.s32.f32 %v5106
        %v5114 = vmul.f32 %v5113, %v5111
        %v5115 = vxor.u32 %v5114, 2147483648
        %v5116 = vsel %vm5033, %v5115, %v5114
        %v5117 = vsub.s32 4, %v5093
        %v5118 = vsel %vm5033, %v5117, %v5093
        %v5119 = vsel %vm5032, %v4289, %v5116
        %v5120 = vsel %vm5032, 0, %v5118
        %v5121 = vcosq.f32.pop %v5119
        %v5122 = vsinq.f32.pop %v5119
        %vm5123 = vweird.f32 %v4289
        %v5124 = vadd.s32 %v5120, 3
        %v5125 = vand.u32 %v5124, 3
        %vm5126 = vcmp.lt.s32.totalorder %v5125, 2
        %vm5127 = vcmp.eq.s32.totalorder %v5125, 0
        %v5128 = vxor.u32 %v5122, 2147483648
        %v5129 = vsel %vm5127, %v5121, %v5128
        %vm5130 = vcmp.eq.s32.totalorder %v5125, 2
        %v5131 = vxor.u32 %v5121, 2147483648
        %v5132 = vsel %vm5130, %v5131, %v5122
        %v5133 = vsel %vm5126, %v5129, %v5132
        %v5134 = vsel %vm5123, nan, %v5133
        %v5135 = vand.u32 2147483647, %v4204
        %vm5136 = vcmp.le.f32.partialorder %v5135, 0.7853982
        %vm5137 = vcmp.lt.s32.totalorder %v4204, 0
        %v5138 = vand.u32 %v4204, 2139095040
        %v5139 = vshrl.u32 %v5138, 23
        %v5140 = vsub.s32 %v5139, 127
        %v5141 = vand.u32 2147483647, %v4204
        %v5142 = vand.u32 %v5141, 8388607
        %v5143 = vor.u32 %v5142, 8388608
        %v5144 = vsub.s32 0, %v5143
        %v5145 = vadd.s32 %v5140, 1
        %vm5146 = vcmp.gt.s32.totalorder %v5145, 0
        %v5147 = vsel %vm5146, %v5145, 0
        %v5148 = vshrl.u32 %v5147, 5
        %v5149 = vand.u32 %v5147, 31
        %v5150 = vsub.s32 32, %v5149
        %v5151 = vshrl.u32 683565275, %v5150
        %v5152 = vshll.u32 683565275, %v5149
        %v5153 = vshrl.u32 2475754826, %v5150
        %v5154 = vor.u32 %v5152, %v5153
        %v5155 = vshll.u32 2475754826, %v5149
        %v5156 = vshrl.u32 2131351028, %v5150
        %v5157 = vor.u32 %v5155, %v5156
        %v5158 = vshll.u32 2131351028, %v5149
        %v5159 = vshrl.u32 2102212464, %v5150
        %v5160 = vor.u32 %v5158, %v5159
        %v5161 = vshll.u32 2102212464, %v5149
        %v5162 = vshrl.u32 920167782, %v5150
        %v5163 = vor.u32 %v5161, %v5162
        %v5164 = vshll.u32 920167782, %v5149
        %v5165 = vshrl.u32 1326507024, %v5150
        %v5166 = vor.u32 %v5164, %v5165
        %vm5167 = vcmp.lt.s32.totalorder %v5148, 1
        %vm5168 = vcmp.lt.s32.totalorder %v5148, 2
        %vm5169 = vcmp.lt.s32.totalorder %v5148, 3
        %vm5170 = vcmp.lt.s32.totalorder %v5148, 4
        %v5171 = vsel %vm5167, %v5151, %v5154
        %v5172 = vsel %vm5170, %v5160, 2102212464
        %v5173 = vsel %vm5169, %v5157, %v5172
        %v5174 = vsel %vm5168, %v5171, %v5173
        %v5175 = vsel %vm5167, %v5154, %v5157
        %v5176 = vsel %vm5170, %v5163, 920167782
        %v5177 = vsel %vm5169, %v5160, %v5176
        %v5178 = vsel %vm5168, %v5175, %v5177
        %v5179 = vsel %vm5167, %v5157, %v5160
        %v5180 = vsel %vm5170, %v5166, 1326507024
        %v5181 = vsel %vm5169, %v5163, %v5180
        %v5182 = vsel %vm5168, %v5179, %v5181
        %v5183 = vshll.u32 %v5143, 8
        %v5184 = vmul.u32.u64.compose %v5183, %v5182
        %v5185 = vextract.low.u32 %v5184
        %v5186 = vextract.high.u32 %v5184
        %v5187 = vmul.u32.u64.compose %v5183, %v5178
        %v5188 = vextract.low.u32 %v5187
        %v5189 = vextract.high.u32 %v5187
        %v5190 = vmul.u32 %v5183, %v5174
        %v5191 = vadd.s32 %v5186, %v5188
        %vm5192 = vc.u32 %v5186, %v5188
        %v5193 = vadd.s32 %v5189, 1
        %v5194 = vsel %vm5192, %v5193, %v5189
        %v5195 = vadd.s32 %v5190, %v5194
        %v5196 = vadd.s32 %v5195, 536870912
        %v5197 = vshrl.u32 %v5196, 30
        %v5198 = vshll.u32 %v5197, 30
        %v5199 = vsub.s32 %v5195, %v5198
        %vm5200 = vcmp.lt.s32.totalorder %v5199, 0
        %v5201 = vsub.s32 0, %v5199
        %v5202 = vsel %vm5200, %v5201, %v5199
        %v5203 = vclz %v5202
        %v5204 = vsub.s32 %v5203, 2
        %vm5205 = vcmp.gt.s32.totalorder 0, %v5204
        %v5206 = vsel %vm5205, 0, %v5204
        %v5207 = vsub.s32 32, %v5206
        %v5208 = vshll.u32 %v5199, %v5206
        %v5209 = vshrl.u32 %v5191, %v5207
        %v5210 = vor.u32 %v5208, %v5209
        %v5211 = vsub.s32 4294967266, %v5206
        %v5212 = vadd.s32 %v5211, 127
        %v5213 = vshll.u32 %v5212, 23
        %v5214 = vor.u32 4788187, %v5213
        %v5215 = vand.u32 2147483647, %v5214
        %v5217 = vcvt.s32.f32 %v5210
        %v5218 = vmul.f32 %v5217, %v5215
        %v5219 = vxor.u32 %v5218, 2147483648
        %v5220 = vsel %vm5137, %v5219, %v5218
        %v5221 = vsub.s32 4, %v5197
        %v5222 = vsel %vm5137, %v5221, %v5197
        %v5223 = vsel %vm5136, %v4204, %v5220
        %v5224 = vsel %vm5136, 0, %v5222
        %v5225 = vcosq.f32.pop %v5223
        %v5226 = vsinq.f32.pop %v5223
        %vm5227 = vweird.f32 %v4204
        %v5228 = vadd.s32 %v5224, 3
        %v5229 = vand.u32 %v5228, 3
        %vm5230 = vcmp.lt.s32.totalorder %v5229, 2
        %vm5231 = vcmp.eq.s32.totalorder %v5229, 0
        %v5232 = vxor.u32 %v5226, 2147483648
        %v5233 = vsel %vm5231, %v5225, %v5232
        %vm5234 = vcmp.eq.s32.totalorder %v5229, 2
        %v5235 = vxor.u32 %v5225, 2147483648
        %v5236 = vsel %vm5234, %v5235, %v5226
        %v5237 = vsel %vm5230, %v5233, %v5236
        %v5238 = vsel %vm5227, nan, %v5237
        %v5239 = vand.u32 2147483647, %v4206
        %vm5240 = vcmp.le.f32.partialorder %v5239, 0.7853982
        %vm5241 = vcmp.lt.s32.totalorder %v4206, 0
        %v5242 = vand.u32 %v4206, 2139095040
        %v5243 = vshrl.u32 %v5242, 23
        %v5244 = vsub.s32 %v5243, 127
        %v5245 = vand.u32 2147483647, %v4206
        %v5246 = vand.u32 %v5245, 8388607
        %v5247 = vor.u32 %v5246, 8388608
        %v5248 = vsub.s32 0, %v5247
        %v5249 = vadd.s32 %v5244, 1
        %vm5250 = vcmp.gt.s32.totalorder %v5249, 0
        %v5251 = vsel %vm5250, %v5249, 0
        %v5252 = vshrl.u32 %v5251, 5
        %v5253 = vand.u32 %v5251, 31
        %v5254 = vsub.s32 32, %v5253
        %v5255 = vshrl.u32 683565275, %v5254
        %v5256 = vshll.u32 683565275, %v5253
        %v5257 = vshrl.u32 2475754826, %v5254
        %v5258 = vor.u32 %v5256, %v5257
        %v5259 = vshll.u32 2475754826, %v5253
        %v5260 = vshrl.u32 2131351028, %v5254
        %v5261 = vor.u32 %v5259, %v5260
        %v5262 = vshll.u32 2131351028, %v5253
        %v5263 = vshrl.u32 2102212464, %v5254
        %v5264 = vor.u32 %v5262, %v5263
        %v5265 = vshll.u32 2102212464, %v5253
        %v5266 = vshrl.u32 920167782, %v5254
        %v5267 = vor.u32 %v5265, %v5266
        %v5268 = vshll.u32 920167782, %v5253
        %v5269 = vshrl.u32 1326507024, %v5254
        %v5270 = vor.u32 %v5268, %v5269
        %vm5271 = vcmp.lt.s32.totalorder %v5252, 1
        %vm5272 = vcmp.lt.s32.totalorder %v5252, 2
        %vm5273 = vcmp.lt.s32.totalorder %v5252, 3
        %vm5274 = vcmp.lt.s32.totalorder %v5252, 4
        %v5275 = vsel %vm5271, %v5255, %v5258
        %v5276 = vsel %vm5274, %v5264, 2102212464
        %v5277 = vsel %vm5273, %v5261, %v5276
        %v5278 = vsel %vm5272, %v5275, %v5277
        %v5279 = vsel %vm5271, %v5258, %v5261
        %v5280 = vsel %vm5274, %v5267, 920167782
        %v5281 = vsel %vm5273, %v5264, %v5280
        %v5282 = vsel %vm5272, %v5279, %v5281
        %v5283 = vsel %vm5271, %v5261, %v5264
        %v5284 = vsel %vm5274, %v5270, 1326507024
        %v5285 = vsel %vm5273, %v5267, %v5284
        %v5286 = vsel %vm5272, %v5283, %v5285
        %v5287 = vshll.u32 %v5247, 8
        %v5288 = vmul.u32.u64.compose %v5287, %v5286
        %v5289 = vextract.low.u32 %v5288
        %v5290 = vextract.high.u32 %v5288
        %v5291 = vmul.u32.u64.compose %v5287, %v5282
        %v5292 = vextract.low.u32 %v5291
        %v5293 = vextract.high.u32 %v5291
        %v5294 = vmul.u32 %v5287, %v5278
        %v5295 = vadd.s32 %v5290, %v5292
        %vm5296 = vc.u32 %v5290, %v5292
        %v5297 = vadd.s32 %v5293, 1
        %v5298 = vsel %vm5296, %v5297, %v5293
        %v5299 = vadd.s32 %v5294, %v5298
        %v5300 = vadd.s32 %v5299, 536870912
        %v5301 = vshrl.u32 %v5300, 30
        %v5302 = vshll.u32 %v5301, 30
        %v5303 = vsub.s32 %v5299, %v5302
        %vm5304 = vcmp.lt.s32.totalorder %v5303, 0
        %v5305 = vsub.s32 0, %v5303
        %v5306 = vsel %vm5304, %v5305, %v5303
        %v5307 = vclz %v5306
        %v5308 = vsub.s32 %v5307, 2
        %vm5309 = vcmp.gt.s32.totalorder 0, %v5308
        %v5310 = vsel %vm5309, 0, %v5308
        %v5311 = vsub.s32 32, %v5310
        %v5312 = vshll.u32 %v5303, %v5310
        %v5313 = vshrl.u32 %v5295, %v5311
        %v5314 = vor.u32 %v5312, %v5313
        %v5315 = vsub.s32 4294967266, %v5310
        %v5316 = vadd.s32 %v5315, 127
        %v5317 = vshll.u32 %v5316, 23
        %v5318 = vor.u32 4788187, %v5317
        %v5319 = vand.u32 2147483647, %v5318
        %v5321 = vcvt.s32.f32 %v5314
        %v5322 = vmul.f32 %v5321, %v5319
        %v5323 = vxor.u32 %v5322, 2147483648
        %v5324 = vsel %vm5241, %v5323, %v5322
        %v5325 = vsub.s32 4, %v5301
        %v5326 = vsel %vm5241, %v5325, %v5301
        %v5327 = vsel %vm5240, %v4206, %v5324
        %v5328 = vsel %vm5240, 0, %v5326
        %v5329 = vcosq.f32.pop %v5327
        %v5330 = vsinq.f32.pop %v5327
        %vm5331 = vweird.f32 %v4206
        %v5332 = vadd.s32 %v5328, 3
        %v5333 = vand.u32 %v5332, 3
        %vm5334 = vcmp.lt.s32.totalorder %v5333, 2
        %vm5335 = vcmp.eq.s32.totalorder %v5333, 0
        %v5336 = vxor.u32 %v5330, 2147483648
        %v5337 = vsel %vm5335, %v5329, %v5336
        %vm5338 = vcmp.eq.s32.totalorder %v5333, 2
        %v5339 = vxor.u32 %v5329, 2147483648
        %v5340 = vsel %vm5338, %v5339, %v5330
        %v5341 = vsel %vm5334, %v5337, %v5340
        %v5342 = vsel %vm5331, nan, %v5341
        %v5343 = vand.u32 2147483647, %v4293
        %vm5344 = vcmp.le.f32.partialorder %v5343, 0.7853982
        %vm5345 = vcmp.lt.s32.totalorder %v4293, 0
        %v5346 = vand.u32 %v4293, 2139095040
        %v5347 = vshrl.u32 %v5346, 23
        %v5348 = vsub.s32 %v5347, 127
        %v5349 = vand.u32 2147483647, %v4293
        %v5350 = vand.u32 %v5349, 8388607
        %v5351 = vor.u32 %v5350, 8388608
        %v5352 = vsub.s32 0, %v5351
        %v5353 = vadd.s32 %v5348, 1
        %vm5354 = vcmp.gt.s32.totalorder %v5353, 0
        %v5355 = vsel %vm5354, %v5353, 0
        %v5356 = vshrl.u32 %v5355, 5
        %v5357 = vand.u32 %v5355, 31
        %v5358 = vsub.s32 32, %v5357
        %v5359 = vshrl.u32 683565275, %v5358
        %v5360 = vshll.u32 683565275, %v5357
        %v5361 = vshrl.u32 2475754826, %v5358
        %v5362 = vor.u32 %v5360, %v5361
        %v5363 = vshll.u32 2475754826, %v5357
        %v5364 = vshrl.u32 2131351028, %v5358
        %v5365 = vor.u32 %v5363, %v5364
        %v5366 = vshll.u32 2131351028, %v5357
        %v5367 = vshrl.u32 2102212464, %v5358
        %v5368 = vor.u32 %v5366, %v5367
        %v5369 = vshll.u32 2102212464, %v5357
        %v5370 = vshrl.u32 920167782, %v5358
        %v5371 = vor.u32 %v5369, %v5370
        %v5372 = vshll.u32 920167782, %v5357
        %v5373 = vshrl.u32 1326507024, %v5358
        %v5374 = vor.u32 %v5372, %v5373
        %vm5375 = vcmp.lt.s32.totalorder %v5356, 1
        %vm5376 = vcmp.lt.s32.totalorder %v5356, 2
        %vm5377 = vcmp.lt.s32.totalorder %v5356, 3
        %vm5378 = vcmp.lt.s32.totalorder %v5356, 4
        %v5379 = vsel %vm5375, %v5359, %v5362
        %v5380 = vsel %vm5378, %v5368, 2102212464
        %v5381 = vsel %vm5377, %v5365, %v5380
        %v5382 = vsel %vm5376, %v5379, %v5381
        %v5383 = vsel %vm5375, %v5362, %v5365
        %v5384 = vsel %vm5378, %v5371, 920167782
        %v5385 = vsel %vm5377, %v5368, %v5384
        %v5386 = vsel %vm5376, %v5383, %v5385
        %v5387 = vsel %vm5375, %v5365, %v5368
        %v5388 = vsel %vm5378, %v5374, 1326507024
        %v5389 = vsel %vm5377, %v5371, %v5388
        %v5390 = vsel %vm5376, %v5387, %v5389
        %v5391 = vshll.u32 %v5351, 8
        %v5392 = vmul.u32.u64.compose %v5391, %v5390
        %v5393 = vextract.low.u32 %v5392
        %v5394 = vextract.high.u32 %v5392
        %v5395 = vmul.u32.u64.compose %v5391, %v5386
        %v5396 = vextract.low.u32 %v5395
        %v5397 = vextract.high.u32 %v5395
        %v5398 = vmul.u32 %v5391, %v5382
        %v5399 = vadd.s32 %v5394, %v5396
        %vm5400 = vc.u32 %v5394, %v5396
        %v5401 = vadd.s32 %v5397, 1
        %v5402 = vsel %vm5400, %v5401, %v5397
        %v5403 = vadd.s32 %v5398, %v5402
        %v5404 = vadd.s32 %v5403, 536870912
        %v5405 = vshrl.u32 %v5404, 30
        %v5406 = vshll.u32 %v5405, 30
        %v5407 = vsub.s32 %v5403, %v5406
        %vm5408 = vcmp.lt.s32.totalorder %v5407, 0
        %v5409 = vsub.s32 0, %v5407
        %v5410 = vsel %vm5408, %v5409, %v5407
        %v5411 = vclz %v5410
        %v5412 = vsub.s32 %v5411, 2
        %vm5413 = vcmp.gt.s32.totalorder 0, %v5412
        %v5414 = vsel %vm5413, 0, %v5412
        %v5415 = vsub.s32 32, %v5414
        %v5416 = vshll.u32 %v5407, %v5414
        %v5417 = vshrl.u32 %v5399, %v5415
        %v5418 = vor.u32 %v5416, %v5417
        %v5419 = vsub.s32 4294967266, %v5414
        %v5420 = vadd.s32 %v5419, 127
        %v5421 = vshll.u32 %v5420, 23
        %v5422 = vor.u32 4788187, %v5421
        %v5423 = vand.u32 2147483647, %v5422
        %v5425 = vcvt.s32.f32 %v5418
        %v5426 = vmul.f32 %v5425, %v5423
        %v5427 = vxor.u32 %v5426, 2147483648
        %v5428 = vsel %vm5345, %v5427, %v5426
        %v5429 = vsub.s32 4, %v5405
        %v5430 = vsel %vm5345, %v5429, %v5405
        %v5431 = vsel %vm5344, %v4293, %v5428
        %v5432 = vsel %vm5344, 0, %v5430
        %v5433 = vcosq.f32.pop %v5431
        %v5434 = vsinq.f32.pop %v5431
        %vm5435 = vweird.f32 %v4293
        %v5436 = vadd.s32 %v5432, 3
        %v5437 = vand.u32 %v5436, 3
        %vm5438 = vcmp.lt.s32.totalorder %v5437, 2
        %vm5439 = vcmp.eq.s32.totalorder %v5437, 0
        %v5440 = vxor.u32 %v5434, 2147483648
        %v5441 = vsel %vm5439, %v5433, %v5440
        %vm5442 = vcmp.eq.s32.totalorder %v5437, 2
        %v5443 = vxor.u32 %v5433, 2147483648
        %v5444 = vsel %vm5442, %v5443, %v5434
        %v5445 = vsel %vm5438, %v5441, %v5444
        %v5446 = vsel %vm5435, nan, %v5445
        %v5447 = vand.u32 2147483647, %v4295
        %vm5448 = vcmp.le.f32.partialorder %v5447, 0.7853982
        %vm5449 = vcmp.lt.s32.totalorder %v4295, 0
        %v5450 = vand.u32 %v4295, 2139095040
        %v5451 = vshrl.u32 %v5450, 23
        %v5452 = vsub.s32 %v5451, 127
        %v5453 = vand.u32 2147483647, %v4295
        %v5454 = vand.u32 %v5453, 8388607
        %v5455 = vor.u32 %v5454, 8388608
        %v5456 = vsub.s32 0, %v5455
        %v5457 = vadd.s32 %v5452, 1
        %vm5458 = vcmp.gt.s32.totalorder %v5457, 0
        %v5459 = vsel %vm5458, %v5457, 0
        %v5460 = vshrl.u32 %v5459, 5
        %v5461 = vand.u32 %v5459, 31
        %v5462 = vsub.s32 32, %v5461
        %v5463 = vshrl.u32 683565275, %v5462
        %v5464 = vshll.u32 683565275, %v5461
        %v5465 = vshrl.u32 2475754826, %v5462
        %v5466 = vor.u32 %v5464, %v5465
        %v5467 = vshll.u32 2475754826, %v5461
        %v5468 = vshrl.u32 2131351028, %v5462
        %v5469 = vor.u32 %v5467, %v5468
        %v5470 = vshll.u32 2131351028, %v5461
        %v5471 = vshrl.u32 2102212464, %v5462
        %v5472 = vor.u32 %v5470, %v5471
        %v5473 = vshll.u32 2102212464, %v5461
        %v5474 = vshrl.u32 920167782, %v5462
        %v5475 = vor.u32 %v5473, %v5474
        %v5476 = vshll.u32 920167782, %v5461
        %v5477 = vshrl.u32 1326507024, %v5462
        %v5478 = vor.u32 %v5476, %v5477
        %vm5479 = vcmp.lt.s32.totalorder %v5460, 1
        %vm5480 = vcmp.lt.s32.totalorder %v5460, 2
        %vm5481 = vcmp.lt.s32.totalorder %v5460, 3
        %vm5482 = vcmp.lt.s32.totalorder %v5460, 4
        %v5483 = vsel %vm5479, %v5463, %v5466
        %v5484 = vsel %vm5482, %v5472, 2102212464
        %v5485 = vsel %vm5481, %v5469, %v5484
        %v5486 = vsel %vm5480, %v5483, %v5485
        %v5487 = vsel %vm5479, %v5466, %v5469
        %v5488 = vsel %vm5482, %v5475, 920167782
        %v5489 = vsel %vm5481, %v5472, %v5488
        %v5490 = vsel %vm5480, %v5487, %v5489
        %v5491 = vsel %vm5479, %v5469, %v5472
        %v5492 = vsel %vm5482, %v5478, 1326507024
        %v5493 = vsel %vm5481, %v5475, %v5492
        %v5494 = vsel %vm5480, %v5491, %v5493
        %v5495 = vshll.u32 %v5455, 8
        %v5496 = vmul.u32.u64.compose %v5495, %v5494
        %v5497 = vextract.low.u32 %v5496
        %v5498 = vextract.high.u32 %v5496
        %v5499 = vmul.u32.u64.compose %v5495, %v5490
        %v5500 = vextract.low.u32 %v5499
        %v5501 = vextract.high.u32 %v5499
        %v5502 = vmul.u32 %v5495, %v5486
        %v5503 = vadd.s32 %v5498, %v5500
        %vm5504 = vc.u32 %v5498, %v5500
        %v5505 = vadd.s32 %v5501, 1
        %v5506 = vsel %vm5504, %v5505, %v5501
        %v5507 = vadd.s32 %v5502, %v5506
        %v5508 = vadd.s32 %v5507, 536870912
        %v5509 = vshrl.u32 %v5508, 30
        %v5510 = vshll.u32 %v5509, 30
        %v5511 = vsub.s32 %v5507, %v5510
        %vm5512 = vcmp.lt.s32.totalorder %v5511, 0
        %v5513 = vsub.s32 0, %v5511
        %v5514 = vsel %vm5512, %v5513, %v5511
        %v5515 = vclz %v5514
        %v5516 = vsub.s32 %v5515, 2
        %vm5517 = vcmp.gt.s32.totalorder 0, %v5516
        %v5518 = vsel %vm5517, 0, %v5516
        %v5519 = vsub.s32 32, %v5518
        %v5520 = vshll.u32 %v5511, %v5518
        %v5521 = vshrl.u32 %v5503, %v5519
        %v5522 = vor.u32 %v5520, %v5521
        %v5523 = vsub.s32 4294967266, %v5518
        %v5524 = vadd.s32 %v5523, 127
        %v5525 = vshll.u32 %v5524, 23
        %v5526 = vor.u32 4788187, %v5525
        %v5527 = vand.u32 2147483647, %v5526
        %v5529 = vcvt.s32.f32 %v5522
        %v5530 = vmul.f32 %v5529, %v5527
        %v5531 = vxor.u32 %v5530, 2147483648
        %v5532 = vsel %vm5449, %v5531, %v5530
        %v5533 = vsub.s32 4, %v5509
        %v5534 = vsel %vm5449, %v5533, %v5509
        %v5535 = vsel %vm5448, %v4295, %v5532
        %v5536 = vsel %vm5448, 0, %v5534
        %v5537 = vcosq.f32.pop %v5535
        %v5538 = vsinq.f32.pop %v5535
        %vm5539 = vweird.f32 %v4295
        %v5540 = vadd.s32 %v5536, 3
        %v5541 = vand.u32 %v5540, 3
        %vm5542 = vcmp.lt.s32.totalorder %v5541, 2
        %vm5543 = vcmp.eq.s32.totalorder %v5541, 0
        %v5544 = vxor.u32 %v5538, 2147483648
        %v5545 = vsel %vm5543, %v5537, %v5544
        %vm5546 = vcmp.eq.s32.totalorder %v5541, 2
        %v5547 = vxor.u32 %v5537, 2147483648
        %v5548 = vsel %vm5546, %v5547, %v5538
        %v5549 = vsel %vm5542, %v5545, %v5548
        %v5550 = vsel %vm5539, nan, %v5549
        %v5551 = vand.u32 2147483647, %v4210
        %vm5552 = vcmp.le.f32.partialorder %v5551, 0.7853982
        %vm5553 = vcmp.lt.s32.totalorder %v4210, 0
        %v5554 = vand.u32 %v4210, 2139095040
        %v5555 = vshrl.u32 %v5554, 23
        %v5556 = vsub.s32 %v5555, 127
        %v5557 = vand.u32 2147483647, %v4210
        %v5558 = vand.u32 %v5557, 8388607
        %v5559 = vor.u32 %v5558, 8388608
        %v5560 = vsub.s32 0, %v5559
        %v5561 = vadd.s32 %v5556, 1
        %vm5562 = vcmp.gt.s32.totalorder %v5561, 0
        %v5563 = vsel %vm5562, %v5561, 0
        %v5564 = vshrl.u32 %v5563, 5
        %v5565 = vand.u32 %v5563, 31
        %v5566 = vsub.s32 32, %v5565
        %v5567 = vshrl.u32 683565275, %v5566
        %v5568 = vshll.u32 683565275, %v5565
        %v5569 = vshrl.u32 2475754826, %v5566
        %v5570 = vor.u32 %v5568, %v5569
        %v5571 = vshll.u32 2475754826, %v5565
        %v5572 = vshrl.u32 2131351028, %v5566
        %v5573 = vor.u32 %v5571, %v5572
        %v5574 = vshll.u32 2131351028, %v5565
        %v5575 = vshrl.u32 2102212464, %v5566
        %v5576 = vor.u32 %v5574, %v5575
        %v5577 = vshll.u32 2102212464, %v5565
        %v5578 = vshrl.u32 920167782, %v5566
        %v5579 = vor.u32 %v5577, %v5578
        %v5580 = vshll.u32 920167782, %v5565
        %v5581 = vshrl.u32 1326507024, %v5566
        %v5582 = vor.u32 %v5580, %v5581
        %vm5583 = vcmp.lt.s32.totalorder %v5564, 1
        %vm5584 = vcmp.lt.s32.totalorder %v5564, 2
        %vm5585 = vcmp.lt.s32.totalorder %v5564, 3
        %vm5586 = vcmp.lt.s32.totalorder %v5564, 4
        %v5587 = vsel %vm5583, %v5567, %v5570
        %v5588 = vsel %vm5586, %v5576, 2102212464
        %v5589 = vsel %vm5585, %v5573, %v5588
        %v5590 = vsel %vm5584, %v5587, %v5589
        %v5591 = vsel %vm5583, %v5570, %v5573
        %v5592 = vsel %vm5586, %v5579, 920167782
        %v5593 = vsel %vm5585, %v5576, %v5592
        %v5594 = vsel %vm5584, %v5591, %v5593
        %v5595 = vsel %vm5583, %v5573, %v5576
        %v5596 = vsel %vm5586, %v5582, 1326507024
        %v5597 = vsel %vm5585, %v5579, %v5596
        %v5598 = vsel %vm5584, %v5595, %v5597
        %v5599 = vshll.u32 %v5559, 8
        %v5600 = vmul.u32.u64.compose %v5599, %v5598
        %v5601 = vextract.low.u32 %v5600
        %v5602 = vextract.high.u32 %v5600
        %v5603 = vmul.u32.u64.compose %v5599, %v5594
        %v5604 = vextract.low.u32 %v5603
        %v5605 = vextract.high.u32 %v5603
        %v5606 = vmul.u32 %v5599, %v5590
        %v5607 = vadd.s32 %v5602, %v5604
        %vm5608 = vc.u32 %v5602, %v5604
        %v5609 = vadd.s32 %v5605, 1
        %v5610 = vsel %vm5608, %v5609, %v5605
        %v5611 = vadd.s32 %v5606, %v5610
        %v5612 = vadd.s32 %v5611, 536870912
        %v5613 = vshrl.u32 %v5612, 30
        %v5614 = vshll.u32 %v5613, 30
        %v5615 = vsub.s32 %v5611, %v5614
        %vm5616 = vcmp.lt.s32.totalorder %v5615, 0
        %v5617 = vsub.s32 0, %v5615
        %v5618 = vsel %vm5616, %v5617, %v5615
        %v5619 = vclz %v5618
        %v5620 = vsub.s32 %v5619, 2
        %vm5621 = vcmp.gt.s32.totalorder 0, %v5620
        %v5622 = vsel %vm5621, 0, %v5620
        %v5623 = vsub.s32 32, %v5622
        %v5624 = vshll.u32 %v5615, %v5622
        %v5625 = vshrl.u32 %v5607, %v5623
        %v5626 = vor.u32 %v5624, %v5625
        %v5627 = vsub.s32 4294967266, %v5622
        %v5628 = vadd.s32 %v5627, 127
        %v5629 = vshll.u32 %v5628, 23
        %v5630 = vor.u32 4788187, %v5629
        %v5631 = vand.u32 2147483647, %v5630
        %v5633 = vcvt.s32.f32 %v5626
        %v5634 = vmul.f32 %v5633, %v5631
        %v5635 = vxor.u32 %v5634, 2147483648
        %v5636 = vsel %vm5553, %v5635, %v5634
        %v5637 = vsub.s32 4, %v5613
        %v5638 = vsel %vm5553, %v5637, %v5613
        %v5639 = vsel %vm5552, %v4210, %v5636
        %v5640 = vsel %vm5552, 0, %v5638
        %v5641 = vcosq.f32.pop %v5639
        %v5642 = vsinq.f32.pop %v5639
        %vm5643 = vweird.f32 %v4210
        %v5644 = vadd.s32 %v5640, 3
        %v5645 = vand.u32 %v5644, 3
        %vm5646 = vcmp.lt.s32.totalorder %v5645, 2
        %vm5647 = vcmp.eq.s32.totalorder %v5645, 0
        %v5648 = vxor.u32 %v5642, 2147483648
        %v5649 = vsel %vm5647, %v5641, %v5648
        %vm5650 = vcmp.eq.s32.totalorder %v5645, 2
        %v5651 = vxor.u32 %v5641, 2147483648
        %v5652 = vsel %vm5650, %v5651, %v5642
        %v5653 = vsel %vm5646, %v5649, %v5652
        %v5654 = vsel %vm5643, nan, %v5653
        %v5655 = vand.u32 2147483647, %v4212
        %vm5656 = vcmp.le.f32.partialorder %v5655, 0.7853982
        %vm5657 = vcmp.lt.s32.totalorder %v4212, 0
        %v5658 = vand.u32 %v4212, 2139095040
        %v5659 = vshrl.u32 %v5658, 23
        %v5660 = vsub.s32 %v5659, 127
        %v5661 = vand.u32 2147483647, %v4212
        %v5662 = vand.u32 %v5661, 8388607
        %v5663 = vor.u32 %v5662, 8388608
        %v5664 = vsub.s32 0, %v5663
        %v5665 = vadd.s32 %v5660, 1
        %vm5666 = vcmp.gt.s32.totalorder %v5665, 0
        %v5667 = vsel %vm5666, %v5665, 0
        %v5668 = vshrl.u32 %v5667, 5
        %v5669 = vand.u32 %v5667, 31
        %v5670 = vsub.s32 32, %v5669
        %v5671 = vshrl.u32 683565275, %v5670
        %v5672 = vshll.u32 683565275, %v5669
        %v5673 = vshrl.u32 2475754826, %v5670
        %v5674 = vor.u32 %v5672, %v5673
        %v5675 = vshll.u32 2475754826, %v5669
        %v5676 = vshrl.u32 2131351028, %v5670
        %v5677 = vor.u32 %v5675, %v5676
        %v5678 = vshll.u32 2131351028, %v5669
        %v5679 = vshrl.u32 2102212464, %v5670
        %v5680 = vor.u32 %v5678, %v5679
        %v5681 = vshll.u32 2102212464, %v5669
        %v5682 = vshrl.u32 920167782, %v5670
        %v5683 = vor.u32 %v5681, %v5682
        %v5684 = vshll.u32 920167782, %v5669
        %v5685 = vshrl.u32 1326507024, %v5670
        %v5686 = vor.u32 %v5684, %v5685
        %vm5687 = vcmp.lt.s32.totalorder %v5668, 1
        %vm5688 = vcmp.lt.s32.totalorder %v5668, 2
        %vm5689 = vcmp.lt.s32.totalorder %v5668, 3
        %vm5690 = vcmp.lt.s32.totalorder %v5668, 4
        %v5691 = vsel %vm5687, %v5671, %v5674
        %v5692 = vsel %vm5690, %v5680, 2102212464
        %v5693 = vsel %vm5689, %v5677, %v5692
        %v5694 = vsel %vm5688, %v5691, %v5693
        %v5695 = vsel %vm5687, %v5674, %v5677
        %v5696 = vsel %vm5690, %v5683, 920167782
        %v5697 = vsel %vm5689, %v5680, %v5696
        %v5698 = vsel %vm5688, %v5695, %v5697
        %v5699 = vsel %vm5687, %v5677, %v5680
        %v5700 = vsel %vm5690, %v5686, 1326507024
        %v5701 = vsel %vm5689, %v5683, %v5700
        %v5702 = vsel %vm5688, %v5699, %v5701
        %v5703 = vshll.u32 %v5663, 8
        %v5704 = vmul.u32.u64.compose %v5703, %v5702
        %v5705 = vextract.low.u32 %v5704
        %v5706 = vextract.high.u32 %v5704
        %v5707 = vmul.u32.u64.compose %v5703, %v5698
        %v5708 = vextract.low.u32 %v5707
        %v5709 = vextract.high.u32 %v5707
        %v5710 = vmul.u32 %v5703, %v5694
        %v5711 = vadd.s32 %v5706, %v5708
        %vm5712 = vc.u32 %v5706, %v5708
        %v5713 = vadd.s32 %v5709, 1
        %v5714 = vsel %vm5712, %v5713, %v5709
        %v5715 = vadd.s32 %v5710, %v5714
        %v5716 = vadd.s32 %v5715, 536870912
        %v5717 = vshrl.u32 %v5716, 30
        %v5718 = vshll.u32 %v5717, 30
        %v5719 = vsub.s32 %v5715, %v5718
        %vm5720 = vcmp.lt.s32.totalorder %v5719, 0
        %v5721 = vsub.s32 0, %v5719
        %v5722 = vsel %vm5720, %v5721, %v5719
        %v5723 = vclz %v5722
        %v5724 = vsub.s32 %v5723, 2
        %vm5725 = vcmp.gt.s32.totalorder 0, %v5724
        %v5726 = vsel %vm5725, 0, %v5724
        %v5727 = vsub.s32 32, %v5726
        %v5728 = vshll.u32 %v5719, %v5726
        %v5729 = vshrl.u32 %v5711, %v5727
        %v5730 = vor.u32 %v5728, %v5729
        %v5731 = vsub.s32 4294967266, %v5726
        %v5732 = vadd.s32 %v5731, 127
        %v5733 = vshll.u32 %v5732, 23
        %v5734 = vor.u32 4788187, %v5733
        %v5735 = vand.u32 2147483647, %v5734
        %v5737 = vcvt.s32.f32 %v5730
        %v5738 = vmul.f32 %v5737, %v5735
        %v5739 = vxor.u32 %v5738, 2147483648
        %v5740 = vsel %vm5657, %v5739, %v5738
        %v5741 = vsub.s32 4, %v5717
        %v5742 = vsel %vm5657, %v5741, %v5717
        %v5743 = vsel %vm5656, %v4212, %v5740
        %v5744 = vsel %vm5656, 0, %v5742
        %v5745 = vcosq.f32.pop %v5743
        %v5746 = vsinq.f32.pop %v5743
        %vm5747 = vweird.f32 %v4212
        %v5748 = vadd.s32 %v5744, 3
        %v5749 = vand.u32 %v5748, 3
        %vm5750 = vcmp.lt.s32.totalorder %v5749, 2
        %vm5751 = vcmp.eq.s32.totalorder %v5749, 0
        %v5752 = vxor.u32 %v5746, 2147483648
        %v5753 = vsel %vm5751, %v5745, %v5752
        %vm5754 = vcmp.eq.s32.totalorder %v5749, 2
        %v5755 = vxor.u32 %v5745, 2147483648
        %v5756 = vsel %vm5754, %v5755, %v5746
        %v5757 = vsel %vm5750, %v5753, %v5756
        %v5758 = vsel %vm5747, nan, %v5757
        %v5759 = vand.u32 2147483647, %v4299
        %vm5760 = vcmp.le.f32.partialorder %v5759, 0.7853982
        %vm5761 = vcmp.lt.s32.totalorder %v4299, 0
        %v5762 = vand.u32 %v4299, 2139095040
        %v5763 = vshrl.u32 %v5762, 23
        %v5764 = vsub.s32 %v5763, 127
        %v5765 = vand.u32 2147483647, %v4299
        %v5766 = vand.u32 %v5765, 8388607
        %v5767 = vor.u32 %v5766, 8388608
        %v5768 = vsub.s32 0, %v5767
        %v5769 = vadd.s32 %v5764, 1
        %vm5770 = vcmp.gt.s32.totalorder %v5769, 0
        %v5771 = vsel %vm5770, %v5769, 0
        %v5772 = vshrl.u32 %v5771, 5
        %v5773 = vand.u32 %v5771, 31
        %v5774 = vsub.s32 32, %v5773
        %v5775 = vshrl.u32 683565275, %v5774
        %v5776 = vshll.u32 683565275, %v5773
        %v5777 = vshrl.u32 2475754826, %v5774
        %v5778 = vor.u32 %v5776, %v5777
        %v5779 = vshll.u32 2475754826, %v5773
        %v5780 = vshrl.u32 2131351028, %v5774
        %v5781 = vor.u32 %v5779, %v5780
        %v5782 = vshll.u32 2131351028, %v5773
        %v5783 = vshrl.u32 2102212464, %v5774
        %v5784 = vor.u32 %v5782, %v5783
        %v5785 = vshll.u32 2102212464, %v5773
        %v5786 = vshrl.u32 920167782, %v5774
        %v5787 = vor.u32 %v5785, %v5786
        %v5788 = vshll.u32 920167782, %v5773
        %v5789 = vshrl.u32 1326507024, %v5774
        %v5790 = vor.u32 %v5788, %v5789
        %vm5791 = vcmp.lt.s32.totalorder %v5772, 1
        %vm5792 = vcmp.lt.s32.totalorder %v5772, 2
        %vm5793 = vcmp.lt.s32.totalorder %v5772, 3
        %vm5794 = vcmp.lt.s32.totalorder %v5772, 4
        %v5795 = vsel %vm5791, %v5775, %v5778
        %v5796 = vsel %vm5794, %v5784, 2102212464
        %v5797 = vsel %vm5793, %v5781, %v5796
        %v5798 = vsel %vm5792, %v5795, %v5797
        %v5799 = vsel %vm5791, %v5778, %v5781
        %v5800 = vsel %vm5794, %v5787, 920167782
        %v5801 = vsel %vm5793, %v5784, %v5800
        %v5802 = vsel %vm5792, %v5799, %v5801
        %v5803 = vsel %vm5791, %v5781, %v5784
        %v5804 = vsel %vm5794, %v5790, 1326507024
        %v5805 = vsel %vm5793, %v5787, %v5804
        %v5806 = vsel %vm5792, %v5803, %v5805
        %v5807 = vshll.u32 %v5767, 8
        %v5808 = vmul.u32.u64.compose %v5807, %v5806
        %v5809 = vextract.low.u32 %v5808
        %v5810 = vextract.high.u32 %v5808
        %v5811 = vmul.u32.u64.compose %v5807, %v5802
        %v5812 = vextract.low.u32 %v5811
        %v5813 = vextract.high.u32 %v5811
        %v5814 = vmul.u32 %v5807, %v5798
        %v5815 = vadd.s32 %v5810, %v5812
        %vm5816 = vc.u32 %v5810, %v5812
        %v5817 = vadd.s32 %v5813, 1
        %v5818 = vsel %vm5816, %v5817, %v5813
        %v5819 = vadd.s32 %v5814, %v5818
        %v5820 = vadd.s32 %v5819, 536870912
        %v5821 = vshrl.u32 %v5820, 30
        %v5822 = vshll.u32 %v5821, 30
        %v5823 = vsub.s32 %v5819, %v5822
        %vm5824 = vcmp.lt.s32.totalorder %v5823, 0
        %v5825 = vsub.s32 0, %v5823
        %v5826 = vsel %vm5824, %v5825, %v5823
        %v5827 = vclz %v5826
        %v5828 = vsub.s32 %v5827, 2
        %vm5829 = vcmp.gt.s32.totalorder 0, %v5828
        %v5830 = vsel %vm5829, 0, %v5828
        %v5831 = vsub.s32 32, %v5830
        %v5832 = vshll.u32 %v5823, %v5830
        %v5833 = vshrl.u32 %v5815, %v5831
        %v5834 = vor.u32 %v5832, %v5833
        %v5835 = vsub.s32 4294967266, %v5830
        %v5836 = vadd.s32 %v5835, 127
        %v5837 = vshll.u32 %v5836, 23
        %v5838 = vor.u32 4788187, %v5837
        %v5839 = vand.u32 2147483647, %v5838
        %v5841 = vcvt.s32.f32 %v5834
        %v5842 = vmul.f32 %v5841, %v5839
        %v5843 = vxor.u32 %v5842, 2147483648
        %v5844 = vsel %vm5761, %v5843, %v5842
        %v5845 = vsub.s32 4, %v5821
        %v5846 = vsel %vm5761, %v5845, %v5821
        %v5847 = vsel %vm5760, %v4299, %v5844
        %v5848 = vsel %vm5760, 0, %v5846
        %v5849 = vcosq.f32.pop %v5847
        %v5850 = vsinq.f32.pop %v5847
        %vm5851 = vweird.f32 %v4299
        %v5852 = vadd.s32 %v5848, 3
        %v5853 = vand.u32 %v5852, 3
        %vm5854 = vcmp.lt.s32.totalorder %v5853, 2
        %vm5855 = vcmp.eq.s32.totalorder %v5853, 0
        %v5856 = vxor.u32 %v5850, 2147483648
        %v5857 = vsel %vm5855, %v5849, %v5856
        %vm5858 = vcmp.eq.s32.totalorder %v5853, 2
        %v5859 = vxor.u32 %v5849, 2147483648
        %v5860 = vsel %vm5858, %v5859, %v5850
        %v5861 = vsel %vm5854, %v5857, %v5860
        %v5862 = vsel %vm5851, nan, %v5861
        %v5863 = vand.u32 2147483647, %v4301
        %vm5864 = vcmp.le.f32.partialorder %v5863, 0.7853982
        %vm5865 = vcmp.lt.s32.totalorder %v4301, 0
        %v5866 = vand.u32 %v4301, 2139095040
        %v5867 = vshrl.u32 %v5866, 23
        %v5868 = vsub.s32 %v5867, 127
        %v5869 = vand.u32 2147483647, %v4301
        %v5870 = vand.u32 %v5869, 8388607
        %v5871 = vor.u32 %v5870, 8388608
        %v5872 = vsub.s32 0, %v5871
        %v5873 = vadd.s32 %v5868, 1
        %vm5874 = vcmp.gt.s32.totalorder %v5873, 0
        %v5875 = vsel %vm5874, %v5873, 0
        %v5876 = vshrl.u32 %v5875, 5
        %v5877 = vand.u32 %v5875, 31
        %v5878 = vsub.s32 32, %v5877
        %v5879 = vshrl.u32 683565275, %v5878
        %v5880 = vshll.u32 683565275, %v5877
        %v5881 = vshrl.u32 2475754826, %v5878
        %v5882 = vor.u32 %v5880, %v5881
        %v5883 = vshll.u32 2475754826, %v5877
        %v5884 = vshrl.u32 2131351028, %v5878
        %v5885 = vor.u32 %v5883, %v5884
        %v5886 = vshll.u32 2131351028, %v5877
        %v5887 = vshrl.u32 2102212464, %v5878
        %v5888 = vor.u32 %v5886, %v5887
        %v5889 = vshll.u32 2102212464, %v5877
        %v5890 = vshrl.u32 920167782, %v5878
        %v5891 = vor.u32 %v5889, %v5890
        %v5892 = vshll.u32 920167782, %v5877
        %v5893 = vshrl.u32 1326507024, %v5878
        %v5894 = vor.u32 %v5892, %v5893
        %vm5895 = vcmp.lt.s32.totalorder %v5876, 1
        %vm5896 = vcmp.lt.s32.totalorder %v5876, 2
        %vm5897 = vcmp.lt.s32.totalorder %v5876, 3
        %vm5898 = vcmp.lt.s32.totalorder %v5876, 4
        %v5899 = vsel %vm5895, %v5879, %v5882
        %v5900 = vsel %vm5898, %v5888, 2102212464
        %v5901 = vsel %vm5897, %v5885, %v5900
        %v5902 = vsel %vm5896, %v5899, %v5901
        %v5903 = vsel %vm5895, %v5882, %v5885
        %v5904 = vsel %vm5898, %v5891, 920167782
        %v5905 = vsel %vm5897, %v5888, %v5904
        %v5906 = vsel %vm5896, %v5903, %v5905
        %v5907 = vsel %vm5895, %v5885, %v5888
        %v5908 = vsel %vm5898, %v5894, 1326507024
        %v5909 = vsel %vm5897, %v5891, %v5908
        %v5910 = vsel %vm5896, %v5907, %v5909
        %v5911 = vshll.u32 %v5871, 8
        %v5912 = vmul.u32.u64.compose %v5911, %v5910
        %v5913 = vextract.low.u32 %v5912
        %v5914 = vextract.high.u32 %v5912
        %v5915 = vmul.u32.u64.compose %v5911, %v5906
        %v5916 = vextract.low.u32 %v5915
        %v5917 = vextract.high.u32 %v5915
        %v5918 = vmul.u32 %v5911, %v5902
        %v5919 = vadd.s32 %v5914, %v5916
        %vm5920 = vc.u32 %v5914, %v5916
        %v5921 = vadd.s32 %v5917, 1
        %v5922 = vsel %vm5920, %v5921, %v5917
        %v5923 = vadd.s32 %v5918, %v5922
        %v5924 = vadd.s32 %v5923, 536870912
        %v5925 = vshrl.u32 %v5924, 30
        %v5926 = vshll.u32 %v5925, 30
        %v5927 = vsub.s32 %v5923, %v5926
        %vm5928 = vcmp.lt.s32.totalorder %v5927, 0
        %v5929 = vsub.s32 0, %v5927
        %v5930 = vsel %vm5928, %v5929, %v5927
        %v5931 = vclz %v5930
        %v5932 = vsub.s32 %v5931, 2
        %vm5933 = vcmp.gt.s32.totalorder 0, %v5932
        %v5934 = vsel %vm5933, 0, %v5932
        %v5935 = vsub.s32 32, %v5934
        %v5936 = vshll.u32 %v5927, %v5934
        %v5937 = vshrl.u32 %v5919, %v5935
        %v5938 = vor.u32 %v5936, %v5937
        %v5939 = vsub.s32 4294967266, %v5934
        %v5940 = vadd.s32 %v5939, 127
        %v5941 = vshll.u32 %v5940, 23
        %v5942 = vor.u32 4788187, %v5941
        %v5943 = vand.u32 2147483647, %v5942
        %v5945 = vcvt.s32.f32 %v5938
        %v5946 = vmul.f32 %v5945, %v5943
        %v5947 = vxor.u32 %v5946, 2147483648
        %v5948 = vsel %vm5865, %v5947, %v5946
        %v5949 = vsub.s32 4, %v5925
        %v5950 = vsel %vm5865, %v5949, %v5925
        %v5951 = vsel %vm5864, %v4301, %v5948
        %v5952 = vsel %vm5864, 0, %v5950
        %v5953 = vcosq.f32.pop %v5951
        %v5954 = vsinq.f32.pop %v5951
        %vm5955 = vweird.f32 %v4301
        %v5956 = vadd.s32 %v5952, 3
        %v5957 = vand.u32 %v5956, 3
        %vm5958 = vcmp.lt.s32.totalorder %v5957, 2
        %vm5959 = vcmp.eq.s32.totalorder %v5957, 0
        %v5960 = vxor.u32 %v5954, 2147483648
        %v5961 = vsel %vm5959, %v5953, %v5960
        %vm5962 = vcmp.eq.s32.totalorder %v5957, 2
        %v5963 = vxor.u32 %v5953, 2147483648
        %v5964 = vsel %vm5962, %v5963, %v5954
        %v5965 = vsel %vm5958, %v5961, %v5964
        %v5966 = vsel %vm5955, nan, %v5965
        %v5967 = vld [vmem:[%s7] sm:$0x1]
        %v5968 = vld [vmem:[#allocation2] sm:$0x1]
        %5970 = vset.pattern.permute.xlu0 0
        %5971 = vperm.xlu0 %5970, %v5968
        %v5972 = vpop.permute.xlu0 %5971
        %v5974 = vlaneseq
        %v5975 = vshrl.u32 %v5974, 7
        %v5976 = vsub.s32 0, %v5975
        %v5977 = vrot.slane %v5972, %v5976
        %v5979 = vsel %vm2230, %v5967, 0
        %5981 = vmatprep.subr.mxu0 0.0
        %5982 = vmatpush1.msra.mxu0 0.0
        %5983 = vmatprep.subr.mxu0 0.0
        %5984 = vmatpush1.msra.mxu0 0.0
        %5985 = vmatprep.subr.mxu0 0.0
        %5986 = vmatpush1.msra.mxu0 0.0
        %5987 = vmatprep.subr.mxu0 0.0
        %5988 = vmatpush1.msra.mxu0 0.0
        %5989 = vmatprep.subr.mxu0 0.0
        %5990 = vmatpush1.msra.mxu0 0.0
        %5991 = vmatprep.subr.mxu0 0.0
        %5992 = vmatpush1.msra.mxu0 0.0
        %5993 = vmatprep.subr.mxu0 0.0
        %5994 = vmatpush1.msra.mxu0 0.0
        %5995 = vmatprep.subr.mxu0 0.0
        %5996 = vmatpush1.msra.mxu0 0.0
        %5997 = vmatprep.subr.mxu0 0.0
        %5998 = vmatpush1.msra.mxu0 0.0
        %5999 = vmatprep.subr.mxu0 0.0
        %6000 = vmatpush1.msra.mxu0 0.0
        %6001 = vmatprep.subr.mxu0 0.0
        %6002 = vmatpush1.msra.mxu0 0.0
        %6003 = vmatprep.subr.mxu0 0.0
        %6004 = vmatpush1.msra.mxu0 0.0
        %6005 = vmatprep.subr.mxu0 %v5758
        %6006 = vmatpush1.msra.mxu0 %v5654
        %6007 = vmatprep.subr.mxu0 %v5342
        %6008 = vmatpush1.msra.mxu0 %v5238
        %6009 = vmatprep.subr.mxu0 %v4926
        %6010 = vmatpush1.msra.mxu0 %v4822
        %6011 = vmatprep.subr.mxu0 %v4510
        %6012 = vmatpush1.msra.mxu0 %v4406
        %6013 = vmatprep.subr.mxu0 0.0
        %6014 = vmatpush2.msra.mxu0 0.0
        %6015 = vmatprep.subr.mxu0 0.0
        %6016 = vmatpush2.msra.mxu0 0.0
        %6017 = vmatprep.subr.mxu0 0.0
        %6018 = vmatpush2.msra.mxu0 0.0
        %6019 = vmatprep.subr.mxu0 0.0
        %6020 = vmatpush2.msra.mxu0 0.0
        %6021 = vmatprep.subr.mxu0 0.0
        %6022 = vmatpush2.msra.mxu0 0.0
        %6023 = vmatprep.subr.mxu0 0.0
        %6024 = vmatpush2.msra.mxu0 0.0
        %6025 = vmatprep.subr.mxu0 0.0
        %6026 = vmatpush2.msra.mxu0 0.0
        %6027 = vmatprep.subr.mxu0 0.0
        %6028 = vmatpush2.msra.mxu0 0.0
        %6029 = vmatprep.subr.mxu0 0.0
        %6030 = vmatpush2.msra.mxu0 0.0
        %6031 = vmatprep.subr.mxu0 0.0
        %6032 = vmatpush2.msra.mxu0 0.0
        %6033 = vmatprep.subr.mxu0 0.0
        %6034 = vmatpush2.msra.mxu0 0.0
        %6035 = vmatprep.subr.mxu0 0.0
        %6036 = vmatpush2.msra.mxu0 0.0
        %6037 = vmatprep.subr.mxu0 0.0
        %6038 = vmatpush2.msra.mxu0 0.0
        %6039 = vmatprep.subr.mxu0 0.0
        %6040 = vmatpush2.msra.mxu0 0.0
        %6041 = vmatprep.subr.mxu0 0.0
        %6042 = vmatpush2.msra.mxu0 0.0
        %6043 = vmatprep.subr.mxu0 0.0
        %6044 = vmatpush2.msra.mxu0 0.0
        %6045 = vmatprep.mubr.f32.mxu0 0.0
        %6046 = vmatmul.mubr.f32.gmra.mxu0 %v5979
        %v6047 = vpop.f32.mrf.mxu0
        %v6048 = vadd.f32 %v5977, %v6047
        %v6049 = vpop.f32.mrf.mxu0
        %v6050 = vadd.f32 %v5977, %v6049
        %6051 = vdwg.mxu0
        %6052 = vmatprep.subr.mxu0 0.0
        %6053 = vmatpush1.msra.mxu0 0.0
        %6054 = vmatprep.subr.mxu0 0.0
        %6055 = vmatpush1.msra.mxu0 0.0
        %6056 = vmatprep.subr.mxu0 0.0
        %6057 = vmatpush1.msra.mxu0 0.0
        %6058 = vmatprep.subr.mxu0 0.0
        %6059 = vmatpush1.msra.mxu0 0.0
        %6060 = vmatprep.subr.mxu0 0.0
        %6061 = vmatpush1.msra.mxu0 0.0
        %6062 = vmatprep.subr.mxu0 0.0
        %6063 = vmatpush1.msra.mxu0 0.0
        %6064 = vmatprep.subr.mxu0 0.0
        %6065 = vmatpush1.msra.mxu0 0.0
        %6066 = vmatprep.subr.mxu0 0.0
        %6067 = vmatpush1.msra.mxu0 0.0
        %6068 = vmatprep.subr.mxu0 0.0
        %6069 = vmatpush1.msra.mxu0 0.0
        %6070 = vmatprep.subr.mxu0 0.0
        %6071 = vmatpush1.msra.mxu0 0.0
        %6072 = vmatprep.subr.mxu0 0.0
        %6073 = vmatpush1.msra.mxu0 0.0
        %6074 = vmatprep.subr.mxu0 0.0
        %6075 = vmatpush1.msra.mxu0 0.0
        %6076 = vmatprep.subr.mxu0 %v5966
        %6077 = vmatpush1.msra.mxu0 %v5862
        %6078 = vmatprep.subr.mxu0 %v5550
        %6079 = vmatpush1.msra.mxu0 %v5446
        %6080 = vmatprep.subr.mxu0 %v5134
        %6081 = vmatpush1.msra.mxu0 %v5030
        %6082 = vmatprep.subr.mxu0 %v4718
        %6083 = vmatpush1.msra.mxu0 %v4614
        %6084 = vmatprep.subr.mxu0 0.0
        %6085 = vmatpush2.msra.mxu0 0.0
        %6086 = vmatprep.subr.mxu0 0.0
        %6087 = vmatpush2.msra.mxu0 0.0
        %6088 = vmatprep.subr.mxu0 0.0
        %6089 = vmatpush2.msra.mxu0 0.0
        %6090 = vmatprep.subr.mxu0 0.0
        %6091 = vmatpush2.msra.mxu0 0.0
        %6092 = vmatprep.subr.mxu0 0.0
        %6093 = vmatpush2.msra.mxu0 0.0
        %6094 = vmatprep.subr.mxu0 0.0
        %6095 = vmatpush2.msra.mxu0 0.0
        %6096 = vmatprep.subr.mxu0 0.0
        %6097 = vmatpush2.msra.mxu0 0.0
        %6098 = vmatprep.subr.mxu0 0.0
        %6099 = vmatpush2.msra.mxu0 0.0
        %6100 = vmatprep.subr.mxu0 0.0
        %6101 = vmatpush2.msra.mxu0 0.0
        %6102 = vmatprep.subr.mxu0 0.0
        %6103 = vmatpush2.msra.mxu0 0.0
        %6104 = vmatprep.subr.mxu0 0.0
        %6105 = vmatpush2.msra.mxu0 0.0
        %6106 = vmatprep.subr.mxu0 0.0
        %6107 = vmatpush2.msra.mxu0 0.0
        %6108 = vmatprep.subr.mxu0 0.0
        %6109 = vmatpush2.msra.mxu0 0.0
        %6110 = vmatprep.subr.mxu0 0.0
        %6111 = vmatpush2.msra.mxu0 0.0
        %6112 = vmatprep.subr.mxu0 0.0
        %6113 = vmatpush2.msra.mxu0 0.0
        %6114 = vmatprep.subr.mxu0 0.0
        %6115 = vmatpush2.msra.mxu0 0.0
        %6116 = vmatprep.mubr.f32.mxu0 0.0
        %6117 = vmatmul.mubr.f32.gmra.mxu0 %v5979
        %v6118 = vpop.f32.mrf.mxu0
        %v6119 = vadd.f32 %v5977, %v6118
        %v6120 = vpop.f32.mrf.mxu0
        %v6121 = vadd.f32 %v5977, %v6120
        %6122 = vdwg.mxu0
        %v6127 = vcombine.low %v6048, %v6050
        %v6128 = vcombine.low %v6119, %v6121
        %v6130 = vunpack.c.l.s4 1966171168
        %v6131 = vunpack.c.0.s8 %v6130
        %v6132 = vlaneseq
        %v6133 = vshrl.u32 %v6132, 7
        %v6134 = vsub.s32 %v6131, %v6133
        %v6135 = vrot.slane %v6127, %v6134
        %v6137 = vunpack.c.l.s4 1966171168
        %v6138 = vunpack.c.0.s8 %v6137
        %v6139 = vlaneseq
        %v6140 = vshrl.u32 %v6139, 7
        %v6141 = vsub.s32 %v6138, %v6140
        %v6142 = vrot.slane %v6128, %v6141
        %v6143 = vcombine.low %v6135, %v6142
        %v6145 = vunpack.c.l.s4 1966171168
        %v6146 = vunpack.c.0.s8 %v6145
        %v6147 = vlaneseq
        %v6148 = vshrl.u32 %v6147, 7
        %v6149 = vsub.s32 %v6146, %v6148
        %v6150 = vrot.slane %v6143, %v6149
        %v6152 = vlaneseq
        %vm6153 = vcmp.ge.s32.totalorder %v6152, 0
        %vm6154 = vcmp.lt.s32.totalorder %v6152, 512
        %vm6155 = vmand %vm6153, %vm6154
        %6156 = vst.msk [vmem:[%s328] sm:$0xf] %vm6155, %v6150
        %s6157 = sand.u32 %s227, 1
        %s6158 = scalar_lea.sflag [#allocation4], %s6157
        %s6159 = sand.u32 %s227, 1
        %s6160 = smul.addr %s6159, 4
        %s6161 = scalar_lea.vmem [#allocation3], %s6160
        // Predicated region
        $region57: #{tpu_custom_call.1} parent=55 // pred_check
          %p6162 = pneg %p237
        $region58: #{tpu_custom_call.1} parent=55 // pred_check_branch
          %6164 = sbr.rel (%p6162) target = $region60
        $region59: #{tpu_custom_call.1} parent=55 // pred_region
          %s6165 = smul.u32 4, %s25
          %s6167 = ssub.s32 64, 64
          %6168 = vsyncadd %s6158, %s6167
          %s6169 = smul.addr %s6165, 16
          %s6170 = scalar_lea.hbm %s9, %s6169
          %s6172 = sshll.u32 %s6161, 4
          %s6173 = int_to_ptr.vmem [resolvable:$true] %s6172
          %6175 = dma.vmem_to_hbm [thread:$0]  %s6173, 64, %s6170, %s6158
        $region60: #{tpu_custom_call.1} parent=55 // pred_fallthru
          _
      $region56: #{tpu_custom_call.1} parent=5 // pred_fallthru
        _
      %p6176 = scmp.le.s32.totalorder 2, %s20
      // Predicated region
      $region61: #{tpu_custom_call.1} parent=5 // pred_check
        %p6177 = pneg %p6176
      $region62: #{tpu_custom_call.1} parent=5 // pred_check_branch
        %6179 = sbr.rel (%p6177) target = $region64
      $region63: #{tpu_custom_call.1} parent=5 // pred_region
        %s6180 = ssub.s32 %s20, 2
        // Predicated region
        $region65: #{tpu_custom_call.1} parent=63 // pred_check
          %p6181 = pneg %p243
        $region66: #{tpu_custom_call.1} parent=63 // pred_check_branch
          %6183 = sbr.rel (%p6181) target = $region68
        $region67: #{tpu_custom_call.1} parent=63 // pred_region
          %s6184 = sand.u32 %s228, 1
          %s6185 = scalar_lea.sflag [#allocation4], %s6184
          %s6186 = sand.u32 %s228, 1
          %s6187 = smul.addr %s6186, 4
          %s6188 = scalar_lea.vmem [#allocation3], %s6187
          %6189 = dma.done %s6185, 64
        $region68: #{tpu_custom_call.1} parent=63 // pred_fallthru
          _
      $region64: #{tpu_custom_call.1} parent=5 // pred_fallthru
        _
    $region6: #{tpu_custom_call.1} parent=1 // loop_footer
      %s24 = sadd.s32 1, %s20
    $region7: #{tpu_custom_call.1} parent=1 // loop_footer_branch
      %19 = sbr.rel target = $region3
    $region8: #{tpu_custom_call.1} parent=1 // loop_exit
      _
    %6190 = vsyncpa [#allocation4], 1
    %s6191 = scalar_lea.sflag [#allocation4], 1
    %6192 = vsyncpa %s6191, 1

</llo_original>
